<compile_context>
chip_gen: v6e
topology: v6e:2x2x1
jax: 0.10.0
libtpu: 0.0.40
codegen_flags: <defaults>
</compile_context>

<pallas_src>
import functools

import jax
import jax.numpy as jnp
from jax import lax
from jax.experimental import pallas as pl
from jax.experimental.pallas import tpu as pltpu


# ----------------------------- helpers ---------------------------------------

def _round_up(x, m):
    return ((x + m - 1) // m) * m


def _choose_divisor(dim, target, align):
    """Largest `align`-aligned exact divisor of `dim` <= target, else the full dim."""
    if dim <= target:
        return dim
    t = (target // align) * align
    while t >= align:
        if dim % t == 0:
            return t
        t -= align
    return dim


def _pick_tile(dim, target, align):
    """(tile, padded_dim): full dim if it fits `target`, else an aligned tile + zero padding."""
    if dim <= target:
        return dim, dim
    t = max(align, (target // align) * align)
    return t, _round_up(dim, t)


@functools.lru_cache(maxsize=None)
def _vmem_limit_bytes():
    """~3/4 of physical VMEM (96 MiB v5e/v6e, ~48 MiB v7x); conservative 48 MiB fallback."""
    try:
        cap = int(pltpu.get_tpu_info().vmem_capacity_bytes)
    except Exception:
        return 48 << 20
    return int(min(cap * 3 // 4, 96 << 20))


# ------------------- fused (LN) -> matmul -> (bias/GELU/residual) ------------

def _fused_mm_kernel(*refs, has_ln, cache_ln, has_res, activation, eps, single_k):
    it = iter(refs)
    x_ref = next(it)
    w_ref = next(it)
    b_ref = next(it)
    g_ref = next(it) if has_ln else None
    bb_ref = next(it) if has_ln else None
    r_ref = next(it) if has_res else None
    o_ref = next(it)
    acc_ref = None if single_k else next(it)
    lnc_ref = next(it) if cache_ln else None

    j = pl.program_id(1)
    k = pl.program_id(2)

    def layer_norm_x():
        # LayerNorm prologue (x block spans full K; enforced by the wrapper). f32 statistics.
        xf = x_ref[...].astype(jnp.float32)
        mu = jnp.mean(xf, axis=-1, keepdims=True)
        xc = xf - mu
        var = jnp.mean(xc * xc, axis=-1, keepdims=True)
        xn = xc * lax.rsqrt(var + eps)
        return (xn * g_ref[...].astype(jnp.float32)
                + bb_ref[...].astype(jnp.float32)).astype(w_ref.dtype)

    if has_ln:
        if cache_ln:
            # Compute LN once per M tile (j == 0), reuse the cached result for the other N tiles.
            @pl.when(j == 0)
            def _():
                lnc_ref[...] = layer_norm_x()
            x = lnc_ref[...]
        else:
            x = layer_norm_x()
    else:
        x = x_ref[...].astype(w_ref.dtype)

    def epilogue(acc):
        acc = acc + b_ref[...].astype(jnp.float32)
        if activation == "gelu_tanh":
            c = jnp.float32(0.7978845608028654)  # sqrt(2/pi)
            acc = 0.5 * acc * (1.0 + jnp.tanh(c * (acc + 0.044715 * acc * acc * acc)))
        if has_res:
            acc = acc + r_ref[...].astype(jnp.float32)
        o_ref[...] = acc.astype(o_ref.dtype)

    if single_k:
        # Single K step: no f32 accumulator scratch / zero-init round trip.
        epilogue(jnp.dot(x, w_ref[...], preferred_element_type=jnp.float32))
    else:
        @pl.when(k == 0)
        def _():
            acc_ref[...] = jnp.zeros_like(acc_ref)

        acc_ref[...] += jnp.dot(x, w_ref[...], preferred_element_type=jnp.float32)

        @pl.when(k == pl.num_programs(2) - 1)
        def _():
            epilogue(acc_ref[...])


def fused_matmul(x, w, b, *, ln=None, residual=None, activation="none",
                 out_dtype=jnp.bfloat16, eps=1e-6,
                 tm_target=512, tn_target=512, tk_target=512,
                 resident_weight_bytes=12 << 20):
    """y = [LN(x)] @ w + b, optional GELU(tanh), optional + residual.

    x: (M, K); w: (K, N) bf16; b: (1, N) f32; ln: (gamma, beta) each (1, K) f32.
    residual: (M, N), or (P, N) with P | M (periodic residual, e.g. a pos_embed table).
    """
    M, K = x.shape
    K2, N = w.shape
    assert K == K2 and b.shape == (1, N)

    resident = (w.size * w.dtype.itemsize) <= resident_weight_bytes

    # ---- M tiling (16-aligned, zero-padded). A periodic residual constrains tm | period.
    res_period_blocks = None
    if residual is not None and residual.shape[0] != M:
        period = residual.shape[0]
        assert M % period == 0
        if period <= tm_target:
            tm, M_pad = period, M
            res_period_blocks = 1
        else:
            best = 0
            for cand in range(16, min(tm_target, period) + 1, 16):
                if period % cand == 0:
                    best = cand
            if best:
                tm, M_pad = best, M
                res_period_blocks = period // best
            else:
                # No tile-friendly divisor: materialize the residual over M instead.
                residual = jnp.tile(residual, (M // period, 1))
                tm, M_pad = _pick_tile(M, tm_target, 16)
    else:
        tm, M_pad = _pick_tile(M, tm_target, 16)

    # ---- N / K tiling: keep the whole weight resident in VMEM when it is small enough.
    if resident or N <= tn_target:
        tn, N_pad = N, N
    else:
        tn, N_pad = _pick_tile(N, tn_target, 128)
    if ln is not None or resident or K <= tk_target:
        tk, K_pad = K, K            # LN prologue requires the full K in one block
    else:
        tk, K_pad = _pick_tile(K, tk_target, 128)

    ni, nj, nk = M_pad // tm, N_pad // tn, K_pad // tk
    single_k = nk == 1
    cache_ln = (ln is not None) and nj > 1

    # ---- zero-pad operands where tiling requires it (no-ops at the demo sizes).
    if M_pad > M or K_pad > K:
        x = jnp.pad(x, ((0, M_pad - M), (0, K_pad - K)))
    if K_pad > K or N_pad > N:
        w = jnp.pad(w, ((0, K_pad - K), (0, N_pad - N)))
    if N_pad > N:
        b = jnp.pad(b, ((0, 0), (0, N_pad - N)))
    if residual is not None:
        if res_period_blocks is None and (M_pad > M or N_pad > N):
            residual = jnp.pad(residual, ((0, M_pad - M), (0, N_pad - N)))
        elif res_period_blocks is not None and N_pad > N:
            residual = jnp.pad(residual, ((0, 0), (0, N_pad - N)))

    in_specs = [
        pl.BlockSpec((tm, tk), lambda i, j, k: (i, k)),
        # When resident, tn=N and tk=K so this index is constant -> weight fetched once.
        pl.BlockSpec((tk, tn), lambda i, j, k: (k, j)),
        pl.BlockSpec((1, tn), lambda i, j, k: (0, j)),
    ]
    args = [x, w, b]
    if ln is not None:
        g, be = ln
        in_specs += [pl.BlockSpec((1, tk), lambda i, j, k: (0, k)),
                     pl.BlockSpec((1, tk), lambda i, j, k: (0, k))]
        args += [g, be]
    if residual is not None:
        if res_period_blocks is not None:
            pb = res_period_blocks
            in_specs.append(pl.BlockSpec((tm, tn), lambda i, j, k, pb=pb: (i % pb, j)))
        else:
            in_specs.append(pl.BlockSpec((tm, tn), lambda i, j, k: (i, j)))
        args.append(residual)

    scratch = []
    if not single_k:
        scratch.append(pltpu.VMEM((tm, tn), jnp.float32))
    if cache_ln:
        scratch.append(pltpu.VMEM((tm, tk), w.dtype))

    kernel = functools.partial(_fused_mm_kernel, has_ln=ln is not None, cache_ln=cache_ln,
                               has_res=residual is not None, activation=activation,
                               eps=eps, single_k=single_k)
    out = pl.pallas_call(
        kernel,
        out_shape=jax.ShapeDtypeStruct((M_pad, N_pad), out_dtype),
        grid=(ni, nj, nk),
        in_specs=in_specs,
        out_specs=pl.BlockSpec((tm, tn), lambda i, j, k: (i, j)),
        scratch_shapes=scratch,
        compiler_params=pltpu.CompilerParams(
            dimension_semantics=("parallel", "arbitrary", "arbitrary"),
            vmem_limit_bytes=_vmem_limit_bytes()),
    )(*args)
    if M_pad > M or N_pad > N:
        out = out[:M, :N]
    return out


# ------------------------------ layernorm -------------------------------------
# Only used for the final `mod.norm(x)`, whose output is returned to the caller.

def _ln_kernel(x_ref, g_ref, b_ref, o_ref, *, eps):
    x = x_ref[...].astype(jnp.float32)
    mu = jnp.mean(x, axis=-1, keepdims=True)
    xc = x - mu
    var = jnp.mean(xc * xc, axis=-1, keepdims=True)
    o_ref[...] = (xc * lax.rsqrt(var + eps) * g_ref[...] + b_ref[...]).astype(o_ref.dtype)


def layernorm(x, g, b, *, eps=1e-6, out_dtype=jnp.float32, tm_target=512):
    M, D = x.shape
    tm, M_pad = _pick_tile(M, tm_target, 16)
    if M_pad > M:
        x = jnp.pad(x, ((0, M_pad - M), (0, 0)))
    out = pl.pallas_call(
        functools.partial(_ln_kernel, eps=eps),
        out_shape=jax.ShapeDtypeStruct((M_pad, D), out_dtype),
        grid=(M_pad // tm,),
        in_specs=[pl.BlockSpec((tm, D), lambda i: (i, 0)),
                  pl.BlockSpec((1, D), lambda i: (0, 0)),
                  pl.BlockSpec((1, D), lambda i: (0, 0))],
        out_specs=pl.BlockSpec((tm, D), lambda i: (i, 0)),
        compiler_params=pltpu.CompilerParams(
            dimension_semantics=("parallel",),
            vmem_limit_bytes=_vmem_limit_bytes()),
    )(x, g, b)
    return out[:M] if M_pad > M else out


# --------------------------- multi-head attention -----------------------------
# Grid over (batch, q-row tiles); heads sliced from the packed (S, 3D) slab with static offsets.
# All head outputs are concatenated and written once as a lane-dense (tq, D) slab.

def _attn_kernel(qrows_ref, kv_ref, o_ref, *, nh, hd, scale):
    D = nh * hd
    outs = []
    for h in range(nh):
        q = qrows_ref[0, :, pl.ds(h * hd, hd)]            # (tq, hd) bf16
        k = kv_ref[0, :, pl.ds(D + h * hd, hd)]           # (S, hd)
        v = kv_ref[0, :, pl.ds(2 * D + h * hd, hd)]       # (S, hd)
        qs = (q.astype(jnp.float32) * scale).astype(k.dtype)   # fold scale into q
        s = lax.dot_general(qs, k, (((1,), (1,)), ((), ())),
                            preferred_element_type=jnp.float32)        # (tq, S), no k transpose
        m = jnp.max(s, axis=-1, keepdims=True)
        p = jnp.exp(s - m)
        p = p * pl.reciprocal(jnp.sum(p, axis=-1, keepdims=True), approx=False)
        outs.append(jnp.dot(p.astype(v.dtype), v, preferred_element_type=jnp.float32))
    o_ref[0, :, :] = jnp.concatenate(outs, axis=-1).astype(o_ref.dtype)   # lane-dense store


def attention(qkv, nh, *, tq_target=256):
    """qkv: (B, S, 3D) packed [q | k | v], each section head-major. Returns (B, S, D)."""
    B, S, threeD = qkv.shape
    D = threeD // 3
    hd = D // nh
    scale = 1.0 / float(hd) ** 0.5
    tq = _choose_divisor(S, tq_target, 8)   # q-row tile (exact divisor; full S fallback)
    return pl.pallas_call(
        functools.partial(_attn_kernel, nh=nh, hd=hd, scale=scale),
        out_shape=jax.ShapeDtypeStruct((B, S, D), qkv.dtype),
        grid=(B, S // tq),
        in_specs=[pl.BlockSpec((1, tq, threeD), lambda b, qi: (b, qi, 0)),   # q rows
                  pl.BlockSpec((1, S, threeD), lambda b, qi: (b, 0, 0))],    # full K/V slab
        out_specs=pl.BlockSpec((1, tq, D), lambda b, qi: (b, qi, 0)),
        compiler_params=pltpu.CompilerParams(
            dimension_semantics=("parallel", "parallel"),
            vmem_limit_bytes=_vmem_limit_bytes()),
    )(qkv, qkv)


# --------------------- attention-pool (latent query) attention ----------------

def _attn_pool_kernel(q_ref, kv_ref, o_ref, *, nh, hd, scale):
    D = nh * hd
    outs = []
    for h in range(nh):
        q = q_ref[:, pl.ds(h * hd, hd)]                  # (1, hd) shared latent query
        k = kv_ref[0, :, pl.ds(h * hd, hd)]              # (N, hd)
        v = kv_ref[0, :, pl.ds(D + h * hd, hd)]          # (N, hd)
        qs = (q.astype(jnp.float32) * scale).astype(k.dtype)
        s = lax.dot_general(qs, k, (((1,), (1,)), ((), ())),
                            preferred_element_type=jnp.float32)        # (1, N)
        m = jnp.max(s, axis=-1, keepdims=True)
        p = jnp.exp(s - m)
        p = p * pl.reciprocal(jnp.sum(p, axis=-1, keepdims=True), approx=False)
        outs.append(jnp.dot(p.astype(v.dtype), v, preferred_element_type=jnp.float32))
    o_ref[0, :, :] = jnp.concatenate(outs, axis=-1).astype(o_ref.dtype)


def attn_pool_attention(q, kv, nh):
    """q: (1, D) projected latent query; kv: (B, N, 2D) packed [k | v]. Returns (B, D)."""
    B, N, twoD = kv.shape
    D = twoD // 2
    hd = D // nh
    scale = 1.0 / float(hd) ** 0.5
    out = pl.pallas_call(
        functools.partial(_attn_pool_kernel, nh=nh, hd=hd, scale=scale),
        out_shape=jax.ShapeDtypeStruct((B, 1, D), kv.dtype),
        grid=(B,),
        in_specs=[pl.BlockSpec((1, D), lambda b: (0, 0)),
                  pl.BlockSpec((1, N, twoD), lambda b: (b, 0, 0))],
        out_specs=pl.BlockSpec((1, 1, D), lambda b: (b, 0, 0)),
        compiler_params=pltpu.CompilerParams(
            dimension_semantics=("parallel",),
            vmem_limit_bytes=_vmem_limit_bytes()),
    )(q, kv)
    return out.reshape(B, D)


# --------------------------------- model --------------------------------------

def init_params(key, cfg):
    C, p = cfg["in_chans"], cfg["patch_size"]
    D, mlp, L = cfg["embed_dim"], cfg["mlp_dim"], cfg["depth"]
    pmlp = cfg["pool_mlp_dim"]
    n_pos = (cfg["img_size"] // p) ** 2

    keys = iter(jax.random.split(key, 8 + 4 * L))

    def w(shape, scale=0.02):
        return (scale * jax.random.normal(next(keys), shape, dtype=jnp.float32)).astype(jnp.bfloat16)

    def f32(shape, scale=0.02):
        return scale * jax.random.normal(next(keys), shape, dtype=jnp.float32)

    ones = lambda n: jnp.ones((1, n), jnp.float32)
    zeros = lambda n: jnp.zeros((1, n), jnp.float32)

    params = {
        "patch_w": w((C * p * p, D)), "patch_b": zeros(D),
        "pos_embed": f32((n_pos, D)),
        "norm_g": ones(D), "norm_b": zeros(D),
        "blocks": [],
    }
    for _ in range(L):
        params["blocks"].append({
            "ln1_g": ones(D), "ln1_b": zeros(D),
            "qkv_w": w((D, 3 * D)), "qkv_b": zeros(3 * D),
            "proj_w": w((D, D)), "proj_b": zeros(D),
            "ln2_g": ones(D), "ln2_b": zeros(D),
            "fc1_w": w((D, mlp)), "fc1_b": zeros(mlp),
            "fc2_w": w((mlp, D)), "fc2_b": zeros(D),
        })
    params["attn_pool"] = {
        "latent": w((1, D)),
        "q_w": w((D, D)), "q_b": zeros(D),
        "kv_w": w((D, 2 * D)), "kv_b": zeros(2 * D),
        "proj_w": w((D, D)), "proj_b": zeros(D),
        "norm_g": ones(D), "norm_b": zeros(D),
        "mlp_fc1_w": w((D, pmlp)), "mlp_fc1_b": zeros(pmlp),
        "mlp_fc2_w": w((pmlp, D)), "mlp_fc2_b": zeros(D),
    }
    return params


def siglip_forward(params, img, cfg):
    """Equivalent of SigLIPWrapper.forward: returns (summary, tokens)."""
    B, C, H, W = img.shape
    p, D, nh = cfg["patch_size"], cfg["embed_dim"], cfg["num_heads"]
    gh, gw = H // p, W // p
    N = gh * gw
    M = B * N

    # patch_embed: Conv2d(kernel=stride=patch, bias=True) as patchify + fused matmul.
    # pos_embed add fused into the matmul epilogue as a periodic residual (shared over batch).
    # TODO(synk): timm bicubically resamples pos_embed for dynamic image sizes; the synthetic
    # pos_embed is built at the demo grid size so resampling is the identity here.
    patches = (img.reshape(B, C, gh, p, gw, p)
                  .transpose(0, 2, 4, 1, 3, 5)
                  .reshape(M, C * p * p)).astype(jnp.bfloat16)
    x = fused_matmul(patches, params["patch_w"], params["patch_b"],
                     residual=params["pos_embed"])                           # (M, D) bf16

    # patch_drop and norm_pre are Identity for SigLIP at inference.

    for blk in params["blocks"]:
        # MHSA: LN1 fused into the QKV matmul prologue, residual fused into the proj epilogue.
        qkv = fused_matmul(x, blk["qkv_w"], blk["qkv_b"],
                           ln=(blk["ln1_g"], blk["ln1_b"]))                  # (M, 3D)
        a = attention(qkv.reshape(B, N, 3 * D), nh)                          # (B, N, D)
        x = fused_matmul(a.reshape(M, D), blk["proj_w"], blk["proj_b"], residual=x)
        # MLP: LN2 + GELU(tanh) fused into fc1, residual fused into fc2.
        h = fused_matmul(x, blk["fc1_w"], blk["fc1_b"],
                         ln=(blk["ln2_g"], blk["ln2_b"]), activation="gelu_tanh")
        x = fused_matmul(h, blk["fc2_w"], blk["fc2_b"], residual=x)

    # final norm -> returned tokens (f32)
    tokens = layernorm(x, params["norm_g"], params["norm_b"], out_dtype=jnp.float32)  # (M, D)

    # attn_pool (AttentionPoolLatent, latent_len=1, pool='token')
    ap = params["attn_pool"]
    q_lat = fused_matmul(ap["latent"], ap["q_w"], ap["q_b"])                 # (1, D)
    kv = fused_matmul(tokens, ap["kv_w"], ap["kv_b"])                        # (M, 2D)
    pooled = attn_pool_attention(q_lat, kv.reshape(B, N, 2 * D), nh)         # (B, D)
    pooled = fused_matmul(pooled, ap["proj_w"], ap["proj_b"])                # (B, D)
    # TODO(synk): timm AttentionPoolLatent MLP uses exact-erf nn.GELU; tanh approximation used here.
    h = fused_matmul(pooled, ap["mlp_fc1_w"], ap["mlp_fc1_b"],
                     ln=(ap["norm_g"], ap["norm_b"]), activation="gelu_tanh")
    summary = fused_matmul(h, ap["mlp_fc2_w"], ap["mlp_fc2_b"],
                           residual=pooled, out_dtype=jnp.float32)           # (B, D)

    return summary, tokens.reshape(B, N, D)


# --------------------------------- main ----------------------------------------

if __name__ == "__main__":
    cfg = dict(
        in_chans=3,
        img_size=16,
        patch_size=4,
        embed_dim=32,
        num_heads=4,
        mlp_dim=128,
        depth=2,
        pool_mlp_dim=128,
    )

    key = jax.random.PRNGKey(0)
    k_img, k_par = jax.random.split(key)
    img = jax.random.normal(
        k_img, (2, cfg["in_chans"], cfg["img_size"], cfg["img_size"]), dtype=jnp.float32)
    params = init_params(k_par, cfg)

    fwd = jax.jit(functools.partial(siglip_forward, cfg=cfg))
    summary, tokens = fwd(params, img)
    summary = jax.block_until_ready(summary)
    tokens = jax.block_until_ready(tokens)

    n_tok = (cfg["img_size"] // cfg["patch_size"]) ** 2
    assert tokens.shape == (2, n_tok, cfg["embed_dim"]), tokens.shape
    assert tokens.dtype == jnp.float32
    assert summary.shape == (2, cfg["embed_dim"]), summary.shape
    assert summary.dtype == jnp.float32
    assert bool(jnp.all(jnp.isfinite(tokens))) and bool(jnp.all(jnp.isfinite(summary)))

    print("KERNEL_OK")
</pallas_src>

<mosaic_0001>
module attributes {stable_mosaic.version = 11 : i64} {
  func.func @_fused_mm_kernel(%arg0: i32, %arg1: i32, %arg2: i32, %arg3: memref<32x32xbf16, #tpu.memory_space<vmem>>, %arg4: memref<32x96xbf16, #tpu.memory_space<vmem>>, %arg5: memref<1x96xf32, #tpu.memory_space<vmem>>, %arg6: memref<1x32xf32, #tpu.memory_space<vmem>>, %arg7: memref<1x32xf32, #tpu.memory_space<vmem>>, %arg8: memref<32x96xbf16, #tpu.memory_space<vmem>>) attributes {dimension_semantics = [#tpu.dimension_semantics<parallel>, #tpu.dimension_semantics<arbitrary>, #tpu.dimension_semantics<arbitrary>], iteration_bounds = array<i64: 1, 1, 1>, scalar_prefetch = 0 : i64, scratch_operands = 0 : i64, tpu.core_type = #tpu.core_type<tc>, window_params = [{transform_indices = @transform_0, window_bounds = array<i64: 32, 32>}, {transform_indices = @transform_1, window_bounds = array<i64: 32, 96>}, {transform_indices = @transform_2, window_bounds = array<i64: 1, 96>}, {transform_indices = @transform_3, window_bounds = array<i64: 1, 32>}, {transform_indices = @transform_4, window_bounds = array<i64: 1, 32>}, {transform_indices = @transform_5, window_bounds = array<i64: 32, 96>}]} {
    %c0 = arith.constant 0 : index
    %c0_0 = arith.constant 0 : index
    %0 = vector.load %arg3[%c0, %c0_0] : memref<32x32xbf16, #tpu.memory_space<vmem>>, vector<32x32xbf16>
    %1 = arith.extf %0 : vector<32x32xbf16> to vector<32x32xf32>
    %cst = arith.constant dense<0.000000e+00> : vector<32xf32>
    %2 = vector.multi_reduction <add>, %1, %cst [1] : vector<32x32xf32> to vector<32xf32>
    %3 = vector.shape_cast %2 : vector<32xf32> to vector<32x1xf32>
    %cst_1 = arith.constant 3.200000e+01 : f32
    %4 = vector.broadcast %cst_1 : f32 to vector<32x1xf32>
    %5 = arith.divf %3, %4 : vector<32x1xf32>
    %6 = vector.broadcast %5 : vector<32x1xf32> to vector<32x32xf32>
    %7 = arith.subf %1, %6 : vector<32x32xf32>
    %8 = arith.mulf %7, %7 : vector<32x32xf32>
    %cst_2 = arith.constant dense<0.000000e+00> : vector<32xf32>
    %9 = vector.multi_reduction <add>, %8, %cst_2 [1] : vector<32x32xf32> to vector<32xf32>
    %10 = vector.shape_cast %9 : vector<32xf32> to vector<32x1xf32>
    %cst_3 = arith.constant 3.200000e+01 : f32
    %11 = vector.broadcast %cst_3 : f32 to vector<32x1xf32>
    %12 = arith.divf %10, %11 : vector<32x1xf32>
    %cst_4 = arith.constant 9.99999997E-7 : f32
    %13 = vector.broadcast %cst_4 : f32 to vector<32x1xf32>
    %14 = arith.addf %12, %13 : vector<32x1xf32>
    %15 = math.rsqrt %14 : vector<32x1xf32>
    %16 = vector.broadcast %15 : vector<32x1xf32> to vector<32x32xf32>
    %17 = arith.mulf %7, %16 : vector<32x32xf32>
    %c0_5 = arith.constant 0 : index
    %c0_6 = arith.constant 0 : index
    %18 = vector.load %arg6[%c0_5, %c0_6] : memref<1x32xf32, #tpu.memory_space<vmem>>, vector<1x32xf32>
    %19 = vector.broadcast %18 : vector<1x32xf32> to vector<32x32xf32>
    %20 = arith.mulf %17, %19 : vector<32x32xf32>
    %c0_7 = arith.constant 0 : index
    %c0_8 = arith.constant 0 : index
    %21 = vector.load %arg7[%c0_7, %c0_8] : memref<1x32xf32, #tpu.memory_space<vmem>>, vector<1x32xf32>
    %22 = vector.broadcast %21 : vector<1x32xf32> to vector<32x32xf32>
    %23 = arith.addf %20, %22 : vector<32x32xf32>
    %24 = arith.truncf %23 : vector<32x32xf32> to vector<32x32xbf16>
    %c0_9 = arith.constant 0 : index
    %c0_10 = arith.constant 0 : index
    %25 = vector.load %arg4[%c0_9, %c0_10] : memref<32x96xbf16, #tpu.memory_space<vmem>>, vector<32x96xbf16>
    %cst_11 = arith.constant dense<0.000000e+00> : vector<32x96xf32>
    %26 = tpu.matmul %24, %25, %cst_11 {dimension_numbers = #tpu.dot_dimension_numbers<[1], [0], [0], [1], [0, 0, 1, 1], [], []>} : vector<32x32xbf16>, vector<32x96xbf16>, vector<32x96xf32> -> vector<32x96xf32>
    %c0_12 = arith.constant 0 : index
    %c0_13 = arith.constant 0 : index
    %27 = vector.load %arg5[%c0_12, %c0_13] : memref<1x96xf32, #tpu.memory_space<vmem>>, vector<1x96xf32>
    %28 = vector.broadcast %27 : vector<1x96xf32> to vector<32x96xf32>
    %29 = arith.addf %26, %28 : vector<32x96xf32>
    %30 = arith.truncf %29 : vector<32x96xf32> to vector<32x96xbf16>
    %c0_14 = arith.constant 0 : index
    %c0_15 = arith.constant 0 : index
    %31 = vector.load %arg8[%c0_14, %c0_15] : memref<32x96xbf16, #tpu.memory_space<vmem>>, vector<32x96xbf16>
    tpu.vector_store %arg8[%c0_14, %c0_15], %30 {strides = array<i32>} : memref<32x96xbf16, #tpu.memory_space<vmem>>, vector<32x96xbf16>,
    return
  }
  func.func @transform_0(%arg0: i32, %arg1: i32, %arg2: i32) -> (i32, i32) {
    %c0_i32 = arith.constant 0 : i32
    return %arg0, %arg2 : i32, i32
  }
  func.func @transform_1(%arg0: i32, %arg1: i32, %arg2: i32) -> (i32, i32) {
    %c0_i32 = arith.constant 0 : i32
    return %arg2, %arg1 : i32, i32
  }
  func.func @transform_2(%arg0: i32, %arg1: i32, %arg2: i32) -> (i32, i32) {
    %c0_i32 = arith.constant 0 : i32
    %c0_i32_0 = arith.constant 0 : i32
    return %c0_i32, %arg1 : i32, i32
  }
  func.func @transform_3(%arg0: i32, %arg1: i32, %arg2: i32) -> (i32, i32) {
    %c0_i32 = arith.constant 0 : i32
    %c0_i32_0 = arith.constant 0 : i32
    return %c0_i32, %arg2 : i32, i32
  }
  func.func @transform_4(%arg0: i32, %arg1: i32, %arg2: i32) -> (i32, i32) {
    %c0_i32 = arith.constant 0 : i32
    %c0_i32_0 = arith.constant 0 : i32
    return %c0_i32, %arg2 : i32, i32
  }
  func.func @transform_5(%arg0: i32, %arg1: i32, %arg2: i32) -> (i32, i32) {
    %c0_i32 = arith.constant 0 : i32
    return %arg0, %arg1 : i32, i32
  }
}

module attributes {stable_mosaic.version = 11 : i64} {
  func.func @_fused_mm_kernel(%arg0: i32, %arg1: i32, %arg2: i32, %arg3: memref<16x48xbf16, #tpu.memory_space<vmem>>, %arg4: memref<48x32xbf16, #tpu.memory_space<vmem>>, %arg5: memref<1x32xf32, #tpu.memory_space<vmem>>, %arg6: memref<16x32xf32, #tpu.memory_space<vmem>>, %arg7: memref<16x32xbf16, #tpu.memory_space<vmem>>) attributes {dimension_semantics = [#tpu.dimension_semantics<parallel>, #tpu.dimension_semantics<arbitrary>, #tpu.dimension_semantics<arbitrary>], iteration_bounds = array<i64: 2, 1, 1>, scalar_prefetch = 0 : i64, scratch_operands = 0 : i64, tpu.core_type = #tpu.core_type<tc>, window_params = [{transform_indices = @transform_0, window_bounds = array<i64: 16, 48>}, {transform_indices = @transform_1, window_bounds = array<i64: 48, 32>}, {transform_indices = @transform_2, window_bounds = array<i64: 1, 32>}, {transform_indices = @transform_3, window_bounds = array<i64: 16, 32>}, {transform_indices = @transform_4, window_bounds = array<i64: 16, 32>}]} {
    %c0 = arith.constant 0 : index
    %c0_0 = arith.constant 0 : index
    %0 = vector.load %arg3[%c0, %c0_0] : memref<16x48xbf16, #tpu.memory_space<vmem>>, vector<16x48xbf16>
    %c0_1 = arith.constant 0 : index
    %c0_2 = arith.constant 0 : index
    %1 = vector.load %arg4[%c0_1, %c0_2] : memref<48x32xbf16, #tpu.memory_space<vmem>>, vector<48x32xbf16>
    %cst = arith.constant dense<0.000000e+00> : vector<16x32xf32>
    %2 = tpu.matmul %0, %1, %cst {dimension_numbers = #tpu.dot_dimension_numbers<[1], [0], [0], [1], [0, 0, 1, 1], [], []>} : vector<16x48xbf16>, vector<48x32xbf16>, vector<16x32xf32> -> vector<16x32xf32>
    %c0_3 = arith.constant 0 : index
    %c0_4 = arith.constant 0 : index
    %3 = vector.load %arg5[%c0_3, %c0_4] : memref<1x32xf32, #tpu.memory_space<vmem>>, vector<1x32xf32>
    %4 = vector.broadcast %3 : vector<1x32xf32> to vector<16x32xf32>
    %5 = arith.addf %2, %4 : vector<16x32xf32>
    %c0_5 = arith.constant 0 : index
    %c0_6 = arith.constant 0 : index
    %6 = vector.load %arg6[%c0_5, %c0_6] : memref<16x32xf32, #tpu.memory_space<vmem>>, vector<16x32xf32>
    %7 = arith.addf %5, %6 : vector<16x32xf32>
    %8 = arith.truncf %7 : vector<16x32xf32> to vector<16x32xbf16>
    %c0_7 = arith.constant 0 : index
    %c0_8 = arith.constant 0 : index
    %9 = vector.load %arg7[%c0_7, %c0_8] : memref<16x32xbf16, #tpu.memory_space<vmem>>, vector<16x32xbf16>
    tpu.vector_store %arg7[%c0_7, %c0_8], %8 {strides = array<i32>} : memref<16x32xbf16, #tpu.memory_space<vmem>>, vector<16x32xbf16>,
    return
  }
  func.func @transform_0(%arg0: i32, %arg1: i32, %arg2: i32) -> (i32, i32) {
    %c0_i32 = arith.constant 0 : i32
    return %arg0, %arg2 : i32, i32
  }
  func.func @transform_1(%arg0: i32, %arg1: i32, %arg2: i32) -> (i32, i32) {
    %c0_i32 = arith.constant 0 : i32
    return %arg2, %arg1 : i32, i32
  }
  func.func @transform_2(%arg0: i32, %arg1: i32, %arg2: i32) -> (i32, i32) {
    %c0_i32 = arith.constant 0 : i32
    %c0_i32_0 = arith.constant 0 : i32
    return %c0_i32, %arg1 : i32, i32
  }
  func.func @transform_3(%arg0: i32, %arg1: i32, %arg2: i32) -> (i32, i32) {
    %c1_i32 = arith.constant 1 : i32
    %c0_i32 = arith.constant 0 : i32
    %0 = arith.cmpi eq, %c1_i32, %c0_i32 : i32
    %c1_i32_0 = arith.constant 1 : i32
    %1 = arith.select %0, %c1_i32_0, %c1_i32 : i32
    %2 = arith.remsi %arg0, %1 : i32
    %c0_i32_1 = arith.constant 0 : i32
    %3 = arith.cmpi ne, %2, %c0_i32_1 : i32
    %c0_i32_2 = arith.constant 0 : i32
    %4 = arith.cmpi slt, %2, %c0_i32_2 : i32
    %c0_i32_3 = arith.constant 0 : i32
    %5 = arith.cmpi slt, %1, %c0_i32_3 : i32
    %6 = arith.xori %4, %5 : i1
    %7 = arith.andi %6, %3 : i1
    %8 = arith.addi %2, %1 : i32
    %9 = arith.select %7, %8, %2 : i32
    %c0_i32_4 = arith.constant 0 : i32
    return %9, %arg1 : i32, i32
  }
  func.func @transform_4(%arg0: i32, %arg1: i32, %arg2: i32) -> (i32, i32) {
    %c0_i32 = arith.constant 0 : i32
    return %arg0, %arg1 : i32, i32
  }
}

module attributes {stable_mosaic.version = 11 : i64} {
  func.func @_attn_kernel(%arg0: i32, %arg1: i32, %arg2: memref<1x16x96xbf16, #tpu.memory_space<vmem>>, %arg3: memref<1x16x96xbf16, #tpu.memory_space<vmem>>, %arg4: memref<1x16x32xbf16, #tpu.memory_space<vmem>>) attributes {dimension_semantics = [#tpu.dimension_semantics<parallel>, #tpu.dimension_semantics<parallel>], iteration_bounds = array<i64: 2, 1>, scalar_prefetch = 0 : i64, scratch_operands = 0 : i64, tpu.core_type = #tpu.core_type<tc>, window_params = [{transform_indices = @transform_0, window_bounds = array<i64: 1, 16, 96>}, {transform_indices = @transform_1, window_bounds = array<i64: 1, 16, 96>}, {transform_indices = @transform_2, window_bounds = array<i64: 1, 16, 32>}]} {
    %c0 = arith.constant 0 : index
    %c0_0 = arith.constant 0 : index
    %c0_1 = arith.constant 0 : index
    %0 = vector.load %arg2[%c0, %c0_0, %c0_1] : memref<1x16x96xbf16, #tpu.memory_space<vmem>>, vector<1x16x8xbf16>
    %1 = vector.shape_cast %0 : vector<1x16x8xbf16> to vector<16x8xbf16>
    %c0_2 = arith.constant 0 : index
    %c0_3 = arith.constant 0 : index
    %c32 = arith.constant 32 : index
    %2 = vector.load %arg3[%c0_2, %c0_3, %c32] : memref<1x16x96xbf16, #tpu.memory_space<vmem>>, vector<1x16x8xbf16>
    %3 = vector.shape_cast %2 : vector<1x16x8xbf16> to vector<16x8xbf16>
    %c0_4 = arith.constant 0 : index
    %c0_5 = arith.constant 0 : index
    %c64 = arith.constant 64 : index
    %4 = vector.load %arg3[%c0_4, %c0_5, %c64] : memref<1x16x96xbf16, #tpu.memory_space<vmem>>, vector<1x16x8xbf16>
    %5 = vector.shape_cast %4 : vector<1x16x8xbf16> to vector<16x8xbf16>
    %6 = arith.extf %1 : vector<16x8xbf16> to vector<16x8xf32>
    %cst = arith.constant 0.353553385 : f32
    %7 = vector.broadcast %cst : f32 to vector<16x8xf32>
    %8 = arith.mulf %6, %7 : vector<16x8xf32>
    %9 = arith.truncf %8 : vector<16x8xf32> to vector<16x8xbf16>
    %cst_6 = arith.constant dense<0.000000e+00> : vector<16x16xf32>
    %10 = tpu.matmul %9, %3, %cst_6 {dimension_numbers = #tpu.dot_dimension_numbers<[1], [1], [0], [0], [0, 0, 1, 0], [], []>} : vector<16x8xbf16>, vector<16x8xbf16>, vector<16x16xf32> -> vector<16x16xf32>
    %cst_7 = arith.constant dense<0xFF800000> : vector<16xf32>
    %11 = vector.multi_reduction <maximumf>, %10, %cst_7 [1] : vector<16x16xf32> to vector<16xf32>
    %12 = vector.shape_cast %11 : vector<16xf32> to vector<16x1xf32>
    %13 = vector.broadcast %12 : vector<16x1xf32> to vector<16x16xf32>
    %14 = arith.subf %10, %13 : vector<16x16xf32>
    %15 = math.exp %14 : vector<16x16xf32>
    %cst_8 = arith.constant dense<0.000000e+00> : vector<16xf32>
    %16 = vector.multi_reduction <add>, %15, %cst_8 [1] : vector<16x16xf32> to vector<16xf32>
    %17 = vector.shape_cast %16 : vector<16xf32> to vector<16x1xf32>
    %18 = tpu.reciprocal %17 : vector<16x1xf32> -> vector<16x1xf32>
    %19 = vector.broadcast %18 : vector<16x1xf32> to vector<16x16xf32>
    %20 = arith.mulf %15, %19 : vector<16x16xf32>
    %21 = arith.truncf %20 : vector<16x16xf32> to vector<16x16xbf16>
    %cst_9 = arith.constant dense<0.000000e+00> : vector<16x8xf32>
    %22 = tpu.matmul %21, %5, %cst_9 {dimension_numbers = #tpu.dot_dimension_numbers<[1], [0], [0], [1], [0, 0, 1, 1], [], []>} : vector<16x16xbf16>, vector<16x8xbf16>, vector<16x8xf32> -> vector<16x8xf32>
    %c0_10 = arith.constant 0 : index
    %c0_11 = arith.constant 0 : index
    %c8 = arith.constant 8 : index
    %23 = vector.load %arg2[%c0_10, %c0_11, %c8] : memref<1x16x96xbf16, #tpu.memory_space<vmem>>, vector<1x16x8xbf16>
    %24 = vector.shape_cast %23 : vector<1x16x8xbf16> to vector<16x8xbf16>
    %c0_12 = arith.constant 0 : index
    %c0_13 = arith.constant 0 : index
    %c40 = arith.constant 40 : index
    %25 = vector.load %arg3[%c0_12, %c0_13, %c40] : memref<1x16x96xbf16, #tpu.memory_space<vmem>>, vector<1x16x8xbf16>
    %26 = vector.shape_cast %25 : vector<1x16x8xbf16> to vector<16x8xbf16>
    %c0_14 = arith.constant 0 : index
    %c0_15 = arith.constant 0 : index
    %c72 = arith.constant 72 : index
    %27 = vector.load %arg3[%c0_14, %c0_15, %c72] : memref<1x16x96xbf16, #tpu.memory_space<vmem>>, vector<1x16x8xbf16>
    %28 = vector.shape_cast %27 : vector<1x16x8xbf16> to vector<16x8xbf16>
    %29 = arith.extf %24 : vector<16x8xbf16> to vector<16x8xf32>
    %cst_16 = arith.constant 0.353553385 : f32
    %30 = vector.broadcast %cst_16 : f32 to vector<16x8xf32>
    %31 = arith.mulf %29, %30 : vector<16x8xf32>
    %32 = arith.truncf %31 : vector<16x8xf32> to vector<16x8xbf16>
    %cst_17 = arith.constant dense<0.000000e+00> : vector<16x16xf32>
    %33 = tpu.matmul %32, %26, %cst_17 {dimension_numbers = #tpu.dot_dimension_numbers<[1], [1], [0], [0], [0, 0, 1, 0], [], []>} : vector<16x8xbf16>, vector<16x8xbf16>, vector<16x16xf32> -> vector<16x16xf32>
    %cst_18 = arith.constant dense<0xFF800000> : vector<16xf32>
    %34 = vector.multi_reduction <maximumf>, %33, %cst_18 [1] : vector<16x16xf32> to vector<16xf32>
    %35 = vector.shape_cast %34 : vector<16xf32> to vector<16x1xf32>
    %36 = vector.broadcast %35 : vector<16x1xf32> to vector<16x16xf32>
    %37 = arith.subf %33, %36 : vector<16x16xf32>
    %38 = math.exp %37 : vector<16x16xf32>
    %cst_19 = arith.constant dense<0.000000e+00> : vector<16xf32>
    %39 = vector.multi_reduction <add>, %38, %cst_19 [1] : vector<16x16xf32> to vector<16xf32>
    %40 = vector.shape_cast %39 : vector<16xf32> to vector<16x1xf32>
    %41 = tpu.reciprocal %40 : vector<16x1xf32> -> vector<16x1xf32>
    %42 = vector.broadcast %41 : vector<16x1xf32> to vector<16x16xf32>
    %43 = arith.mulf %38, %42 : vector<16x16xf32>
    %44 = arith.truncf %43 : vector<16x16xf32> to vector<16x16xbf16>
    %cst_20 = arith.constant dense<0.000000e+00> : vector<16x8xf32>
    %45 = tpu.matmul %44, %28, %cst_20 {dimension_numbers = #tpu.dot_dimension_numbers<[1], [0], [0], [1], [0, 0, 1, 1], [], []>} : vector<16x16xbf16>, vector<16x8xbf16>, vector<16x8xf32> -> vector<16x8xf32>
    %c0_21 = arith.constant 0 : index
    %c0_22 = arith.constant 0 : index
    %c16 = arith.constant 16 : index
    %46 = vector.load %arg2[%c0_21, %c0_22, %c16] : memref<1x16x96xbf16, #tpu.memory_space<vmem>>, vector<1x16x8xbf16>
    %47 = vector.shape_cast %46 : vector<1x16x8xbf16> to vector<16x8xbf16>
    %c0_23 = arith.constant 0 : index
    %c0_24 = arith.constant 0 : index
    %c48 = arith.constant 48 : index
    %48 = vector.load %arg3[%c0_23, %c0_24, %c48] : memref<1x16x96xbf16, #tpu.memory_space<vmem>>, vector<1x16x8xbf16>
    %49 = vector.shape_cast %48 : vector<1x16x8xbf16> to vector<16x8xbf16>
    %c0_25 = arith.constant 0 : index
    %c0_26 = arith.constant 0 : index
    %c80 = arith.constant 80 : index
    %50 = vector.load %arg3[%c0_25, %c0_26, %c80] : memref<1x16x96xbf16, #tpu.memory_space<vmem>>, vector<1x16x8xbf16>
    %51 = vector.shape_cast %50 : vector<1x16x8xbf16> to vector<16x8xbf16>
    %52 = arith.extf %47 : vector<16x8xbf16> to vector<16x8xf32>
    %cst_27 = arith.constant 0.353553385 : f32
    %53 = vector.broadcast %cst_27 : f32 to vector<16x8xf32>
    %54 = arith.mulf %52, %53 : vector<16x8xf32>
    %55 = arith.truncf %54 : vector<16x8xf32> to vector<16x8xbf16>
    %cst_28 = arith.constant dense<0.000000e+00> : vector<16x16xf32>
    %56 = tpu.matmul %55, %49, %cst_28 {dimension_numbers = #tpu.dot_dimension_numbers<[1], [1], [0], [0], [0, 0, 1, 0], [], []>} : vector<16x8xbf16>, vector<16x8xbf16>, vector<16x16xf32> -> vector<16x16xf32>
    %cst_29 = arith.constant dense<0xFF800000> : vector<16xf32>
    %57 = vector.multi_reduction <maximumf>, %56, %cst_29 [1] : vector<16x16xf32> to vector<16xf32>
    %58 = vector.shape_cast %57 : vector<16xf32> to vector<16x1xf32>
    %59 = vector.broadcast %58 : vector<16x1xf32> to vector<16x16xf32>
    %60 = arith.subf %56, %59 : vector<16x16xf32>
    %61 = math.exp %60 : vector<16x16xf32>
    %cst_30 = arith.constant dense<0.000000e+00> : vector<16xf32>
    %62 = vector.multi_reduction <add>, %61, %cst_30 [1] : vector<16x16xf32> to vector<16xf32>
    %63 = vector.shape_cast %62 : vector<16xf32> to vector<16x1xf32>
    %64 = tpu.reciprocal %63 : vector<16x1xf32> -> vector<16x1xf32>
    %65 = vector.broadcast %64 : vector<16x1xf32> to vector<16x16xf32>
    %66 = arith.mulf %61, %65 : vector<16x16xf32>
    %67 = arith.truncf %66 : vector<16x16xf32> to vector<16x16xbf16>
    %cst_31 = arith.constant dense<0.000000e+00> : vector<16x8xf32>
    %68 = tpu.matmul %67, %51, %cst_31 {dimension_numbers = #tpu.dot_dimension_numbers<[1], [0], [0], [1], [0, 0, 1, 1], [], []>} : vector<16x16xbf16>, vector<16x8xbf16>, vector<16x8xf32> -> vector<16x8xf32>
    %c0_32 = arith.constant 0 : index
    %c0_33 = arith.constant 0 : index
    %c24 = arith.constant 24 : index
    %69 = vector.load %arg2[%c0_32, %c0_33, %c24] : memref<1x16x96xbf16, #tpu.memory_space<vmem>>, vector<1x16x8xbf16>
    %70 = vector.shape_cast %69 : vector<1x16x8xbf16> to vector<16x8xbf16>
    %c0_34 = arith.constant 0 : index
    %c0_35 = arith.constant 0 : index
    %c56 = arith.constant 56 : index
    %71 = vector.load %arg3[%c0_34, %c0_35, %c56] : memref<1x16x96xbf16, #tpu.memory_space<vmem>>, vector<1x16x8xbf16>
    %72 = vector.shape_cast %71 : vector<1x16x8xbf16> to vector<16x8xbf16>
    %c0_36 = arith.constant 0 : index
    %c0_37 = arith.constant 0 : index
    %c88 = arith.constant 88 : index
    %73 = vector.load %arg3[%c0_36, %c0_37, %c88] : memref<1x16x96xbf16, #tpu.memory_space<vmem>>, vector<1x16x8xbf16>
    %74 = vector.shape_cast %73 : vector<1x16x8xbf16> to vector<16x8xbf16>
    %75 = arith.extf %70 : vector<16x8xbf16> to vector<16x8xf32>
    %cst_38 = arith.constant 0.353553385 : f32
    %76 = vector.broadcast %cst_38 : f32 to vector<16x8xf32>
    %77 = arith.mulf %75, %76 : vector<16x8xf32>
    %78 = arith.truncf %77 : vector<16x8xf32> to vector<16x8xbf16>
    %cst_39 = arith.constant dense<0.000000e+00> : vector<16x16xf32>
    %79 = tpu.matmul %78, %72, %cst_39 {dimension_numbers = #tpu.dot_dimension_numbers<[1], [1], [0], [0], [0, 0, 1, 0], [], []>} : vector<16x8xbf16>, vector<16x8xbf16>, vector<16x16xf32> -> vector<16x16xf32>
    %cst_40 = arith.constant dense<0xFF800000> : vector<16xf32>
    %80 = vector.multi_reduction <maximumf>, %79, %cst_40 [1] : vector<16x16xf32> to vector<16xf32>
    %81 = vector.shape_cast %80 : vector<16xf32> to vector<16x1xf32>
    %82 = vector.broadcast %81 : vector<16x1xf32> to vector<16x16xf32>
    %83 = arith.subf %79, %82 : vector<16x16xf32>
    %84 = math.exp %83 : vector<16x16xf32>
    %cst_41 = arith.constant dense<0.000000e+00> : vector<16xf32>
    %85 = vector.multi_reduction <add>, %84, %cst_41 [1] : vector<16x16xf32> to vector<16xf32>
    %86 = vector.shape_cast %85 : vector<16xf32> to vector<16x1xf32>
    %87 = tpu.reciprocal %86 : vector<16x1xf32> -> vector<16x1xf32>
    %88 = vector.broadcast %87 : vector<16x1xf32> to vector<16x16xf32>
    %89 = arith.mulf %84, %88 : vector<16x16xf32>
    %90 = arith.truncf %89 : vector<16x16xf32> to vector<16x16xbf16>
    %cst_42 = arith.constant dense<0.000000e+00> : vector<16x8xf32>
    %91 = tpu.matmul %90, %74, %cst_42 {dimension_numbers = #tpu.dot_dimension_numbers<[1], [0], [0], [1], [0, 0, 1, 1], [], []>} : vector<16x16xbf16>, vector<16x8xbf16>, vector<16x8xf32> -> vector<16x8xf32>
    %92 = tpu.concatenate %22, %45, %68, %91 in 1 : vector<16x8xf32>, vector<16x8xf32>, vector<16x8xf32>, vector<16x8xf32> -> vector<16x32xf32>
    %93 = arith.truncf %92 : vector<16x32xf32> to vector<16x32xbf16>
    %c0_43 = arith.constant 0 : index
    %c0_44 = arith.constant 0 : index
    %c0_45 = arith.constant 0 : index
    %94 = vector.load %arg4[%c0_43, %c0_44, %c0_45] : memref<1x16x32xbf16, #tpu.memory_space<vmem>>, vector<1x16x32xbf16>
    %95 = vector.shape_cast %94 : vector<1x16x32xbf16> to vector<16x32xbf16>
    %96 = vector.shape_cast %93 : vector<16x32xbf16> to vector<1x16x32xbf16>
    tpu.vector_store %arg4[%c0_43, %c0_44, %c0_45], %96 {strides = array<i32>} : memref<1x16x32xbf16, #tpu.memory_space<vmem>>, vector<1x16x32xbf16>,
    return
  }
  func.func @transform_0(%arg0: i32, %arg1: i32) -> (i32, i32, i32) {
    %c0_i32 = arith.constant 0 : i32
    %c0_i32_0 = arith.constant 0 : i32
    return %arg0, %arg1, %c0_i32 : i32, i32, i32
  }
  func.func @transform_1(%arg0: i32, %arg1: i32) -> (i32, i32, i32) {
    %c0_i32 = arith.constant 0 : i32
    %c0_i32_0 = arith.constant 0 : i32
    %c0_i32_1 = arith.constant 0 : i32
    return %arg0, %c0_i32, %c0_i32_0 : i32, i32, i32
  }
  func.func @transform_2(%arg0: i32, %arg1: i32) -> (i32, i32, i32) {
    %c0_i32 = arith.constant 0 : i32
    %c0_i32_0 = arith.constant 0 : i32
    return %arg0, %arg1, %c0_i32 : i32, i32, i32
  }
}

module attributes {stable_mosaic.version = 11 : i64} {
  func.func @_fused_mm_kernel(%arg0: i32, %arg1: i32, %arg2: i32, %arg3: memref<32x32xbf16, #tpu.memory_space<vmem>>, %arg4: memref<32x32xbf16, #tpu.memory_space<vmem>>, %arg5: memref<1x32xf32, #tpu.memory_space<vmem>>, %arg6: memref<32x32xbf16, #tpu.memory_space<vmem>>, %arg7: memref<32x32xbf16, #tpu.memory_space<vmem>>) attributes {dimension_semantics = [#tpu.dimension_semantics<parallel>, #tpu.dimension_semantics<arbitrary>, #tpu.dimension_semantics<arbitrary>], iteration_bounds = array<i64: 1, 1, 1>, scalar_prefetch = 0 : i64, scratch_operands = 0 : i64, tpu.core_type = #tpu.core_type<tc>, window_params = [{transform_indices = @transform_0, window_bounds = array<i64: 32, 32>}, {transform_indices = @transform_1, window_bounds = array<i64: 32, 32>}, {transform_indices = @transform_2, window_bounds = array<i64: 1, 32>}, {transform_indices = @transform_3, window_bounds = array<i64: 32, 32>}, {transform_indices = @transform_4, window_bounds = array<i64: 32, 32>}]} {
    %c0 = arith.constant 0 : index
    %c0_0 = arith.constant 0 : index
    %0 = vector.load %arg3[%c0, %c0_0] : memref<32x32xbf16, #tpu.memory_space<vmem>>, vector<32x32xbf16>
    %c0_1 = arith.constant 0 : index
    %c0_2 = arith.constant 0 : index
    %1 = vector.load %arg4[%c0_1, %c0_2] : memref<32x32xbf16, #tpu.memory_space<vmem>>, vector<32x32xbf16>
    %cst = arith.constant dense<0.000000e+00> : vector<32x32xf32>
    %2 = tpu.matmul %0, %1, %cst {dimension_numbers = #tpu.dot_dimension_numbers<[1], [0], [0], [1], [0, 0, 1, 1], [], []>} : vector<32x32xbf16>, vector<32x32xbf16>, vector<32x32xf32> -> vector<32x32xf32>
    %c0_3 = arith.constant 0 : index
    %c0_4 = arith.constant 0 : index
    %3 = vector.load %arg5[%c0_3, %c0_4] : memref<1x32xf32, #tpu.memory_space<vmem>>, vector<1x32xf32>
    %4 = vector.broadcast %3 : vector<1x32xf32> to vector<32x32xf32>
    %5 = arith.addf %2, %4 : vector<32x32xf32>
    %c0_5 = arith.constant 0 : index
    %c0_6 = arith.constant 0 : index
    %6 = vector.load %arg6[%c0_5, %c0_6] : memref<32x32xbf16, #tpu.memory_space<vmem>>, vector<32x32xbf16>
    %7 = arith.extf %6 : vector<32x32xbf16> to vector<32x32xf32>
    %8 = arith.addf %5, %7 : vector<32x32xf32>
    %9 = arith.truncf %8 : vector<32x32xf32> to vector<32x32xbf16>
    %c0_7 = arith.constant 0 : index
    %c0_8 = arith.constant 0 : index
    %10 = vector.load %arg7[%c0_7, %c0_8] : memref<32x32xbf16, #tpu.memory_space<vmem>>, vector<32x32xbf16>
    tpu.vector_store %arg7[%c0_7, %c0_8], %9 {strides = array<i32>} : memref<32x32xbf16, #tpu.memory_space<vmem>>, vector<32x32xbf16>,
    return
  }
  func.func @transform_0(%arg0: i32, %arg1: i32, %arg2: i32) -> (i32, i32) {
    %c0_i32 = arith.constant 0 : i32
    return %arg0, %arg2 : i32, i32
  }
  func.func @transform_1(%arg0: i32, %arg1: i32, %arg2: i32) -> (i32, i32) {
    %c0_i32 = arith.constant 0 : i32
    return %arg2, %arg1 : i32, i32
  }
  func.func @transform_2(%arg0: i32, %arg1: i32, %arg2: i32) -> (i32, i32) {
    %c0_i32 = arith.constant 0 : i32
    %c0_i32_0 = arith.constant 0 : i32
    return %c0_i32, %arg1 : i32, i32
  }
  func.func @transform_3(%arg0: i32, %arg1: i32, %arg2: i32) -> (i32, i32) {
    %c0_i32 = arith.constant 0 : i32
    return %arg0, %arg1 : i32, i32
  }
  func.func @transform_4(%arg0: i32, %arg1: i32, %arg2: i32) -> (i32, i32) {
    %c0_i32 = arith.constant 0 : i32
    return %arg0, %arg1 : i32, i32
  }
}

module attributes {stable_mosaic.version = 11 : i64} {
  func.func @_fused_mm_kernel(%arg0: i32, %arg1: i32, %arg2: i32, %arg3: memref<32x128xbf16, #tpu.memory_space<vmem>>, %arg4: memref<128x32xbf16, #tpu.memory_space<vmem>>, %arg5: memref<1x32xf32, #tpu.memory_space<vmem>>, %arg6: memref<32x32xbf16, #tpu.memory_space<vmem>>, %arg7: memref<32x32xbf16, #tpu.memory_space<vmem>>) attributes {dimension_semantics = [#tpu.dimension_semantics<parallel>, #tpu.dimension_semantics<arbitrary>, #tpu.dimension_semantics<arbitrary>], iteration_bounds = array<i64: 1, 1, 1>, scalar_prefetch = 0 : i64, scratch_operands = 0 : i64, tpu.core_type = #tpu.core_type<tc>, window_params = [{transform_indices = @transform_0, window_bounds = array<i64: 32, 128>}, {transform_indices = @transform_1, window_bounds = array<i64: 128, 32>}, {transform_indices = @transform_2, window_bounds = array<i64: 1, 32>}, {transform_indices = @transform_3, window_bounds = array<i64: 32, 32>}, {transform_indices = @transform_4, window_bounds = array<i64: 32, 32>}]} {
    %c0 = arith.constant 0 : index
    %c0_0 = arith.constant 0 : index
    %0 = vector.load %arg3[%c0, %c0_0] : memref<32x128xbf16, #tpu.memory_space<vmem>>, vector<32x128xbf16>
    %c0_1 = arith.constant 0 : index
    %c0_2 = arith.constant 0 : index
    %1 = vector.load %arg4[%c0_1, %c0_2] : memref<128x32xbf16, #tpu.memory_space<vmem>>, vector<128x32xbf16>
    %cst = arith.constant dense<0.000000e+00> : vector<32x32xf32>
    %2 = tpu.matmul %0, %1, %cst {dimension_numbers = #tpu.dot_dimension_numbers<[1], [0], [0], [1], [0, 0, 1, 1], [], []>} : vector<32x128xbf16>, vector<128x32xbf16>, vector<32x32xf32> -> vector<32x32xf32>
    %c0_3 = arith.constant 0 : index
    %c0_4 = arith.constant 0 : index
    %3 = vector.load %arg5[%c0_3, %c0_4] : memref<1x32xf32, #tpu.memory_space<vmem>>, vector<1x32xf32>
    %4 = vector.broadcast %3 : vector<1x32xf32> to vector<32x32xf32>
    %5 = arith.addf %2, %4 : vector<32x32xf32>
    %c0_5 = arith.constant 0 : index
    %c0_6 = arith.constant 0 : index
    %6 = vector.load %arg6[%c0_5, %c0_6] : memref<32x32xbf16, #tpu.memory_space<vmem>>, vector<32x32xbf16>
    %7 = arith.extf %6 : vector<32x32xbf16> to vector<32x32xf32>
    %8 = arith.addf %5, %7 : vector<32x32xf32>
    %9 = arith.truncf %8 : vector<32x32xf32> to vector<32x32xbf16>
    %c0_7 = arith.constant 0 : index
    %c0_8 = arith.constant 0 : index
    %10 = vector.load %arg7[%c0_7, %c0_8] : memref<32x32xbf16, #tpu.memory_space<vmem>>, vector<32x32xbf16>
    tpu.vector_store %arg7[%c0_7, %c0_8], %9 {strides = array<i32>} : memref<32x32xbf16, #tpu.memory_space<vmem>>, vector<32x32xbf16>,
    return
  }
  func.func @transform_0(%arg0: i32, %arg1: i32, %arg2: i32) -> (i32, i32) {
    %c0_i32 = arith.constant 0 : i32
    return %arg0, %arg2 : i32, i32
  }
  func.func @transform_1(%arg0: i32, %arg1: i32, %arg2: i32) -> (i32, i32) {
    %c0_i32 = arith.constant 0 : i32
    return %arg2, %arg1 : i32, i32
  }
  func.func @transform_2(%arg0: i32, %arg1: i32, %arg2: i32) -> (i32, i32) {
    %c0_i32 = arith.constant 0 : i32
    %c0_i32_0 = arith.constant 0 : i32
    return %c0_i32, %arg1 : i32, i32
  }
  func.func @transform_3(%arg0: i32, %arg1: i32, %arg2: i32) -> (i32, i32) {
    %c0_i32 = arith.constant 0 : i32
    return %arg0, %arg1 : i32, i32
  }
  func.func @transform_4(%arg0: i32, %arg1: i32, %arg2: i32) -> (i32, i32) {
    %c0_i32 = arith.constant 0 : i32
    return %arg0, %arg1 : i32, i32
  }
}

module attributes {stable_mosaic.version = 11 : i64} {
  func.func @_fused_mm_kernel(%arg0: i32, %arg1: i32, %arg2: i32, %arg3: memref<32x32xbf16, #tpu.memory_space<vmem>>, %arg4: memref<32x128xbf16, #tpu.memory_space<vmem>>, %arg5: memref<1x128xf32, #tpu.memory_space<vmem>>, %arg6: memref<1x32xf32, #tpu.memory_space<vmem>>, %arg7: memref<1x32xf32, #tpu.memory_space<vmem>>, %arg8: memref<32x128xbf16, #tpu.memory_space<vmem>>) attributes {dimension_semantics = [#tpu.dimension_semantics<parallel>, #tpu.dimension_semantics<arbitrary>, #tpu.dimension_semantics<arbitrary>], iteration_bounds = array<i64: 1, 1, 1>, scalar_prefetch = 0 : i64, scratch_operands = 0 : i64, tpu.core_type = #tpu.core_type<tc>, window_params = [{transform_indices = @transform_0, window_bounds = array<i64: 32, 32>}, {transform_indices = @transform_1, window_bounds = array<i64: 32, 128>}, {transform_indices = @transform_2, window_bounds = array<i64: 1, 128>}, {transform_indices = @transform_3, window_bounds = array<i64: 1, 32>}, {transform_indices = @transform_4, window_bounds = array<i64: 1, 32>}, {transform_indices = @transform_5, window_bounds = array<i64: 32, 128>}]} {
    %c0 = arith.constant 0 : index
    %c0_0 = arith.constant 0 : index
    %0 = vector.load %arg3[%c0, %c0_0] : memref<32x32xbf16, #tpu.memory_space<vmem>>, vector<32x32xbf16>
    %1 = arith.extf %0 : vector<32x32xbf16> to vector<32x32xf32>
    %cst = arith.constant dense<0.000000e+00> : vector<32xf32>
    %2 = vector.multi_reduction <add>, %1, %cst [1] : vector<32x32xf32> to vector<32xf32>
    %3 = vector.shape_cast %2 : vector<32xf32> to vector<32x1xf32>
    %cst_1 = arith.constant 3.200000e+01 : f32
    %4 = vector.broadcast %cst_1 : f32 to vector<32x1xf32>
    %5 = arith.divf %3, %4 : vector<32x1xf32>
    %6 = vector.broadcast %5 : vector<32x1xf32> to vector<32x32xf32>
    %7 = arith.subf %1, %6 : vector<32x32xf32>
    %8 = arith.mulf %7, %7 : vector<32x32xf32>
    %cst_2 = arith.constant dense<0.000000e+00> : vector<32xf32>
    %9 = vector.multi_reduction <add>, %8, %cst_2 [1] : vector<32x32xf32> to vector<32xf32>
    %10 = vector.shape_cast %9 : vector<32xf32> to vector<32x1xf32>
    %cst_3 = arith.constant 3.200000e+01 : f32
    %11 = vector.broadcast %cst_3 : f32 to vector<32x1xf32>
    %12 = arith.divf %10, %11 : vector<32x1xf32>
    %cst_4 = arith.constant 9.99999997E-7 : f32
    %13 = vector.broadcast %cst_4 : f32 to vector<32x1xf32>
    %14 = arith.addf %12, %13 : vector<32x1xf32>
    %15 = math.rsqrt %14 : vector<32x1xf32>
    %16 = vector.broadcast %15 : vector<32x1xf32> to vector<32x32xf32>
    %17 = arith.mulf %7, %16 : vector<32x32xf32>
    %c0_5 = arith.constant 0 : index
    %c0_6 = arith.constant 0 : index
    %18 = vector.load %arg6[%c0_5, %c0_6] : memref<1x32xf32, #tpu.memory_space<vmem>>, vector<1x32xf32>
    %19 = vector.broadcast %18 : vector<1x32xf32> to vector<32x32xf32>
    %20 = arith.mulf %17, %19 : vector<32x32xf32>
    %c0_7 = arith.constant 0 : index
    %c0_8 = arith.constant 0 : index
    %21 = vector.load %arg7[%c0_7, %c0_8] : memref<1x32xf32, #tpu.memory_space<vmem>>, vector<1x32xf32>
    %22 = vector.broadcast %21 : vector<1x32xf32> to vector<32x32xf32>
    %23 = arith.addf %20, %22 : vector<32x32xf32>
    %24 = arith.truncf %23 : vector<32x32xf32> to vector<32x32xbf16>
    %c0_9 = arith.constant 0 : index
    %c0_10 = arith.constant 0 : index
    %25 = vector.load %arg4[%c0_9, %c0_10] : memref<32x128xbf16, #tpu.memory_space<vmem>>, vector<32x128xbf16>
    %cst_11 = arith.constant dense<0.000000e+00> : vector<32x128xf32>
    %26 = tpu.matmul %24, %25, %cst_11 {dimension_numbers = #tpu.dot_dimension_numbers<[1], [0], [0], [1], [0, 0, 1, 1], [], []>} : vector<32x32xbf16>, vector<32x128xbf16>, vector<32x128xf32> -> vector<32x128xf32>
    %c0_12 = arith.constant 0 : index
    %c0_13 = arith.constant 0 : index
    %27 = vector.load %arg5[%c0_12, %c0_13] : memref<1x128xf32, #tpu.memory_space<vmem>>, vector<1x128xf32>
    %28 = vector.broadcast %27 : vector<1x128xf32> to vector<32x128xf32>
    %29 = arith.addf %26, %28 : vector<32x128xf32>
    %cst_14 = arith.constant 5.000000e-01 : f32
    %30 = vector.broadcast %cst_14 : f32 to vector<32x128xf32>
    %31 = arith.mulf %30, %29 : vector<32x128xf32>
    %cst_15 = arith.constant 4.471500e-02 : f32
    %32 = vector.broadcast %cst_15 : f32 to vector<32x128xf32>
    %33 = arith.mulf %32, %29 : vector<32x128xf32>
    %34 = arith.mulf %33, %29 : vector<32x128xf32>
    %35 = arith.mulf %34, %29 : vector<32x128xf32>
    %36 = arith.addf %29, %35 : vector<32x128xf32>
    %cst_16 = arith.constant 0.797884583 : f32
    %37 = vector.broadcast %cst_16 : f32 to vector<32x128xf32>
    %38 = arith.mulf %37, %36 : vector<32x128xf32>
    %39 = math.tanh %38 : vector<32x128xf32>
    %cst_17 = arith.constant 1.000000e+00 : f32
    %40 = vector.broadcast %cst_17 : f32 to vector<32x128xf32>
    %41 = arith.addf %40, %39 : vector<32x128xf32>
    %42 = arith.mulf %31, %41 : vector<32x128xf32>
    %43 = arith.truncf %42 : vector<32x128xf32> to vector<32x128xbf16>
    %c0_18 = arith.constant 0 : index
    %c0_19 = arith.constant 0 : index
    %44 = vector.load %arg8[%c0_18, %c0_19] : memref<32x128xbf16, #tpu.memory_space<vmem>>, vector<32x128xbf16>
    tpu.vector_store %arg8[%c0_18, %c0_19], %43 {strides = array<i32>} : memref<32x128xbf16, #tpu.memory_space<vmem>>, vector<32x128xbf16>,
    return
  }
  func.func @transform_0(%arg0: i32, %arg1: i32, %arg2: i32) -> (i32, i32) {
    %c0_i32 = arith.constant 0 : i32
    return %arg0, %arg2 : i32, i32
  }
  func.func @transform_1(%arg0: i32, %arg1: i32, %arg2: i32) -> (i32, i32) {
    %c0_i32 = arith.constant 0 : i32
    return %arg2, %arg1 : i32, i32
  }
  func.func @transform_2(%arg0: i32, %arg1: i32, %arg2: i32) -> (i32, i32) {
    %c0_i32 = arith.constant 0 : i32
    %c0_i32_0 = arith.constant 0 : i32
    return %c0_i32, %arg1 : i32, i32
  }
  func.func @transform_3(%arg0: i32, %arg1: i32, %arg2: i32) -> (i32, i32) {
    %c0_i32 = arith.constant 0 : i32
    %c0_i32_0 = arith.constant 0 : i32
    return %c0_i32, %arg2 : i32, i32
  }
  func.func @transform_4(%arg0: i32, %arg1: i32, %arg2: i32) -> (i32, i32) {
    %c0_i32 = arith.constant 0 : i32
    %c0_i32_0 = arith.constant 0 : i32
    return %c0_i32, %arg2 : i32, i32
  }
  func.func @transform_5(%arg0: i32, %arg1: i32, %arg2: i32) -> (i32, i32) {
    %c0_i32 = arith.constant 0 : i32
    return %arg0, %arg1 : i32, i32
  }
}

module attributes {stable_mosaic.version = 11 : i64} {
  func.func @_ln_kernel(%arg0: i32, %arg1: memref<32x32xbf16, #tpu.memory_space<vmem>>, %arg2: memref<1x32xf32, #tpu.memory_space<vmem>>, %arg3: memref<1x32xf32, #tpu.memory_space<vmem>>, %arg4: memref<32x32xf32, #tpu.memory_space<vmem>>) attributes {dimension_semantics = [#tpu.dimension_semantics<parallel>], iteration_bounds = array<i64: 1>, scalar_prefetch = 0 : i64, scratch_operands = 0 : i64, tpu.core_type = #tpu.core_type<tc>, window_params = [{transform_indices = @transform_0, window_bounds = array<i64: 32, 32>}, {pipeline_mode = #tpu.pipeline_mode<synchronous>, transform_indices = @transform_1, window_bounds = array<i64: 1, 32>}, {pipeline_mode = #tpu.pipeline_mode<synchronous>, transform_indices = @transform_2, window_bounds = array<i64: 1, 32>}, {transform_indices = @transform_3, window_bounds = array<i64: 32, 32>}]} {
    %c0 = arith.constant 0 : index
    %c0_0 = arith.constant 0 : index
    %0 = vector.load %arg1[%c0, %c0_0] : memref<32x32xbf16, #tpu.memory_space<vmem>>, vector<32x32xbf16>
    %1 = arith.extf %0 : vector<32x32xbf16> to vector<32x32xf32>
    %cst = arith.constant dense<0.000000e+00> : vector<32xf32>
    %2 = vector.multi_reduction <add>, %1, %cst [1] : vector<32x32xf32> to vector<32xf32>
    %3 = vector.shape_cast %2 : vector<32xf32> to vector<32x1xf32>
    %cst_1 = arith.constant 3.200000e+01 : f32
    %4 = vector.broadcast %cst_1 : f32 to vector<32x1xf32>
    %5 = arith.divf %3, %4 : vector<32x1xf32>
    %6 = vector.broadcast %5 : vector<32x1xf32> to vector<32x32xf32>
    %7 = arith.subf %1, %6 : vector<32x32xf32>
    %8 = arith.mulf %7, %7 : vector<32x32xf32>
    %cst_2 = arith.constant dense<0.000000e+00> : vector<32xf32>
    %9 = vector.multi_reduction <add>, %8, %cst_2 [1] : vector<32x32xf32> to vector<32xf32>
    %10 = vector.shape_cast %9 : vector<32xf32> to vector<32x1xf32>
    %cst_3 = arith.constant 3.200000e+01 : f32
    %11 = vector.broadcast %cst_3 : f32 to vector<32x1xf32>
    %12 = arith.divf %10, %11 : vector<32x1xf32>
    %cst_4 = arith.constant 9.99999997E-7 : f32
    %13 = vector.broadcast %cst_4 : f32 to vector<32x1xf32>
    %14 = arith.addf %12, %13 : vector<32x1xf32>
    %15 = math.rsqrt %14 : vector<32x1xf32>
    %16 = vector.broadcast %15 : vector<32x1xf32> to vector<32x32xf32>
    %17 = arith.mulf %7, %16 : vector<32x32xf32>
    %c0_5 = arith.constant 0 : index
    %c0_6 = arith.constant 0 : index
    %18 = vector.load %arg2[%c0_5, %c0_6] : memref<1x32xf32, #tpu.memory_space<vmem>>, vector<1x32xf32>
    %19 = vector.broadcast %18 : vector<1x32xf32> to vector<32x32xf32>
    %20 = arith.mulf %17, %19 : vector<32x32xf32>
    %c0_7 = arith.constant 0 : index
    %c0_8 = arith.constant 0 : index
    %21 = vector.load %arg3[%c0_7, %c0_8] : memref<1x32xf32, #tpu.memory_space<vmem>>, vector<1x32xf32>
    %22 = vector.broadcast %21 : vector<1x32xf32> to vector<32x32xf32>
    %23 = arith.addf %20, %22 : vector<32x32xf32>
    %c0_9 = arith.constant 0 : index
    %c0_10 = arith.constant 0 : index
    %24 = vector.load %arg4[%c0_9, %c0_10] : memref<32x32xf32, #tpu.memory_space<vmem>>, vector<32x32xf32>
    tpu.vector_store %arg4[%c0_9, %c0_10], %23 {strides = array<i32>} : memref<32x32xf32, #tpu.memory_space<vmem>>, vector<32x32xf32>,
    return
  }
  func.func @transform_0(%arg0: i32) -> (i32, i32) {
    %c0_i32 = arith.constant 0 : i32
    %c0_i32_0 = arith.constant 0 : i32
    return %arg0, %c0_i32 : i32, i32
  }
  func.func @transform_1(%arg0: i32) -> (i32, i32) {
    %c0_i32 = arith.constant 0 : i32
    %c0_i32_0 = arith.constant 0 : i32
    %c0_i32_1 = arith.constant 0 : i32
    return %c0_i32, %c0_i32_0 : i32, i32
  }
  func.func @transform_2(%arg0: i32) -> (i32, i32) {
    %c0_i32 = arith.constant 0 : i32
    %c0_i32_0 = arith.constant 0 : i32
    %c0_i32_1 = arith.constant 0 : i32
    return %c0_i32, %c0_i32_0 : i32, i32
  }
  func.func @transform_3(%arg0: i32) -> (i32, i32) {
    %c0_i32 = arith.constant 0 : i32
    %c0_i32_0 = arith.constant 0 : i32
    return %arg0, %c0_i32 : i32, i32
  }
}

module attributes {stable_mosaic.version = 11 : i64} {
  func.func @_fused_mm_kernel(%arg0: i32, %arg1: i32, %arg2: i32, %arg3: memref<32x32xf32, #tpu.memory_space<vmem>>, %arg4: memref<32x64xbf16, #tpu.memory_space<vmem>>, %arg5: memref<1x64xf32, #tpu.memory_space<vmem>>, %arg6: memref<32x64xbf16, #tpu.memory_space<vmem>>) attributes {dimension_semantics = [#tpu.dimension_semantics<parallel>, #tpu.dimension_semantics<arbitrary>, #tpu.dimension_semantics<arbitrary>], iteration_bounds = array<i64: 1, 1, 1>, scalar_prefetch = 0 : i64, scratch_operands = 0 : i64, tpu.core_type = #tpu.core_type<tc>, window_params = [{transform_indices = @transform_0, window_bounds = array<i64: 32, 32>}, {transform_indices = @transform_1, window_bounds = array<i64: 32, 64>}, {transform_indices = @transform_2, window_bounds = array<i64: 1, 64>}, {transform_indices = @transform_3, window_bounds = array<i64: 32, 64>}]} {
    %c0 = arith.constant 0 : index
    %c0_0 = arith.constant 0 : index
    %0 = vector.load %arg3[%c0, %c0_0] : memref<32x32xf32, #tpu.memory_space<vmem>>, vector<32x32xf32>
    %1 = arith.truncf %0 : vector<32x32xf32> to vector<32x32xbf16>
    %c0_1 = arith.constant 0 : index
    %c0_2 = arith.constant 0 : index
    %2 = vector.load %arg4[%c0_1, %c0_2] : memref<32x64xbf16, #tpu.memory_space<vmem>>, vector<32x64xbf16>
    %cst = arith.constant dense<0.000000e+00> : vector<32x64xf32>
    %3 = tpu.matmul %1, %2, %cst {dimension_numbers = #tpu.dot_dimension_numbers<[1], [0], [0], [1], [0, 0, 1, 1], [], []>} : vector<32x32xbf16>, vector<32x64xbf16>, vector<32x64xf32> -> vector<32x64xf32>
    %c0_3 = arith.constant 0 : index
    %c0_4 = arith.constant 0 : index
    %4 = vector.load %arg5[%c0_3, %c0_4] : memref<1x64xf32, #tpu.memory_space<vmem>>, vector<1x64xf32>
    %5 = vector.broadcast %4 : vector<1x64xf32> to vector<32x64xf32>
    %6 = arith.addf %3, %5 : vector<32x64xf32>
    %7 = arith.truncf %6 : vector<32x64xf32> to vector<32x64xbf16>
    %c0_5 = arith.constant 0 : index
    %c0_6 = arith.constant 0 : index
    %8 = vector.load %arg6[%c0_5, %c0_6] : memref<32x64xbf16, #tpu.memory_space<vmem>>, vector<32x64xbf16>
    tpu.vector_store %arg6[%c0_5, %c0_6], %7 {strides = array<i32>} : memref<32x64xbf16, #tpu.memory_space<vmem>>, vector<32x64xbf16>,
    return
  }
  func.func @transform_0(%arg0: i32, %arg1: i32, %arg2: i32) -> (i32, i32) {
    %c0_i32 = arith.constant 0 : i32
    return %arg0, %arg2 : i32, i32
  }
  func.func @transform_1(%arg0: i32, %arg1: i32, %arg2: i32) -> (i32, i32) {
    %c0_i32 = arith.constant 0 : i32
    return %arg2, %arg1 : i32, i32
  }
  func.func @transform_2(%arg0: i32, %arg1: i32, %arg2: i32) -> (i32, i32) {
    %c0_i32 = arith.constant 0 : i32
    %c0_i32_0 = arith.constant 0 : i32
    return %c0_i32, %arg1 : i32, i32
  }
  func.func @transform_3(%arg0: i32, %arg1: i32, %arg2: i32) -> (i32, i32) {
    %c0_i32 = arith.constant 0 : i32
    return %arg0, %arg1 : i32, i32
  }
}

module attributes {stable_mosaic.version = 11 : i64} {
  func.func @_fused_mm_kernel(%arg0: i32, %arg1: i32, %arg2: i32, %arg3: memref<1x32xbf16, #tpu.memory_space<vmem>>, %arg4: memref<32x32xbf16, #tpu.memory_space<vmem>>, %arg5: memref<1x32xf32, #tpu.memory_space<vmem>>, %arg6: memref<1x32xbf16, #tpu.memory_space<vmem>>) attributes {dimension_semantics = [#tpu.dimension_semantics<parallel>, #tpu.dimension_semantics<arbitrary>, #tpu.dimension_semantics<arbitrary>], iteration_bounds = array<i64: 1, 1, 1>, scalar_prefetch = 0 : i64, scratch_operands = 0 : i64, tpu.core_type = #tpu.core_type<tc>, window_params = [{transform_indices = @transform_0, window_bounds = array<i64: 1, 32>}, {transform_indices = @transform_1, window_bounds = array<i64: 32, 32>}, {transform_indices = @transform_2, window_bounds = array<i64: 1, 32>}, {transform_indices = @transform_3, window_bounds = array<i64: 1, 32>}]} {
    %c0 = arith.constant 0 : index
    %c0_0 = arith.constant 0 : index
    %0 = vector.load %arg3[%c0, %c0_0] : memref<1x32xbf16, #tpu.memory_space<vmem>>, vector<1x32xbf16>
    %c0_1 = arith.constant 0 : index
    %c0_2 = arith.constant 0 : index
    %1 = vector.load %arg4[%c0_1, %c0_2] : memref<32x32xbf16, #tpu.memory_space<vmem>>, vector<32x32xbf16>
    %cst = arith.constant dense<0.000000e+00> : vector<1x32xf32>
    %2 = tpu.matmul %0, %1, %cst {dimension_numbers = #tpu.dot_dimension_numbers<[1], [0], [0], [1], [0, 0, 1, 1], [], []>} : vector<1x32xbf16>, vector<32x32xbf16>, vector<1x32xf32> -> vector<1x32xf32>
    %c0_3 = arith.constant 0 : index
    %c0_4 = arith.constant 0 : index
    %3 = vector.load %arg5[%c0_3, %c0_4] : memref<1x32xf32, #tpu.memory_space<vmem>>, vector<1x32xf32>
    %4 = arith.addf %2, %3 : vector<1x32xf32>
    %5 = arith.truncf %4 : vector<1x32xf32> to vector<1x32xbf16>
    %c0_5 = arith.constant 0 : index
    %c0_6 = arith.constant 0 : index
    %6 = vector.load %arg6[%c0_5, %c0_6] : memref<1x32xbf16, #tpu.memory_space<vmem>>, vector<1x32xbf16>
    tpu.vector_store %arg6[%c0_5, %c0_6], %5 {strides = array<i32>} : memref<1x32xbf16, #tpu.memory_space<vmem>>, vector<1x32xbf16>,
    return
  }
  func.func @transform_0(%arg0: i32, %arg1: i32, %arg2: i32) -> (i32, i32) {
    %c0_i32 = arith.constant 0 : i32
    return %arg0, %arg2 : i32, i32
  }
  func.func @transform_1(%arg0: i32, %arg1: i32, %arg2: i32) -> (i32, i32) {
    %c0_i32 = arith.constant 0 : i32
    return %arg2, %arg1 : i32, i32
  }
  func.func @transform_2(%arg0: i32, %arg1: i32, %arg2: i32) -> (i32, i32) {
    %c0_i32 = arith.constant 0 : i32
    %c0_i32_0 = arith.constant 0 : i32
    return %c0_i32, %arg1 : i32, i32
  }
  func.func @transform_3(%arg0: i32, %arg1: i32, %arg2: i32) -> (i32, i32) {
    %c0_i32 = arith.constant 0 : i32
    return %arg0, %arg1 : i32, i32
  }
}

module attributes {stable_mosaic.version = 11 : i64} {
  func.func @_fused_mm_kernel(%arg0: i32, %arg1: i32, %arg2: i32, %arg3: memref<2x32xbf16, #tpu.memory_space<vmem>>, %arg4: memref<32x32xbf16, #tpu.memory_space<vmem>>, %arg5: memref<1x32xf32, #tpu.memory_space<vmem>>, %arg6: memref<2x32xbf16, #tpu.memory_space<vmem>>) attributes {dimension_semantics = [#tpu.dimension_semantics<parallel>, #tpu.dimension_semantics<arbitrary>, #tpu.dimension_semantics<arbitrary>], iteration_bounds = array<i64: 1, 1, 1>, scalar_prefetch = 0 : i64, scratch_operands = 0 : i64, tpu.core_type = #tpu.core_type<tc>, window_params = [{transform_indices = @transform_0, window_bounds = array<i64: 2, 32>}, {transform_indices = @transform_1, window_bounds = array<i64: 32, 32>}, {transform_indices = @transform_2, window_bounds = array<i64: 1, 32>}, {transform_indices = @transform_3, window_bounds = array<i64: 2, 32>}]} {
    %c0 = arith.constant 0 : index
    %c0_0 = arith.constant 0 : index
    %0 = vector.load %arg3[%c0, %c0_0] : memref<2x32xbf16, #tpu.memory_space<vmem>>, vector<2x32xbf16>
    %c0_1 = arith.constant 0 : index
    %c0_2 = arith.constant 0 : index
    %1 = vector.load %arg4[%c0_1, %c0_2] : memref<32x32xbf16, #tpu.memory_space<vmem>>, vector<32x32xbf16>
    %cst = arith.constant dense<0.000000e+00> : vector<2x32xf32>
    %2 = tpu.matmul %0, %1, %cst {dimension_numbers = #tpu.dot_dimension_numbers<[1], [0], [0], [1], [0, 0, 1, 1], [], []>} : vector<2x32xbf16>, vector<32x32xbf16>, vector<2x32xf32> -> vector<2x32xf32>
    %c0_3 = arith.constant 0 : index
    %c0_4 = arith.constant 0 : index
    %3 = vector.load %arg5[%c0_3, %c0_4] : memref<1x32xf32, #tpu.memory_space<vmem>>, vector<1x32xf32>
    %4 = vector.broadcast %3 : vector<1x32xf32> to vector<2x32xf32>
    %5 = arith.addf %2, %4 : vector<2x32xf32>
    %6 = arith.truncf %5 : vector<2x32xf32> to vector<2x32xbf16>
    %c0_5 = arith.constant 0 : index
    %c0_6 = arith.constant 0 : index
    %7 = vector.load %arg6[%c0_5, %c0_6] : memref<2x32xbf16, #tpu.memory_space<vmem>>, vector<2x32xbf16>
    tpu.vector_store %arg6[%c0_5, %c0_6], %6 {strides = array<i32>} : memref<2x32xbf16, #tpu.memory_space<vmem>>, vector<2x32xbf16>,
    return
  }
  func.func @transform_0(%arg0: i32, %arg1: i32, %arg2: i32) -> (i32, i32) {
    %c0_i32 = arith.constant 0 : i32
    return %arg0, %arg2 : i32, i32
  }
  func.func @transform_1(%arg0: i32, %arg1: i32, %arg2: i32) -> (i32, i32) {
    %c0_i32 = arith.constant 0 : i32
    return %arg2, %arg1 : i32, i32
  }
  func.func @transform_2(%arg0: i32, %arg1: i32, %arg2: i32) -> (i32, i32) {
    %c0_i32 = arith.constant 0 : i32
    %c0_i32_0 = arith.constant 0 : i32
    return %c0_i32, %arg1 : i32, i32
  }
  func.func @transform_3(%arg0: i32, %arg1: i32, %arg2: i32) -> (i32, i32) {
    %c0_i32 = arith.constant 0 : i32
    return %arg0, %arg1 : i32, i32
  }
}

module attributes {stable_mosaic.version = 11 : i64} {
  func.func @_attn_pool_kernel(%arg0: i32, %arg1: memref<1x32xbf16, #tpu.memory_space<vmem>>, %arg2: memref<1x16x64xbf16, #tpu.memory_space<vmem>>, %arg3: memref<1x1x32xbf16, #tpu.memory_space<vmem>>) attributes {dimension_semantics = [#tpu.dimension_semantics<parallel>], iteration_bounds = array<i64: 2>, scalar_prefetch = 0 : i64, scratch_operands = 0 : i64, tpu.core_type = #tpu.core_type<tc>, window_params = [{pipeline_mode = #tpu.pipeline_mode<synchronous>, transform_indices = @transform_0, window_bounds = array<i64: 1, 32>}, {transform_indices = @transform_1, window_bounds = array<i64: 1, 16, 64>}, {transform_indices = @transform_2, window_bounds = array<i64: 1, 1, 32>}]} {
    %c0 = arith.constant 0 : index
    %c0_0 = arith.constant 0 : index
    %0 = vector.load %arg1[%c0, %c0_0] : memref<1x32xbf16, #tpu.memory_space<vmem>>, vector<1x8xbf16>
    %c0_1 = arith.constant 0 : index
    %c0_2 = arith.constant 0 : index
    %c0_3 = arith.constant 0 : index
    %1 = vector.load %arg2[%c0_1, %c0_2, %c0_3] : memref<1x16x64xbf16, #tpu.memory_space<vmem>>, vector<1x16x8xbf16>
    %2 = vector.shape_cast %1 : vector<1x16x8xbf16> to vector<16x8xbf16>
    %c0_4 = arith.constant 0 : index
    %c0_5 = arith.constant 0 : index
    %c32 = arith.constant 32 : index
    %3 = vector.load %arg2[%c0_4, %c0_5, %c32] : memref<1x16x64xbf16, #tpu.memory_space<vmem>>, vector<1x16x8xbf16>
    %4 = vector.shape_cast %3 : vector<1x16x8xbf16> to vector<16x8xbf16>
    %5 = arith.extf %0 : vector<1x8xbf16> to vector<1x8xf32>
    %cst = arith.constant 0.353553385 : f32
    %6 = vector.broadcast %cst : f32 to vector<1x8xf32>
    %7 = arith.mulf %5, %6 : vector<1x8xf32>
    %8 = arith.truncf %7 : vector<1x8xf32> to vector<1x8xbf16>
    %cst_6 = arith.constant dense<0.000000e+00> : vector<1x16xf32>
    %9 = tpu.matmul %8, %2, %cst_6 {dimension_numbers = #tpu.dot_dimension_numbers<[1], [1], [0], [0], [0, 0, 1, 0], [], []>} : vector<1x8xbf16>, vector<16x8xbf16>, vector<1x16xf32> -> vector<1x16xf32>
    %cst_7 = arith.constant dense<0xFF800000> : vector<1xf32>
    %10 = vector.multi_reduction <maximumf>, %9, %cst_7 [1] : vector<1x16xf32> to vector<1xf32>
    %11 = vector.shape_cast %10 : vector<1xf32> to vector<1x1xf32>
    %12 = vector.broadcast %11 : vector<1x1xf32> to vector<1x16xf32>
    %13 = arith.subf %9, %12 : vector<1x16xf32>
    %14 = math.exp %13 : vector<1x16xf32>
    %cst_8 = arith.constant dense<0.000000e+00> : vector<1xf32>
    %15 = vector.multi_reduction <add>, %14, %cst_8 [1] : vector<1x16xf32> to vector<1xf32>
    %16 = vector.shape_cast %15 : vector<1xf32> to vector<1x1xf32>
    %17 = tpu.reciprocal %16 : vector<1x1xf32> -> vector<1x1xf32>
    %18 = vector.broadcast %17 : vector<1x1xf32> to vector<1x16xf32>
    %19 = arith.mulf %14, %18 : vector<1x16xf32>
    %20 = arith.truncf %19 : vector<1x16xf32> to vector<1x16xbf16>
    %cst_9 = arith.constant dense<0.000000e+00> : vector<1x8xf32>
    %21 = tpu.matmul %20, %4, %cst_9 {dimension_numbers = #tpu.dot_dimension_numbers<[1], [0], [0], [1], [0, 0, 1, 1], [], []>} : vector<1x16xbf16>, vector<16x8xbf16>, vector<1x8xf32> -> vector<1x8xf32>
    %c0_10 = arith.constant 0 : index
    %c8 = arith.constant 8 : index
    %22 = vector.load %arg1[%c0_10, %c8] : memref<1x32xbf16, #tpu.memory_space<vmem>>, vector<1x8xbf16>
    %c0_11 = arith.constant 0 : index
    %c0_12 = arith.constant 0 : index
    %c8_13 = arith.constant 8 : index
    %23 = vector.load %arg2[%c0_11, %c0_12, %c8_13] : memref<1x16x64xbf16, #tpu.memory_space<vmem>>, vector<1x16x8xbf16>
    %24 = vector.shape_cast %23 : vector<1x16x8xbf16> to vector<16x8xbf16>
    %c0_14 = arith.constant 0 : index
    %c0_15 = arith.constant 0 : index
    %c40 = arith.constant 40 : index
    %25 = vector.load %arg2[%c0_14, %c0_15, %c40] : memref<1x16x64xbf16, #tpu.memory_space<vmem>>, vector<1x16x8xbf16>
    %26 = vector.shape_cast %25 : vector<1x16x8xbf16> to vector<16x8xbf16>
    %27 = arith.extf %22 : vector<1x8xbf16> to vector<1x8xf32>
    %cst_16 = arith.constant 0.353553385 : f32
    %28 = vector.broadcast %cst_16 : f32 to vector<1x8xf32>
    %29 = arith.mulf %27, %28 : vector<1x8xf32>
    %30 = arith.truncf %29 : vector<1x8xf32> to vector<1x8xbf16>
    %cst_17 = arith.constant dense<0.000000e+00> : vector<1x16xf32>
    %31 = tpu.matmul %30, %24, %cst_17 {dimension_numbers = #tpu.dot_dimension_numbers<[1], [1], [0], [0], [0, 0, 1, 0], [], []>} : vector<1x8xbf16>, vector<16x8xbf16>, vector<1x16xf32> -> vector<1x16xf32>
    %cst_18 = arith.constant dense<0xFF800000> : vector<1xf32>
    %32 = vector.multi_reduction <maximumf>, %31, %cst_18 [1] : vector<1x16xf32> to vector<1xf32>
    %33 = vector.shape_cast %32 : vector<1xf32> to vector<1x1xf32>
    %34 = vector.broadcast %33 : vector<1x1xf32> to vector<1x16xf32>
    %35 = arith.subf %31, %34 : vector<1x16xf32>
    %36 = math.exp %35 : vector<1x16xf32>
    %cst_19 = arith.constant dense<0.000000e+00> : vector<1xf32>
    %37 = vector.multi_reduction <add>, %36, %cst_19 [1] : vector<1x16xf32> to vector<1xf32>
    %38 = vector.shape_cast %37 : vector<1xf32> to vector<1x1xf32>
    %39 = tpu.reciprocal %38 : vector<1x1xf32> -> vector<1x1xf32>
    %40 = vector.broadcast %39 : vector<1x1xf32> to vector<1x16xf32>
    %41 = arith.mulf %36, %40 : vector<1x16xf32>
    %42 = arith.truncf %41 : vector<1x16xf32> to vector<1x16xbf16>
    %cst_20 = arith.constant dense<0.000000e+00> : vector<1x8xf32>
    %43 = tpu.matmul %42, %26, %cst_20 {dimension_numbers = #tpu.dot_dimension_numbers<[1], [0], [0], [1], [0, 0, 1, 1], [], []>} : vector<1x16xbf16>, vector<16x8xbf16>, vector<1x8xf32> -> vector<1x8xf32>
    %c0_21 = arith.constant 0 : index
    %c16 = arith.constant 16 : index
    %44 = vector.load %arg1[%c0_21, %c16] : memref<1x32xbf16, #tpu.memory_space<vmem>>, vector<1x8xbf16>
    %c0_22 = arith.constant 0 : index
    %c0_23 = arith.constant 0 : index
    %c16_24 = arith.constant 16 : index
    %45 = vector.load %arg2[%c0_22, %c0_23, %c16_24] : memref<1x16x64xbf16, #tpu.memory_space<vmem>>, vector<1x16x8xbf16>
    %46 = vector.shape_cast %45 : vector<1x16x8xbf16> to vector<16x8xbf16>
    %c0_25 = arith.constant 0 : index
    %c0_26 = arith.constant 0 : index
    %c48 = arith.constant 48 : index
    %47 = vector.load %arg2[%c0_25, %c0_26, %c48] : memref<1x16x64xbf16, #tpu.memory_space<vmem>>, vector<1x16x8xbf16>
    %48 = vector.shape_cast %47 : vector<1x16x8xbf16> to vector<16x8xbf16>
    %49 = arith.extf %44 : vector<1x8xbf16> to vector<1x8xf32>
    %cst_27 = arith.constant 0.353553385 : f32
    %50 = vector.broadcast %cst_27 : f32 to vector<1x8xf32>
    %51 = arith.mulf %49, %50 : vector<1x8xf32>
    %52 = arith.truncf %51 : vector<1x8xf32> to vector<1x8xbf16>
    %cst_28 = arith.constant dense<0.000000e+00> : vector<1x16xf32>
    %53 = tpu.matmul %52, %46, %cst_28 {dimension_numbers = #tpu.dot_dimension_numbers<[1], [1], [0], [0], [0, 0, 1, 0], [], []>} : vector<1x8xbf16>, vector<16x8xbf16>, vector<1x16xf32> -> vector<1x16xf32>
    %cst_29 = arith.constant dense<0xFF800000> : vector<1xf32>
    %54 = vector.multi_reduction <maximumf>, %53, %cst_29 [1] : vector<1x16xf32> to vector<1xf32>
    %55 = vector.shape_cast %54 : vector<1xf32> to vector<1x1xf32>
    %56 = vector.broadcast %55 : vector<1x1xf32> to vector<1x16xf32>
    %57 = arith.subf %53, %56 : vector<1x16xf32>
    %58 = math.exp %57 : vector<1x16xf32>
    %cst_30 = arith.constant dense<0.000000e+00> : vector<1xf32>
    %59 = vector.multi_reduction <add>, %58, %cst_30 [1] : vector<1x16xf32> to vector<1xf32>
    %60 = vector.shape_cast %59 : vector<1xf32> to vector<1x1xf32>
    %61 = tpu.reciprocal %60 : vector<1x1xf32> -> vector<1x1xf32>
    %62 = vector.broadcast %61 : vector<1x1xf32> to vector<1x16xf32>
    %63 = arith.mulf %58, %62 : vector<1x16xf32>
    %64 = arith.truncf %63 : vector<1x16xf32> to vector<1x16xbf16>
    %cst_31 = arith.constant dense<0.000000e+00> : vector<1x8xf32>
    %65 = tpu.matmul %64, %48, %cst_31 {dimension_numbers = #tpu.dot_dimension_numbers<[1], [0], [0], [1], [0, 0, 1, 1], [], []>} : vector<1x16xbf16>, vector<16x8xbf16>, vector<1x8xf32> -> vector<1x8xf32>
    %c0_32 = arith.constant 0 : index
    %c24 = arith.constant 24 : index
    %66 = vector.load %arg1[%c0_32, %c24] : memref<1x32xbf16, #tpu.memory_space<vmem>>, vector<1x8xbf16>
    %c0_33 = arith.constant 0 : index
    %c0_34 = arith.constant 0 : index
    %c24_35 = arith.constant 24 : index
    %67 = vector.load %arg2[%c0_33, %c0_34, %c24_35] : memref<1x16x64xbf16, #tpu.memory_space<vmem>>, vector<1x16x8xbf16>
    %68 = vector.shape_cast %67 : vector<1x16x8xbf16> to vector<16x8xbf16>
    %c0_36 = arith.constant 0 : index
    %c0_37 = arith.constant 0 : index
    %c56 = arith.constant 56 : index
    %69 = vector.load %arg2[%c0_36, %c0_37, %c56] : memref<1x16x64xbf16, #tpu.memory_space<vmem>>, vector<1x16x8xbf16>
    %70 = vector.shape_cast %69 : vector<1x16x8xbf16> to vector<16x8xbf16>
    %71 = arith.extf %66 : vector<1x8xbf16> to vector<1x8xf32>
    %cst_38 = arith.constant 0.353553385 : f32
    %72 = vector.broadcast %cst_38 : f32 to vector<1x8xf32>
    %73 = arith.mulf %71, %72 : vector<1x8xf32>
    %74 = arith.truncf %73 : vector<1x8xf32> to vector<1x8xbf16>
    %cst_39 = arith.constant dense<0.000000e+00> : vector<1x16xf32>
    %75 = tpu.matmul %74, %68, %cst_39 {dimension_numbers = #tpu.dot_dimension_numbers<[1], [1], [0], [0], [0, 0, 1, 0], [], []>} : vector<1x8xbf16>, vector<16x8xbf16>, vector<1x16xf32> -> vector<1x16xf32>
    %cst_40 = arith.constant dense<0xFF800000> : vector<1xf32>
    %76 = vector.multi_reduction <maximumf>, %75, %cst_40 [1] : vector<1x16xf32> to vector<1xf32>
    %77 = vector.shape_cast %76 : vector<1xf32> to vector<1x1xf32>
    %78 = vector.broadcast %77 : vector<1x1xf32> to vector<1x16xf32>
    %79 = arith.subf %75, %78 : vector<1x16xf32>
    %80 = math.exp %79 : vector<1x16xf32>
    %cst_41 = arith.constant dense<0.000000e+00> : vector<1xf32>
    %81 = vector.multi_reduction <add>, %80, %cst_41 [1] : vector<1x16xf32> to vector<1xf32>
    %82 = vector.shape_cast %81 : vector<1xf32> to vector<1x1xf32>
    %83 = tpu.reciprocal %82 : vector<1x1xf32> -> vector<1x1xf32>
    %84 = vector.broadcast %83 : vector<1x1xf32> to vector<1x16xf32>
    %85 = arith.mulf %80, %84 : vector<1x16xf32>
    %86 = arith.truncf %85 : vector<1x16xf32> to vector<1x16xbf16>
    %cst_42 = arith.constant dense<0.000000e+00> : vector<1x8xf32>
    %87 = tpu.matmul %86, %70, %cst_42 {dimension_numbers = #tpu.dot_dimension_numbers<[1], [0], [0], [1], [0, 0, 1, 1], [], []>} : vector<1x16xbf16>, vector<16x8xbf16>, vector<1x8xf32> -> vector<1x8xf32>
    %88 = tpu.concatenate %21, %43, %65, %87 in 1 : vector<1x8xf32>, vector<1x8xf32>, vector<1x8xf32>, vector<1x8xf32> -> vector<1x32xf32>
    %89 = arith.truncf %88 : vector<1x32xf32> to vector<1x32xbf16>
    %c0_43 = arith.constant 0 : index
    %c0_44 = arith.constant 0 : index
    %c0_45 = arith.constant 0 : index
    %90 = vector.load %arg3[%c0_43, %c0_44, %c0_45] : memref<1x1x32xbf16, #tpu.memory_space<vmem>>, vector<1x1x32xbf16>
    %91 = vector.shape_cast %90 : vector<1x1x32xbf16> to vector<1x32xbf16>
    %92 = vector.shape_cast %89 : vector<1x32xbf16> to vector<1x1x32xbf16>
    tpu.vector_store %arg3[%c0_43, %c0_44, %c0_45], %92 {strides = array<i32>} : memref<1x1x32xbf16, #tpu.memory_space<vmem>>, vector<1x1x32xbf16>,
    return
  }
  func.func @transform_0(%arg0: i32) -> (i32, i32) {
    %c0_i32 = arith.constant 0 : i32
    %c0_i32_0 = arith.constant 0 : i32
    %c0_i32_1 = arith.constant 0 : i32
    return %c0_i32, %c0_i32_0 : i32, i32
  }
  func.func @transform_1(%arg0: i32) -> (i32, i32, i32) {
    %c0_i32 = arith.constant 0 : i32
    %c0_i32_0 = arith.constant 0 : i32
    %c0_i32_1 = arith.constant 0 : i32
    return %arg0, %c0_i32, %c0_i32_0 : i32, i32, i32
  }
  func.func @transform_2(%arg0: i32) -> (i32, i32, i32) {
    %c0_i32 = arith.constant 0 : i32
    %c0_i32_0 = arith.constant 0 : i32
    %c0_i32_1 = arith.constant 0 : i32
    return %arg0, %c0_i32, %c0_i32_0 : i32, i32, i32
  }
}

module attributes {stable_mosaic.version = 11 : i64} {
  func.func @_fused_mm_kernel(%arg0: i32, %arg1: i32, %arg2: i32, %arg3: memref<2x32xbf16, #tpu.memory_space<vmem>>, %arg4: memref<32x128xbf16, #tpu.memory_space<vmem>>, %arg5: memref<1x128xf32, #tpu.memory_space<vmem>>, %arg6: memref<1x32xf32, #tpu.memory_space<vmem>>, %arg7: memref<1x32xf32, #tpu.memory_space<vmem>>, %arg8: memref<2x128xbf16, #tpu.memory_space<vmem>>) attributes {dimension_semantics = [#tpu.dimension_semantics<parallel>, #tpu.dimension_semantics<arbitrary>, #tpu.dimension_semantics<arbitrary>], iteration_bounds = array<i64: 1, 1, 1>, scalar_prefetch = 0 : i64, scratch_operands = 0 : i64, tpu.core_type = #tpu.core_type<tc>, window_params = [{transform_indices = @transform_0, window_bounds = array<i64: 2, 32>}, {transform_indices = @transform_1, window_bounds = array<i64: 32, 128>}, {transform_indices = @transform_2, window_bounds = array<i64: 1, 128>}, {transform_indices = @transform_3, window_bounds = array<i64: 1, 32>}, {transform_indices = @transform_4, window_bounds = array<i64: 1, 32>}, {transform_indices = @transform_5, window_bounds = array<i64: 2, 128>}]} {
    %c0 = arith.constant 0 : index
    %c0_0 = arith.constant 0 : index
    %0 = vector.load %arg3[%c0, %c0_0] : memref<2x32xbf16, #tpu.memory_space<vmem>>, vector<2x32xbf16>
    %1 = arith.extf %0 : vector<2x32xbf16> to vector<2x32xf32>
    %cst = arith.constant dense<0.000000e+00> : vector<2xf32>
    %2 = vector.multi_reduction <add>, %1, %cst [1] : vector<2x32xf32> to vector<2xf32>
    %3 = vector.shape_cast %2 : vector<2xf32> to vector<2x1xf32>
    %cst_1 = arith.constant 3.200000e+01 : f32
    %4 = vector.broadcast %cst_1 : f32 to vector<2x1xf32>
    %5 = arith.divf %3, %4 : vector<2x1xf32>
    %6 = vector.broadcast %5 : vector<2x1xf32> to vector<2x32xf32>
    %7 = arith.subf %1, %6 : vector<2x32xf32>
    %8 = arith.mulf %7, %7 : vector<2x32xf32>
    %cst_2 = arith.constant dense<0.000000e+00> : vector<2xf32>
    %9 = vector.multi_reduction <add>, %8, %cst_2 [1] : vector<2x32xf32> to vector<2xf32>
    %10 = vector.shape_cast %9 : vector<2xf32> to vector<2x1xf32>
    %cst_3 = arith.constant 3.200000e+01 : f32
    %11 = vector.broadcast %cst_3 : f32 to vector<2x1xf32>
    %12 = arith.divf %10, %11 : vector<2x1xf32>
    %cst_4 = arith.constant 9.99999997E-7 : f32
    %13 = vector.broadcast %cst_4 : f32 to vector<2x1xf32>
    %14 = arith.addf %12, %13 : vector<2x1xf32>
    %15 = math.rsqrt %14 : vector<2x1xf32>
    %16 = vector.broadcast %15 : vector<2x1xf32> to vector<2x32xf32>
    %17 = arith.mulf %7, %16 : vector<2x32xf32>
    %c0_5 = arith.constant 0 : index
    %c0_6 = arith.constant 0 : index
    %18 = vector.load %arg6[%c0_5, %c0_6] : memref<1x32xf32, #tpu.memory_space<vmem>>, vector<1x32xf32>
    %19 = vector.broadcast %18 : vector<1x32xf32> to vector<2x32xf32>
    %20 = arith.mulf %17, %19 : vector<2x32xf32>
    %c0_7 = arith.constant 0 : index
    %c0_8 = arith.constant 0 : index
    %21 = vector.load %arg7[%c0_7, %c0_8] : memref<1x32xf32, #tpu.memory_space<vmem>>, vector<1x32xf32>
    %22 = vector.broadcast %21 : vector<1x32xf32> to vector<2x32xf32>
    %23 = arith.addf %20, %22 : vector<2x32xf32>
    %24 = arith.truncf %23 : vector<2x32xf32> to vector<2x32xbf16>
    %c0_9 = arith.constant 0 : index
    %c0_10 = arith.constant 0 : index
    %25 = vector.load %arg4[%c0_9, %c0_10] : memref<32x128xbf16, #tpu.memory_space<vmem>>, vector<32x128xbf16>
    %cst_11 = arith.constant dense<0.000000e+00> : vector<2x128xf32>
    %26 = tpu.matmul %24, %25, %cst_11 {dimension_numbers = #tpu.dot_dimension_numbers<[1], [0], [0], [1], [0, 0, 1, 1], [], []>} : vector<2x32xbf16>, vector<32x128xbf16>, vector<2x128xf32> -> vector<2x128xf32>
    %c0_12 = arith.constant 0 : index
    %c0_13 = arith.constant 0 : index
    %27 = vector.load %arg5[%c0_12, %c0_13] : memref<1x128xf32, #tpu.memory_space<vmem>>, vector<1x128xf32>
    %28 = vector.broadcast %27 : vector<1x128xf32> to vector<2x128xf32>
    %29 = arith.addf %26, %28 : vector<2x128xf32>
    %cst_14 = arith.constant 5.000000e-01 : f32
    %30 = vector.broadcast %cst_14 : f32 to vector<2x128xf32>
    %31 = arith.mulf %30, %29 : vector<2x128xf32>
    %cst_15 = arith.constant 4.471500e-02 : f32
    %32 = vector.broadcast %cst_15 : f32 to vector<2x128xf32>
    %33 = arith.mulf %32, %29 : vector<2x128xf32>
    %34 = arith.mulf %33, %29 : vector<2x128xf32>
    %35 = arith.mulf %34, %29 : vector<2x128xf32>
    %36 = arith.addf %29, %35 : vector<2x128xf32>
    %cst_16 = arith.constant 0.797884583 : f32
    %37 = vector.broadcast %cst_16 : f32 to vector<2x128xf32>
    %38 = arith.mulf %37, %36 : vector<2x128xf32>
    %39 = math.tanh %38 : vector<2x128xf32>
    %cst_17 = arith.constant 1.000000e+00 : f32
    %40 = vector.broadcast %cst_17 : f32 to vector<2x128xf32>
    %41 = arith.addf %40, %39 : vector<2x128xf32>
    %42 = arith.mulf %31, %41 : vector<2x128xf32>
    %43 = arith.truncf %42 : vector<2x128xf32> to vector<2x128xbf16>
    %c0_18 = arith.constant 0 : index
    %c0_19 = arith.constant 0 : index
    %44 = vector.load %arg8[%c0_18, %c0_19] : memref<2x128xbf16, #tpu.memory_space<vmem>>, vector<2x128xbf16>
    tpu.vector_store %arg8[%c0_18, %c0_19], %43 {strides = array<i32>} : memref<2x128xbf16, #tpu.memory_space<vmem>>, vector<2x128xbf16>,
    return
  }
  func.func @transform_0(%arg0: i32, %arg1: i32, %arg2: i32) -> (i32, i32) {
    %c0_i32 = arith.constant 0 : i32
    return %arg0, %arg2 : i32, i32
  }
  func.func @transform_1(%arg0: i32, %arg1: i32, %arg2: i32) -> (i32, i32) {
    %c0_i32 = arith.constant 0 : i32
    return %arg2, %arg1 : i32, i32
  }
  func.func @transform_2(%arg0: i32, %arg1: i32, %arg2: i32) -> (i32, i32) {
    %c0_i32 = arith.constant 0 : i32
    %c0_i32_0 = arith.constant 0 : i32
    return %c0_i32, %arg1 : i32, i32
  }
  func.func @transform_3(%arg0: i32, %arg1: i32, %arg2: i32) -> (i32, i32) {
    %c0_i32 = arith.constant 0 : i32
    %c0_i32_0 = arith.constant 0 : i32
    return %c0_i32, %arg2 : i32, i32
  }
  func.func @transform_4(%arg0: i32, %arg1: i32, %arg2: i32) -> (i32, i32) {
    %c0_i32 = arith.constant 0 : i32
    %c0_i32_0 = arith.constant 0 : i32
    return %c0_i32, %arg2 : i32, i32
  }
  func.func @transform_5(%arg0: i32, %arg1: i32, %arg2: i32) -> (i32, i32) {
    %c0_i32 = arith.constant 0 : i32
    return %arg0, %arg1 : i32, i32
  }
}

module attributes {stable_mosaic.version = 11 : i64} {
  func.func @_fused_mm_kernel(%arg0: i32, %arg1: i32, %arg2: i32, %arg3: memref<2x128xbf16, #tpu.memory_space<vmem>>, %arg4: memref<128x32xbf16, #tpu.memory_space<vmem>>, %arg5: memref<1x32xf32, #tpu.memory_space<vmem>>, %arg6: memref<2x32xbf16, #tpu.memory_space<vmem>>, %arg7: memref<2x32xf32, #tpu.memory_space<vmem>>) attributes {dimension_semantics = [#tpu.dimension_semantics<parallel>, #tpu.dimension_semantics<arbitrary>, #tpu.dimension_semantics<arbitrary>], iteration_bounds = array<i64: 1, 1, 1>, scalar_prefetch = 0 : i64, scratch_operands = 0 : i64, tpu.core_type = #tpu.core_type<tc>, window_params = [{transform_indices = @transform_0, window_bounds = array<i64: 2, 128>}, {transform_indices = @transform_1, window_bounds = array<i64: 128, 32>}, {transform_indices = @transform_2, window_bounds = array<i64: 1, 32>}, {transform_indices = @transform_3, window_bounds = array<i64: 2, 32>}, {transform_indices = @transform_4, window_bounds = array<i64: 2, 32>}]} {
    %c0 = arith.constant 0 : index
    %c0_0 = arith.constant 0 : index
    %0 = vector.load %arg3[%c0, %c0_0] : memref<2x128xbf16, #tpu.memory_space<vmem>>, vector<2x128xbf16>
    %c0_1 = arith.constant 0 : index
    %c0_2 = arith.constant 0 : index
    %1 = vector.load %arg4[%c0_1, %c0_2] : memref<128x32xbf16, #tpu.memory_space<vmem>>, vector<128x32xbf16>
    %cst = arith.constant dense<0.000000e+00> : vector<2x32xf32>
    %2 = tpu.matmul %0, %1, %cst {dimension_numbers = #tpu.dot_dimension_numbers<[1], [0], [0], [1], [0, 0, 1, 1], [], []>} : vector<2x128xbf16>, vector<128x32xbf16>, vector<2x32xf32> -> vector<2x32xf32>
    %c0_3 = arith.constant 0 : index
    %c0_4 = arith.constant 0 : index
    %3 = vector.load %arg5[%c0_3, %c0_4] : memref<1x32xf32, #tpu.memory_space<vmem>>, vector<1x32xf32>
    %4 = vector.broadcast %3 : vector<1x32xf32> to vector<2x32xf32>
    %5 = arith.addf %2, %4 : vector<2x32xf32>
    %c0_5 = arith.constant 0 : index
    %c0_6 = arith.constant 0 : index
    %6 = vector.load %arg6[%c0_5, %c0_6] : memref<2x32xbf16, #tpu.memory_space<vmem>>, vector<2x32xbf16>
    %7 = arith.extf %6 : vector<2x32xbf16> to vector<2x32xf32>
    %8 = arith.addf %5, %7 : vector<2x32xf32>
    %c0_7 = arith.constant 0 : index
    %c0_8 = arith.constant 0 : index
    %9 = vector.load %arg7[%c0_7, %c0_8] : memref<2x32xf32, #tpu.memory_space<vmem>>, vector<2x32xf32>
    tpu.vector_store %arg7[%c0_7, %c0_8], %8 {strides = array<i32>} : memref<2x32xf32, #tpu.memory_space<vmem>>, vector<2x32xf32>,
    return
  }
  func.func @transform_0(%arg0: i32, %arg1: i32, %arg2: i32) -> (i32, i32) {
    %c0_i32 = arith.constant 0 : i32
    return %arg0, %arg2 : i32, i32
  }
  func.func @transform_1(%arg0: i32, %arg1: i32, %arg2: i32) -> (i32, i32) {
    %c0_i32 = arith.constant 0 : i32
    return %arg2, %arg1 : i32, i32
  }
  func.func @transform_2(%arg0: i32, %arg1: i32, %arg2: i32) -> (i32, i32) {
    %c0_i32 = arith.constant 0 : i32
    %c0_i32_0 = arith.constant 0 : i32
    return %c0_i32, %arg1 : i32, i32
  }
  func.func @transform_3(%arg0: i32, %arg1: i32, %arg2: i32) -> (i32, i32) {
    %c0_i32 = arith.constant 0 : i32
    return %arg0, %arg1 : i32, i32
  }
  func.func @transform_4(%arg0: i32, %arg1: i32, %arg2: i32) -> (i32, i32) {
    %c0_i32 = arith.constant 0 : i32
    return %arg0, %arg1 : i32, i32
  }
}

</mosaic_0001>

<llo_original>
// kernel: siglip_forward.21
$region0: #{siglip_forward.21}
  #allocation0 [shape = 'u32[]', space=smem, size = 0x4, offset = 0x4, fixed_abs, tag = 'smem constant byte address 0x4 - core index']
  #allocation1 [shape = 'u32[144,128]{1,0:T(1,128)}', space=vmem, size = 0x12000, scoped, tag = 'internal scratch']
  %s0 = inlined_call_operand.vmem [shape: bf16[32,32], index: 0, kind: input, shape index: {}]
  %s1 = inlined_call_operand.vmem [shape: bf16[32,32], index: 1, kind: input, shape index: {}]
  %s2 = inlined_call_operand.vmem [shape: f32[1,32], index: 2, kind: input, shape index: {}]
  %s3 = inlined_call_operand.vmem [shape: bf16[32,32], index: 3, kind: input, shape index: {}]
  %s4 = inlined_call_operand.vmem [shape: bf16[32,32], index: 4, kind: output, shape index: {}]
  %s5 = sld [smem:[#allocation0]]
  $region26: #{siglip_forward.21} parent=0
    _
  %s7 = ssub.s32 1, %s5
  %s8 = scalar_select 0, %s7, %s5
  // Predicated region
  $region2: #{siglip_forward.21} parent=0 // pred_check
    _
  $region3: #{siglip_forward.21} parent=0 // pred_check_branch
    %10 = sbr.rel (0) target = $region5
  $region4: #{siglip_forward.21} parent=0 // pred_region
    _
  $region5: #{siglip_forward.21} parent=0 // pred_fallthru
    _
  // Predicated region
  $region6: #{siglip_forward.21} parent=0 // pred_check
    _
  $region7: #{siglip_forward.21} parent=0 // pred_check_branch
    %12 = sbr.rel (0) target = $region9
  $region8: #{siglip_forward.21} parent=0 // pred_region
    _
  $region9: #{siglip_forward.21} parent=0 // pred_fallthru
    _
  // Predicated region
  $region10: #{siglip_forward.21} parent=0 // pred_check
    _
  $region11: #{siglip_forward.21} parent=0 // pred_check_branch
    %14 = sbr.rel (0) target = $region13
  $region12: #{siglip_forward.21} parent=0 // pred_region
    _
  $region13: #{siglip_forward.21} parent=0 // pred_fallthru
    _
  // Predicated region
  $region14: #{siglip_forward.21} parent=0 // pred_check
    _
  $region15: #{siglip_forward.21} parent=0 // pred_check_branch
    %16 = sbr.rel (0) target = $region17
  $region16: #{siglip_forward.21} parent=0 // pred_region
    _
  $region17: #{siglip_forward.21} parent=0 // pred_fallthru
    _
  %v18 = vld [vmem:[%s0] sm:$0xf]
  %v19 = vld [vmem:[%s0 + $0x4] sm:$0xf]
  %v20 = vld [vmem:[%s0 + $0x8] sm:$0xf]
  %v21 = vld [vmem:[%s0 + $0xc] sm:$0xf]
  %v22 = vld [vmem:[%s1] sm:$0xf]
  %v23 = vld [vmem:[%s1 + $0x4] sm:$0xf]
  %v24 = vld [vmem:[%s1 + $0x8] sm:$0xf]
  %v25 = vld [vmem:[%s1 + $0xc] sm:$0xf]
  %v26 = vld [vmem:[%s2] sm:$0x1]
  %v28 = vlaneseq
  %v29 = vshrl.u32 %v28, 7
  %v30 = vsub.s32 0, %v29
  %v31 = vrot.slane %v26, %v30
  %v37 = vunpack.c.l.b16 %v18
  %v38 = vunpack.c.l.b16 %v19
  %v39 = vunpack.c.l.b16 %v20
  %v40 = vunpack.c.l.b16 %v21
  %v41 = vpack.c.b16 %v38, %v37
  %v42 = vpack.c.b16 %v40, %v39
  %v47 = vunpack.c.l.b16 %v22
  %v48 = vunpack.c.l.b16 %v23
  %v49 = vunpack.c.l.b16 %v24
  %v50 = vunpack.c.l.b16 %v25
  %v51 = vpack.c.b16 %v48, %v47
  %v52 = vpack.c.b16 %v50, %v49
  %vm55 = vcmask 261120
  %v57 = vsel %vm55, %v41, 0
  %v60 = vsel %vm55, %v42, 0
  %62 = vmatprep.subr.bf16.mxu0 0
  %63 = vmatpush1.bf16.msra.mxu0 0
  %64 = vmatprep.subr.bf16.mxu0 0
  %65 = vmatpush1.bf16.msra.mxu0 0
  %66 = vmatprep.subr.bf16.mxu0 0
  %67 = vmatpush1.bf16.msra.mxu0 0
  %68 = vmatprep.subr.bf16.mxu0 0
  %69 = vmatpush1.bf16.msra.mxu0 0
  %70 = vmatprep.subr.bf16.mxu0 0
  %71 = vmatpush1.bf16.msra.mxu0 0
  %72 = vmatprep.subr.bf16.mxu0 0
  %73 = vmatpush1.bf16.msra.mxu0 0
  %74 = vmatprep.subr.bf16.mxu0 0
  %75 = vmatpush1.bf16.msra.mxu0 %v52
  %76 = vmatprep.subr.bf16.mxu0 0
  %77 = vmatpush1.bf16.msra.mxu0 %v51
  %78 = vmatprep.subr.bf16.mxu0 0
  %79 = vmatpush2.bf16.msra.mxu0 0
  %80 = vmatprep.subr.bf16.mxu0 0
  %81 = vmatpush2.bf16.msra.mxu0 0
  %82 = vmatprep.subr.bf16.mxu0 0
  %83 = vmatpush2.bf16.msra.mxu0 0
  %84 = vmatprep.subr.bf16.mxu0 0
  %85 = vmatpush2.bf16.msra.mxu0 0
  %86 = vmatprep.subr.bf16.mxu0 0
  %87 = vmatpush2.bf16.msra.mxu0 0
  %88 = vmatprep.subr.bf16.mxu0 0
  %89 = vmatpush2.bf16.msra.mxu0 0
  %90 = vmatprep.subr.bf16.mxu0 0
  %91 = vmatpush2.bf16.msra.mxu0 0
  %92 = vmatprep.subr.bf16.mxu0 0
  %93 = vmatpush2.bf16.msra.mxu0 0
  %94 = vmatprep.mubr.bf16.mxu0 0
  %95 = vmatmul.mubr.bf16.gmra.mxu0 %v57
  %v96 = vpop.f32.mrf.mxu0
  %v97 = vadd.f32 %v31, %v96
  %v98 = vpop.f32.mrf.mxu0
  %v99 = vpop.f32.mrf.mxu0
  %v100 = vadd.f32 %v31, %v99
  %v101 = vpop.f32.mrf.mxu0
  %102 = vmatprep.mubr.bf16.mxu0 0
  %103 = vmatmul.mubr.bf16.gmra.mxu0 %v60
  %v104 = vpop.f32.mrf.mxu0
  %v105 = vadd.f32 %v31, %v104
  %v106 = vpop.f32.mrf.mxu0
  %v107 = vpop.f32.mrf.mxu0
  %v108 = vadd.f32 %v31, %v107
  %v109 = vpop.f32.mrf.mxu0
  %110 = vdwg.mxu0
  %v111 = vld [vmem:[%s3] sm:$0xf]
  %v112 = vld [vmem:[%s3 + $0x4] sm:$0xf]
  %v113 = vld [vmem:[%s3 + $0x8] sm:$0xf]
  %v114 = vld [vmem:[%s3 + $0xc] sm:$0xf]
  %v115 = vunpack.c.l.bf16 %v111
  %v116 = vunpack.c.l.bf16 %v112
  %v117 = vunpack.c.l.bf16 %v113
  %v118 = vunpack.c.l.bf16 %v114
  %v119 = vadd.f32 %v97, %v115
  %v120 = vadd.f32 %v100, %v116
  %v121 = vadd.f32 %v105, %v117
  %v122 = vadd.f32 %v108, %v118
  %v123 = vpack.c.bf16 %v120, %v119
  %v124 = vpack.c.bf16 %v122, %v121
  %v127 = vunpack.c.l.b16 %v123
  %v128 = vunpack.c.h.b16 %v123
  %v129 = vunpack.c.l.b16 %v124
  %v130 = vunpack.c.h.b16 %v124
  %v131 = vpack.c.b16 %v127, %v127
  %v132 = vpack.c.b16 %v128, %v128
  %v133 = vpack.c.b16 %v129, %v129
  %v134 = vpack.c.b16 %v130, %v130
  %vm139 = vcmask 257024
  %140 = vst.msk [vmem:[%s4] sm:$0xf] %vm139, %v131
  %141 = vst.msk [vmem:[%s4 + $0x4] sm:$0xf] %vm139, %v132
  %142 = vst.msk [vmem:[%s4 + $0x8] sm:$0xf] %vm139, %v133
  %143 = vst.msk [vmem:[%s4 + $0xc] sm:$0xf] %vm139, %v134
  // Predicated region
  $region18: #{siglip_forward.21} parent=0 // pred_check
    _
  $region19: #{siglip_forward.21} parent=0 // pred_check_branch
    %145 = sbr.rel (0) target = $region21
  $region20: #{siglip_forward.21} parent=0 // pred_region
    _
  $region21: #{siglip_forward.21} parent=0 // pred_fallthru
    _
  // Predicated region
  $region22: #{siglip_forward.21} parent=0 // pred_check
    _
  $region23: #{siglip_forward.21} parent=0 // pred_check_branch
    %147 = sbr.rel (0) target = $region25
  $region24: #{siglip_forward.21} parent=0 // pred_region
    _
  $region25: #{siglip_forward.21} parent=0 // pred_fallthru
    _

// kernel: siglip_forward.18
$region0: #{siglip_forward.18}
  #allocation0 [shape = 'u32[]', space=smem, size = 0x4, offset = 0x4, fixed_abs, tag = 'smem constant byte address 0x4 - core index']
  #allocation1 [shape = 'u32[144,128]{1,0:T(1,128)}', space=vmem, size = 0x12000, scoped, tag = 'internal scratch']
  %s0 = inlined_call_operand.vmem [shape: bf16[32,48], index: 0, kind: input, shape index: {}]
  %s1 = inlined_call_operand.vmem [shape: bf16[48,32], index: 1, kind: input, shape index: {}]
  %s2 = inlined_call_operand.vmem [shape: f32[1,32], index: 2, kind: input, shape index: {}]
  %s3 = inlined_call_operand.vmem [shape: f32[16,32], index: 3, kind: input, shape index: {}]
  %s4 = inlined_call_operand.vmem [shape: bf16[32,32], index: 4, kind: output, shape index: {}]
  %s5 = sld [smem:[#allocation0]]
  $region49: #{siglip_forward.18} parent=0
    _
  %s7 = ssub.s32 1, %s5
  %s8 = scalar_select 0, %s7, %s5
  loop: start=0, step=1, limit=4
  $region2: #{siglip_forward.18} parent=0 // loop_pre_header
    _
  $region3: #{siglip_forward.18} parent=0 // loop_header
    %s10 = sphi 0, %s14
    %p11 = scmp.ge.s32.totalorder %s10, 4
    %s17 = sphi 0, %s36
    %s18 = sphi 0, %s32
    %s19 = sphi 0, %s28
    %s20 = sphi 0, %s17
    %s21 = sphi 0, %s18
    %s22 = sphi 0, %s19
    %s23 = sphi 0, %s20
    %s24 = sphi 0, %s21
    %s25 = sphi 0, %s22
    %s41 = sphi 0, %s43
    %s44 = sphi 0, %s41
    %s45 = sphi 0, %s44
    %s61 = sphi 0, %s45
    %s69 = sphi 0, %s71
    %s72 = sphi 0, %s69
    %s73 = sphi 0, %s72
    %s89 = sphi 0, %s73
    %s95 = sphi 0, %s97
    %s98 = sphi 0, %s95
    %s99 = sphi 0, %s98
    %s115 = sphi 0, %s99
    %s121 = sphi 0, %s123
    %s124 = sphi 0, %s121
    %s125 = sphi 0, %s124
    %s141 = sphi 0, %s125
    %s149 = sphi 0, %s151
    %s152 = sphi 0, %s149
    %s153 = sphi 0, %s152
    %s169 = sphi 0, %s153
  $region4: #{siglip_forward.18} parent=0 // loop_header_branch
    %13 = sbr.rel (%p11) target = $region8
  $region5: #{siglip_forward.18} parent=0 // loop_body
    %s15 = ssub.s32 %s10, 1
    %s16 = ssub.s32 %s10, 2
    %s26 = sadd.s32 1, %s19
    %p27 = scmp.ge.s32.totalorder %s26, 1
    %s28 = scalar_select %p27, 0, %s26
    %s29 = sadd.s32 1, %s18
    %s30 = scalar_select %p27, %s29, %s18
    %p31 = scmp.ge.s32.totalorder %s30, 1
    %s32 = scalar_select %p31, 0, %s30
    %s33 = sadd.s32 1, %s17
    %s34 = scalar_select %p31, %s33, %s17
    %p35 = scmp.ge.s32.totalorder %s34, 2
    %s36 = scalar_select %p35, 0, %s34
    %s37 = ssub.s32 %s17, %s36
    %s38 = ssub.s32 %s19, %s28
    %s39 = sor.u32 %s37, %s38
    %p40 = scmp.eq.s32.totalorder %s39, 0
    %s42 = sadd.s32 %s41, 1
    %s43 = scalar_select %p40, %s41, %s42
    %p46 = pneg %p40
    %p47 = scmp.eq.s32.totalorder %s10, 1
    %p48 = por %p46, %p47
    %p49 = scmp.ne.s32.totalorder %s41, %s44
    %p50 = scmp.eq.s32.totalorder %s10, 0
    %p51 = por %p49, %p50
    %p52 = scmp.ne.s32.totalorder %s41, %s44
    %p53 = scmp.eq.s32.totalorder %s15, 1
    %p54 = por %p52, %p53
    %p55 = scmp.ne.s32.totalorder %s44, %s45
    %p56 = scmp.eq.s32.totalorder %s15, 0
    %p57 = por %p55, %p56
    %p58 = scmp.ne.s32.totalorder %s44, %s45
    %p59 = scmp.eq.s32.totalorder %s16, 1
    %p60 = por %p58, %p59
    %p62 = scmp.ne.s32.totalorder %s45, %s61
    %p63 = scmp.eq.s32.totalorder %s16, 0
    %p64 = por %p62, %p63
    %s65 = ssub.s32 %s19, %s28
    %s66 = ssub.s32 %s18, %s32
    %s67 = sor.u32 %s65, %s66
    %p68 = scmp.eq.s32.totalorder %s67, 0
    %s70 = sadd.s32 %s69, 1
    %s71 = scalar_select %p68, %s69, %s70
    %p74 = pneg %p68
    %p75 = scmp.eq.s32.totalorder %s10, 1
    %p76 = por %p74, %p75
    %p77 = scmp.ne.s32.totalorder %s69, %s72
    %p78 = scmp.eq.s32.totalorder %s10, 0
    %p79 = por %p77, %p78
    %p80 = scmp.ne.s32.totalorder %s69, %s72
    %p81 = scmp.eq.s32.totalorder %s15, 1
    %p82 = por %p80, %p81
    %p83 = scmp.ne.s32.totalorder %s72, %s73
    %p84 = scmp.eq.s32.totalorder %s15, 0
    %p85 = por %p83, %p84
    %p86 = scmp.ne.s32.totalorder %s72, %s73
    %p87 = scmp.eq.s32.totalorder %s16, 1
    %p88 = por %p86, %p87
    %p90 = scmp.ne.s32.totalorder %s73, %s89
    %p91 = scmp.eq.s32.totalorder %s16, 0
    %p92 = por %p90, %p91
    %s93 = ssub.s32 %s18, %s32
    %p94 = scmp.eq.s32.totalorder %s93, 0
    %s96 = sadd.s32 %s95, 1
    %s97 = scalar_select %p94, %s95, %s96
    %p100 = pneg %p94
    %p101 = scmp.eq.s32.totalorder %s10, 1
    %p102 = por %p100, %p101
    %p103 = scmp.ne.s32.totalorder %s95, %s98
    %p104 = scmp.eq.s32.totalorder %s10, 0
    %p105 = por %p103, %p104
    %p106 = scmp.ne.s32.totalorder %s95, %s98
    %p107 = scmp.eq.s32.totalorder %s15, 1
    %p108 = por %p106, %p107
    %p109 = scmp.ne.s32.totalorder %s98, %s99
    %p110 = scmp.eq.s32.totalorder %s15, 0
    %p111 = por %p109, %p110
    %p112 = scmp.ne.s32.totalorder %s98, %s99
    %p113 = scmp.eq.s32.totalorder %s16, 1
    %p114 = por %p112, %p113
    %p116 = scmp.ne.s32.totalorder %s99, %s115
    %p117 = scmp.eq.s32.totalorder %s16, 0
    %p118 = por %p116, %p117
    %s119 = ssub.s32 %s18, %s32
    %p120 = scmp.eq.s32.totalorder %s119, 0
    %s122 = sadd.s32 %s121, 1
    %s123 = scalar_select %p120, %s121, %s122
    %p126 = pneg %p120
    %p127 = scmp.eq.s32.totalorder %s10, 1
    %p128 = por %p126, %p127
    %p129 = scmp.ne.s32.totalorder %s121, %s124
    %p130 = scmp.eq.s32.totalorder %s10, 0
    %p131 = por %p129, %p130
    %p132 = scmp.ne.s32.totalorder %s121, %s124
    %p133 = scmp.eq.s32.totalorder %s15, 1
    %p134 = por %p132, %p133
    %p135 = scmp.ne.s32.totalorder %s124, %s125
    %p136 = scmp.eq.s32.totalorder %s15, 0
    %p137 = por %p135, %p136
    %p138 = scmp.ne.s32.totalorder %s124, %s125
    %p139 = scmp.eq.s32.totalorder %s16, 1
    %p140 = por %p138, %p139
    %p142 = scmp.ne.s32.totalorder %s125, %s141
    %p143 = scmp.eq.s32.totalorder %s16, 0
    %p144 = por %p142, %p143
    %s145 = ssub.s32 %s17, %s36
    %s146 = ssub.s32 %s18, %s32
    %s147 = sor.u32 %s145, %s146
    %p148 = scmp.eq.s32.totalorder %s147, 0
    %s150 = sadd.s32 %s149, 1
    %s151 = scalar_select %p148, %s149, %s150
    %p154 = pneg %p148
    %p155 = scmp.eq.s32.totalorder %s10, 1
    %p156 = por %p154, %p155
    %p157 = scmp.ne.s32.totalorder %s149, %s152
    %p158 = scmp.eq.s32.totalorder %s10, 0
    %p159 = por %p157, %p158
    %p160 = scmp.ne.s32.totalorder %s149, %s152
    %p161 = scmp.eq.s32.totalorder %s15, 1
    %p162 = por %p160, %p161
    %p163 = scmp.ne.s32.totalorder %s152, %s153
    %p164 = scmp.eq.s32.totalorder %s15, 0
    %p165 = por %p163, %p164
    %p166 = scmp.ne.s32.totalorder %s152, %s153
    %p167 = scmp.eq.s32.totalorder %s16, 1
    %p168 = por %p166, %p167
    %p170 = scmp.ne.s32.totalorder %s153, %s169
    %p171 = scmp.eq.s32.totalorder %s16, 0
    %p172 = por %p170, %p171
    %p173 = scmp.le.s32.totalorder 1, %s10
    %p174 = scmp.lt.s32.totalorder %s10, 3
    %p175 = pnand %p173, %p174
    %p176 = pneg %p175
    // Predicated region
    $region9: #{siglip_forward.18} parent=5 // pred_check
      _
    $region10: #{siglip_forward.18} parent=5 // pred_check_branch
      %178 = sbr.rel (%p175) target = $region12
    $region11: #{siglip_forward.18} parent=5 // pred_region
      %s179 = ssub.s32 %s10, 1
      // Predicated region
      $region13: #{siglip_forward.18} parent=11 // pred_check
        %p180 = pneg %p85
      $region14: #{siglip_forward.18} parent=11 // pred_check_branch
        %182 = sbr.rel (%p180) target = $region16
      $region15: #{siglip_forward.18} parent=11 // pred_region
        %s183 = smul.u32 6, %s22
        %p184 = scmp.lt.s32.totalorder %s183, 5
        %s185 = scalar_select %p184, %s183, 5
        %p186 = scmp.lt.s32.totalorder %s21, 0
        %s187 = scalar_select %p186, %s21, 0
        %s188 = sadd.s32 %s187, %s185
        %s189 = smul.addr %s188, 4
        %s190 = scalar_lea.vmem %s1, %s189
        %s191 = smul.u32 6, %s22
      $region16: #{siglip_forward.18} parent=11 // pred_fallthru
        _
      // Predicated region
      $region17: #{siglip_forward.18} parent=11 // pred_check
        %p192 = pneg %p111
      $region18: #{siglip_forward.18} parent=11 // pred_check_branch
        %194 = sbr.rel (%p192) target = $region20
      $region19: #{siglip_forward.18} parent=11 // pred_region
        %p195 = scmp.lt.s32.totalorder %s21, 0
        %s196 = scalar_select %p195, %s21, 0
        %s197 = scalar_lea.vmem %s2, %s196
      $region20: #{siglip_forward.18} parent=11 // pred_fallthru
        _
      // Predicated region
      $region21: #{siglip_forward.18} parent=11 // pred_check
        %p198 = pneg %p137
      $region22: #{siglip_forward.18} parent=11 // pred_check_branch
        %200 = sbr.rel (%p198) target = $region24
      $region23: #{siglip_forward.18} parent=11 // pred_region
        %p201 = scmp.lt.s32.totalorder %s21, 0
        %s202 = scalar_select %p201, %s21, 0
        %s203 = smul.addr %s202, 8
        %s204 = scalar_lea.vmem %s3, %s203
      $region24: #{siglip_forward.18} parent=11 // pred_fallthru
        _
    $region12: #{siglip_forward.18} parent=5 // pred_fallthru
      _
    %p205 = scmp.lt.s32.totalorder %s10, 2
    // Predicated region
    $region25: #{siglip_forward.18} parent=5 // pred_check
      %p206 = pneg %p205
    $region26: #{siglip_forward.18} parent=5 // pred_check_branch
      %208 = sbr.rel (%p206) target = $region28
    $region27: #{siglip_forward.18} parent=5 // pred_region
      // Predicated region
      $region29: #{siglip_forward.18} parent=27 // pred_check
        %p209 = pneg %p51
      $region30: #{siglip_forward.18} parent=27 // pred_check_branch
        %211 = sbr.rel (%p209) target = $region32
      $region31: #{siglip_forward.18} parent=27 // pred_region
        %s212 = smul.u32 2, %s17
        %p213 = scmp.lt.s32.totalorder %s212, 3
        %s214 = scalar_select %p213, %s212, 3
        %p215 = scmp.lt.s32.totalorder %s19, 0
        %s216 = scalar_select %p215, %s19, 0
        %s217 = sadd.s32 %s216, %s214
        %s218 = smul.addr %s217, 4
        %s219 = scalar_lea.vmem %s0, %s218
        %s220 = smul.u32 2, %s17
      $region32: #{siglip_forward.18} parent=27 // pred_fallthru
        _
    $region28: #{siglip_forward.18} parent=5 // pred_fallthru
      _
    %p221 = scmp.le.s32.totalorder 1, %s10
    %p222 = scmp.lt.s32.totalorder %s10, 3
    %p223 = pnand %p221, %p222
    %p224 = pneg %p223
    // Predicated region
    $region33: #{siglip_forward.18} parent=5 // pred_check
      _
    $region34: #{siglip_forward.18} parent=5 // pred_check_branch
      %226 = sbr.rel (%p223) target = $region36
    $region35: #{siglip_forward.18} parent=5 // pred_region
      %s227 = ssub.s32 %s10, 1
      %s228 = smul.u32 2, %s20
      %p229 = scmp.lt.s32.totalorder %s228, 3
      %s230 = scalar_select %p229, %s228, 3
      %p231 = scmp.lt.s32.totalorder %s22, 0
      %s232 = scalar_select %p231, %s22, 0
      %s233 = sadd.s32 %s232, %s230
      %s234 = smul.addr %s233, 4
      %s235 = scalar_lea.vmem %s0, %s234
      %p236 = pneg %p57
      %p237 = pneg %p54
      %s238 = smul.u32 6, %s22
      %p239 = scmp.lt.s32.totalorder %s238, 5
      %s240 = scalar_select %p239, %s238, 5
      %p241 = scmp.lt.s32.totalorder %s21, 0
      %s242 = scalar_select %p241, %s21, 0
      %s243 = sadd.s32 %s242, %s240
      %s244 = smul.addr %s243, 4
      %s245 = scalar_lea.vmem %s1, %s244
      %p246 = pneg %p85
      %p247 = pneg %p82
      %p248 = scmp.lt.s32.totalorder %s21, 0
      %s249 = scalar_select %p248, %s21, 0
      %s250 = scalar_lea.vmem %s2, %s249
      %p251 = pneg %p111
      %p252 = pneg %p108
      %p253 = scmp.lt.s32.totalorder %s21, 0
      %s254 = scalar_select %p253, %s21, 0
      %s255 = smul.addr %s254, 8
      %s256 = scalar_lea.vmem %s3, %s255
      %p257 = pneg %p137
      %p258 = pneg %p134
      %p259 = pneg %p165
      %p260 = pneg %p162
      %s261 = smul.u32 2, %s20
      %p262 = scmp.lt.s32.totalorder %s261, 3
      %s263 = scalar_select %p262, %s261, 3
      %p264 = scmp.lt.s32.totalorder %s21, 0
      %s265 = scalar_select %p264, %s21, 0
      %s266 = sadd.s32 %s265, %s263
      %s267 = smul.addr %s266, 4
      %s268 = scalar_lea.vmem %s4, %s267
      %s269 = smul.u32 2, %s20
      %p270 = scmp.lt.s32.totalorder %s269, 3
      %s271 = scalar_select %p270, %s269, 3
      %p272 = scmp.lt.s32.totalorder %s22, 0
      %s273 = scalar_select %p272, %s22, 0
      %s274 = sadd.s32 %s273, %s271
      %s275 = smul.addr %s274, 4
      %s276 = scalar_lea.vmem %s0, %s275
      %s277 = smul.u32 2, %s20
      %s278 = smul.u32 6, %s22
      %p279 = scmp.lt.s32.totalorder %s278, 5
      %s280 = scalar_select %p279, %s278, 5
      %p281 = scmp.lt.s32.totalorder %s21, 0
      %s282 = scalar_select %p281, %s21, 0
      %s283 = sadd.s32 %s282, %s280
      %s284 = smul.addr %s283, 4
      %s285 = scalar_lea.vmem %s1, %s284
      %s286 = smul.u32 6, %s22
      %p287 = scmp.lt.s32.totalorder %s21, 0
      %s288 = scalar_select %p287, %s21, 0
      %s289 = scalar_lea.vmem %s2, %s288
      %p290 = scmp.lt.s32.totalorder %s21, 0
      %s291 = scalar_select %p290, %s21, 0
      %s292 = smul.addr %s291, 8
      %s293 = scalar_lea.vmem %s3, %s292
      %s294 = smul.u32 2, %s20
      %p295 = scmp.lt.s32.totalorder %s294, 3
      %s296 = scalar_select %p295, %s294, 3
      %p297 = scmp.lt.s32.totalorder %s21, 0
      %s298 = scalar_select %p297, %s21, 0
      %s299 = sadd.s32 %s298, %s296
      %s300 = smul.addr %s299, 4
      %s301 = scalar_lea.vmem %s4, %s300
      %s302 = smul.u32 2, %s20
      %v304 = vld [vmem:[%s276] sm:$0xf]
      %v305 = vld [vmem:[%s276 + $0x4] sm:$0xf]
      %v306 = vld [vmem:[%s285] sm:$0xf]
      %v307 = vld [vmem:[%s285 + $0x4] sm:$0xf]
      %v308 = vld [vmem:[%s285 + $0x8] sm:$0xf]
      %v309 = vld [vmem:[%s285 + $0xc] sm:$0xf]
      %v310 = vld [vmem:[%s285 + $0x10] sm:$0xf]
      %v311 = vld [vmem:[%s285 + $0x14] sm:$0xf]
      %v312 = vld [vmem:[%s289] sm:$0x1]
      %v314 = vlaneseq
      %v315 = vshrl.u32 %v314, 7
      %v316 = vsub.s32 0, %v315
      %v317 = vrot.slane %v312, %v316
      %v321 = vunpack.c.l.b16 %v304
      %v322 = vunpack.c.l.b16 %v305
      %v323 = vpack.c.b16 %v322, %v321
      %v330 = vunpack.c.l.b16 %v306
      %v331 = vunpack.c.l.b16 %v307
      %v332 = vunpack.c.l.b16 %v308
      %v333 = vunpack.c.l.b16 %v309
      %v334 = vunpack.c.l.b16 %v310
      %v335 = vunpack.c.l.b16 %v311
      %v336 = vpack.c.b16 %v331, %v330
      %v337 = vpack.c.b16 %v333, %v332
      %v338 = vpack.c.b16 %v335, %v334
      %vm342 = vcmask 392192
      %v344 = vsel %vm342, %v323, 0
      %346 = vmatprep.subr.bf16.mxu0 0
      %347 = vmatpush1.bf16.msra.mxu0 0
      %348 = vmatprep.subr.bf16.mxu0 0
      %349 = vmatpush1.bf16.msra.mxu0 0
      %350 = vmatprep.subr.bf16.mxu0 0
      %351 = vmatpush1.bf16.msra.mxu0 0
      %352 = vmatprep.subr.bf16.mxu0 0
      %353 = vmatpush1.bf16.msra.mxu0 0
      %354 = vmatprep.subr.bf16.mxu0 0
      %355 = vmatpush1.bf16.msra.mxu0 0
      %356 = vmatprep.subr.bf16.mxu0 0
      %357 = vmatpush1.bf16.msra.mxu0 %v338
      %358 = vmatprep.subr.bf16.mxu0 0
      %359 = vmatpush1.bf16.msra.mxu0 %v337
      %360 = vmatprep.subr.bf16.mxu0 0
      %361 = vmatpush1.bf16.msra.mxu0 %v336
      %362 = vmatprep.subr.bf16.mxu0 0
      %363 = vmatpush2.bf16.msra.mxu0 0
      %364 = vmatprep.subr.bf16.mxu0 0
      %365 = vmatpush2.bf16.msra.mxu0 0
      %366 = vmatprep.subr.bf16.mxu0 0
      %367 = vmatpush2.bf16.msra.mxu0 0
      %368 = vmatprep.subr.bf16.mxu0 0
      %369 = vmatpush2.bf16.msra.mxu0 0
      %370 = vmatprep.subr.bf16.mxu0 0
      %371 = vmatpush2.bf16.msra.mxu0 0
      %372 = vmatprep.subr.bf16.mxu0 0
      %373 = vmatpush2.bf16.msra.mxu0 0
      %374 = vmatprep.subr.bf16.mxu0 0
      %375 = vmatpush2.bf16.msra.mxu0 0
      %376 = vmatprep.subr.bf16.mxu0 0
      %377 = vmatpush2.bf16.msra.mxu0 0
      %378 = vmatprep.mubr.bf16.mxu0 0
      %379 = vmatmul.mubr.bf16.gmra.mxu0 %v344
      %v380 = vpop.f32.mrf.mxu0
      %v381 = vadd.f32 %v317, %v380
      %v382 = vpop.f32.mrf.mxu0
      %v383 = vpop.f32.mrf.mxu0
      %v384 = vadd.f32 %v317, %v383
      %v385 = vpop.f32.mrf.mxu0
      %386 = vdwg.mxu0
      %v387 = vld [vmem:[%s293] sm:$0xff]
      %v388 = vld [vmem:[%s293 + $0x8] sm:$0xff]
      %v389 = vadd.f32 %v381, %v387
      %v390 = vadd.f32 %v384, %v388
      %v391 = vpack.c.bf16 %v390, %v389
      %v393 = vunpack.c.l.b16 %v391
      %v394 = vunpack.c.h.b16 %v391
      %v395 = vpack.c.b16 %v393, %v393
      %v396 = vpack.c.b16 %v394, %v394
      %vm399 = vcmask 257024
      %400 = vst.msk [vmem:[%s301] sm:$0xf] %vm399, %v395
      %401 = vst.msk [vmem:[%s301 + $0x4] sm:$0xf] %vm399, %v396
      %s402 = smul.u32 2, %s20
      %p403 = scmp.lt.s32.totalorder %s402, 3
      %s404 = scalar_select %p403, %s402, 3
      %p405 = scmp.lt.s32.totalorder %s21, 0
      %s406 = scalar_select %p405, %s21, 0
      %s407 = sadd.s32 %s406, %s404
      %s408 = smul.addr %s407, 4
      %s409 = scalar_lea.vmem %s4, %s408
      // Predicated region
      $region37: #{siglip_forward.18} parent=35 // pred_check
        %p410 = pneg %p162
      $region38: #{siglip_forward.18} parent=35 // pred_check_branch
        %412 = sbr.rel (%p410) target = $region40
      $region39: #{siglip_forward.18} parent=35 // pred_region
        %s413 = smul.u32 2, %s20
      $region40: #{siglip_forward.18} parent=35 // pred_fallthru
        _
    $region36: #{siglip_forward.18} parent=5 // pred_fallthru
      _
    %p414 = scmp.le.s32.totalorder 2, %s10
    // Predicated region
    $region41: #{siglip_forward.18} parent=5 // pred_check
      %p415 = pneg %p414
    $region42: #{siglip_forward.18} parent=5 // pred_check_branch
      %417 = sbr.rel (%p415) target = $region44
    $region43: #{siglip_forward.18} parent=5 // pred_region
      %s418 = ssub.s32 %s10, 2
      // Predicated region
      $region45: #{siglip_forward.18} parent=43 // pred_check
        %p419 = pneg %p168
      $region46: #{siglip_forward.18} parent=43 // pred_check_branch
        %421 = sbr.rel (%p419) target = $region48
      $region47: #{siglip_forward.18} parent=43 // pred_region
        %s422 = smul.u32 2, %s23
        %p423 = scmp.lt.s32.totalorder %s422, 3
        %s424 = scalar_select %p423, %s422, 3
        %p425 = scmp.lt.s32.totalorder %s24, 0
        %s426 = scalar_select %p425, %s24, 0
        %s427 = sadd.s32 %s426, %s424
        %s428 = smul.addr %s427, 4
        %s429 = scalar_lea.vmem %s4, %s428
      $region48: #{siglip_forward.18} parent=43 // pred_fallthru
        _
    $region44: #{siglip_forward.18} parent=5 // pred_fallthru
      _
  $region6: #{siglip_forward.18} parent=0 // loop_footer
    %s14 = sadd.s32 1, %s10
  $region7: #{siglip_forward.18} parent=0 // loop_footer_branch
    %9 = sbr.rel target = $region3
  $region8: #{siglip_forward.18} parent=0 // loop_exit
    _

// kernel: siglip_forward.19
$region0: #{siglip_forward.19}
  #allocation0 [shape = 'u32[]', space=smem, size = 0x4, offset = 0x4, fixed_abs, tag = 'smem constant byte address 0x4 - core index']
  #allocation1 [shape = 'u32[144,128]{1,0:T(1,128)}', space=vmem, size = 0x12000, scoped, tag = 'internal scratch']
  %s0 = inlined_call_operand.vmem [shape: bf16[32,32], index: 0, kind: input, shape index: {}]
  %s1 = inlined_call_operand.vmem [shape: bf16[32,96], index: 1, kind: input, shape index: {}]
  %s2 = inlined_call_operand.vmem [shape: f32[1,96], index: 2, kind: input, shape index: {}]
  %s3 = inlined_call_operand.vmem [shape: f32[1,32], index: 3, kind: input, shape index: {}]
  %s4 = inlined_call_operand.vmem [shape: f32[1,32], index: 4, kind: input, shape index: {}]
  %s5 = inlined_call_operand.vmem [shape: bf16[32,96], index: 5, kind: output, shape index: {}]
  %s6 = sld [smem:[#allocation0]]
  $region30: #{siglip_forward.19} parent=0
    _
  %s8 = ssub.s32 1, %s6
  %s9 = scalar_select 0, %s8, %s6
  // Predicated region
  $region2: #{siglip_forward.19} parent=0 // pred_check
    _
  $region3: #{siglip_forward.19} parent=0 // pred_check_branch
    %11 = sbr.rel (0) target = $region5
  $region4: #{siglip_forward.19} parent=0 // pred_region
    _
  $region5: #{siglip_forward.19} parent=0 // pred_fallthru
    _
  // Predicated region
  $region6: #{siglip_forward.19} parent=0 // pred_check
    _
  $region7: #{siglip_forward.19} parent=0 // pred_check_branch
    %13 = sbr.rel (0) target = $region9
  $region8: #{siglip_forward.19} parent=0 // pred_region
    _
  $region9: #{siglip_forward.19} parent=0 // pred_fallthru
    _
  // Predicated region
  $region10: #{siglip_forward.19} parent=0 // pred_check
    _
  $region11: #{siglip_forward.19} parent=0 // pred_check_branch
    %15 = sbr.rel (0) target = $region13
  $region12: #{siglip_forward.19} parent=0 // pred_region
    _
  $region13: #{siglip_forward.19} parent=0 // pred_fallthru
    _
  // Predicated region
  $region14: #{siglip_forward.19} parent=0 // pred_check
    _
  $region15: #{siglip_forward.19} parent=0 // pred_check_branch
    %17 = sbr.rel (0) target = $region17
  $region16: #{siglip_forward.19} parent=0 // pred_region
    _
  $region17: #{siglip_forward.19} parent=0 // pred_fallthru
    _
  // Predicated region
  $region18: #{siglip_forward.19} parent=0 // pred_check
    _
  $region19: #{siglip_forward.19} parent=0 // pred_check_branch
    %19 = sbr.rel (0) target = $region21
  $region20: #{siglip_forward.19} parent=0 // pred_region
    _
  $region21: #{siglip_forward.19} parent=0 // pred_fallthru
    _
  %v21 = vld [vmem:[%s0] sm:$0xf]
  %v22 = vld [vmem:[%s0 + $0x4] sm:$0xf]
  %v23 = vld [vmem:[%s0 + $0x8] sm:$0xf]
  %v24 = vld [vmem:[%s0 + $0xc] sm:$0xf]
  %v25 = vunpack.c.l.bf16 %v21
  %v26 = vunpack.c.l.bf16 %v22
  %v27 = vunpack.c.l.bf16 %v23
  %v28 = vunpack.c.l.bf16 %v24
  %vm29 = vcmask 261120
  %v30 = vsel %vm29, %v25, 0.0
  %31 = vadd.xlane.f32.xlu0 %v30
  %v32 = vpop.xlane.xlu0 %31
  %v33 = vsel %vm29, %v26, 0.0
  %34 = vadd.xlane.f32.xlu0 %v33
  %v35 = vpop.xlane.xlu0 %34
  %v36 = vsel %vm29, %v27, 0.0
  %37 = vadd.xlane.f32.xlu0 %v36
  %v38 = vpop.xlane.xlu0 %37
  %v39 = vsel %vm29, %v28, 0.0
  %40 = vadd.xlane.f32.xlu0 %v39
  %v41 = vpop.xlane.xlu0 %40
  %v42 = vrcp.pop 32.0
  %v43 = vmul.f32 %v32, %v42
  %v44 = vmul.f32 %v35, %v42
  %v45 = vmul.f32 %v38, %v42
  %v46 = vmul.f32 %v41, %v42
  %v47 = vsub.f32 %v25, %v43
  %v48 = vsub.f32 %v26, %v44
  %v49 = vsub.f32 %v27, %v45
  %v50 = vsub.f32 %v28, %v46
  %v51 = vmul.f32 %v47, %v47
  %v52 = vmul.f32 %v48, %v48
  %v53 = vmul.f32 %v49, %v49
  %v54 = vmul.f32 %v50, %v50
  %v55 = vsel %vm29, %v51, 0.0
  %56 = vadd.xlane.f32.xlu0 %v55
  %v57 = vpop.xlane.xlu0 %56
  %v58 = vsel %vm29, %v52, 0.0
  %59 = vadd.xlane.f32.xlu0 %v58
  %v60 = vpop.xlane.xlu0 %59
  %v61 = vsel %vm29, %v53, 0.0
  %62 = vadd.xlane.f32.xlu0 %v61
  %v63 = vpop.xlane.xlu0 %62
  %v64 = vsel %vm29, %v54, 0.0
  %65 = vadd.xlane.f32.xlu0 %v64
  %v66 = vpop.xlane.xlu0 %65
  %v67 = vmul.f32 %v57, %v42
  %v68 = vmul.f32 %v60, %v42
  %v69 = vmul.f32 %v63, %v42
  %v70 = vmul.f32 %v66, %v42
  %v71 = vadd.f32 %v67, 1e-06
  %v72 = vadd.f32 %v68, 1e-06
  %v73 = vadd.f32 %v69, 1e-06
  %v74 = vadd.f32 %v70, 1e-06
  %v75 = vrsqrt.pop %v71
  %v76 = vrsqrt.pop %v72
  %v77 = vrsqrt.pop %v73
  %v78 = vrsqrt.pop %v74
  %v79 = vmul.f32 %v47, %v75
  %v80 = vmul.f32 %v48, %v76
  %v81 = vmul.f32 %v49, %v77
  %v82 = vmul.f32 %v50, %v78
  %v83 = vld [vmem:[%s3] sm:$0x1]
  %v85 = vlaneseq
  %v86 = vshrl.u32 %v85, 7
  %v87 = vsub.s32 0, %v86
  %v88 = vrot.slane %v83, %v87
  %v90 = vmul.f32 %v79, %v88
  %v91 = vmul.f32 %v80, %v88
  %v92 = vmul.f32 %v81, %v88
  %v93 = vmul.f32 %v82, %v88
  %v94 = vld [vmem:[%s4] sm:$0x1]
  %v96 = vlaneseq
  %v97 = vshrl.u32 %v96, 7
  %v98 = vsub.s32 0, %v97
  %v99 = vrot.slane %v94, %v98
  %v101 = vadd.f32 %v90, %v99
  %v102 = vadd.f32 %v91, %v99
  %v103 = vadd.f32 %v92, %v99
  %v104 = vadd.f32 %v93, %v99
  %v105 = vpack.c.bf16 %v102, %v101
  %v106 = vpack.c.bf16 %v104, %v103
  %v107 = vld [vmem:[%s1] sm:$0xf]
  %v108 = vld [vmem:[%s1 + $0x4] sm:$0xf]
  %v109 = vld [vmem:[%s1 + $0x8] sm:$0xf]
  %v110 = vld [vmem:[%s1 + $0xc] sm:$0xf]
  %v111 = vld [vmem:[%s2] sm:$0x1]
  %v113 = vlaneseq
  %v114 = vshrl.u32 %v113, 7
  %v115 = vsub.s32 0, %v114
  %v116 = vrot.slane %v111, %v115
  %v122 = vunpack.c.l.b16 %v107
  %v123 = vunpack.c.l.b16 %v108
  %v124 = vunpack.c.l.b16 %v109
  %v125 = vunpack.c.l.b16 %v110
  %v126 = vpack.c.b16 %v123, %v122
  %v127 = vpack.c.b16 %v125, %v124
  %v131 = vsel %vm29, %v105, 0
  %v134 = vsel %vm29, %v106, 0
  %136 = vmatprep.subr.bf16.mxu0 0
  %137 = vmatpush1.bf16.msra.mxu0 0
  %138 = vmatprep.subr.bf16.mxu0 0
  %139 = vmatpush1.bf16.msra.mxu0 0
  %140 = vmatprep.subr.bf16.mxu0 0
  %141 = vmatpush1.bf16.msra.mxu0 0
  %142 = vmatprep.subr.bf16.mxu0 0
  %143 = vmatpush1.bf16.msra.mxu0 0
  %144 = vmatprep.subr.bf16.mxu0 0
  %145 = vmatpush1.bf16.msra.mxu0 0
  %146 = vmatprep.subr.bf16.mxu0 0
  %147 = vmatpush1.bf16.msra.mxu0 0
  %148 = vmatprep.subr.bf16.mxu0 0
  %149 = vmatpush1.bf16.msra.mxu0 %v127
  %150 = vmatprep.subr.bf16.mxu0 0
  %151 = vmatpush1.bf16.msra.mxu0 %v126
  %152 = vmatprep.subr.bf16.mxu0 0
  %153 = vmatpush2.bf16.msra.mxu0 0
  %154 = vmatprep.subr.bf16.mxu0 0
  %155 = vmatpush2.bf16.msra.mxu0 0
  %156 = vmatprep.subr.bf16.mxu0 0
  %157 = vmatpush2.bf16.msra.mxu0 0
  %158 = vmatprep.subr.bf16.mxu0 0
  %159 = vmatpush2.bf16.msra.mxu0 0
  %160 = vmatprep.subr.bf16.mxu0 0
  %161 = vmatpush2.bf16.msra.mxu0 0
  %162 = vmatprep.subr.bf16.mxu0 0
  %163 = vmatpush2.bf16.msra.mxu0 0
  %164 = vmatprep.subr.bf16.mxu0 0
  %165 = vmatpush2.bf16.msra.mxu0 0
  %166 = vmatprep.subr.bf16.mxu0 0
  %167 = vmatpush2.bf16.msra.mxu0 0
  %168 = vmatprep.mubr.bf16.mxu0 0
  %169 = vmatmul.mubr.bf16.gmra.mxu0 %v131
  %v170 = vpop.f32.mrf.mxu0
  %v171 = vadd.f32 %v116, %v170
  %v172 = vpop.f32.mrf.mxu0
  %v173 = vpop.f32.mrf.mxu0
  %v174 = vadd.f32 %v116, %v173
  %v175 = vpop.f32.mrf.mxu0
  %176 = vmatprep.mubr.bf16.mxu0 0
  %177 = vmatmul.mubr.bf16.gmra.mxu0 %v134
  %v178 = vpop.f32.mrf.mxu0
  %v179 = vadd.f32 %v116, %v178
  %v180 = vpop.f32.mrf.mxu0
  %v181 = vpop.f32.mrf.mxu0
  %v182 = vadd.f32 %v116, %v181
  %v183 = vpop.f32.mrf.mxu0
  %184 = vdwg.mxu0
  %v185 = vpack.c.bf16 %v174, %v171
  %v186 = vpack.c.bf16 %v182, %v179
  %v189 = vunpack.c.l.b16 %v185
  %v190 = vunpack.c.h.b16 %v185
  %v191 = vunpack.c.l.b16 %v186
  %v192 = vunpack.c.h.b16 %v186
  %v193 = vpack.c.b16 %v189, %v189
  %v194 = vpack.c.b16 %v190, %v190
  %v195 = vpack.c.b16 %v191, %v191
  %v196 = vpack.c.b16 %v192, %v192
  %vm201 = vcmask 781312
  %202 = vst.msk [vmem:[%s5] sm:$0xf] %vm201, %v193
  %203 = vst.msk [vmem:[%s5 + $0x4] sm:$0xf] %vm201, %v194
  %204 = vst.msk [vmem:[%s5 + $0x8] sm:$0xf] %vm201, %v195
  %205 = vst.msk [vmem:[%s5 + $0xc] sm:$0xf] %vm201, %v196
  // Predicated region
  $region22: #{siglip_forward.19} parent=0 // pred_check
    _
  $region23: #{siglip_forward.19} parent=0 // pred_check_branch
    %207 = sbr.rel (0) target = $region25
  $region24: #{siglip_forward.19} parent=0 // pred_region
    _
  $region25: #{siglip_forward.19} parent=0 // pred_fallthru
    _
  // Predicated region
  $region26: #{siglip_forward.19} parent=0 // pred_check
    _
  $region27: #{siglip_forward.19} parent=0 // pred_check_branch
    %209 = sbr.rel (0) target = $region29
  $region28: #{siglip_forward.19} parent=0 // pred_region
    _
  $region29: #{siglip_forward.19} parent=0 // pred_fallthru
    _

// kernel: siglip_forward.20
$region0: #{siglip_forward.20}
  #allocation0 [shape = 'u32[]', space=smem, size = 0x4, offset = 0x4, fixed_abs, tag = 'smem constant byte address 0x4 - core index']
  #allocation1 [shape = 'u32[144,128]{1,0:T(1,128)}', space=vmem, size = 0x12000, scoped, tag = 'internal scratch']
  %s0 = inlined_call_operand.vmem [shape: bf16[2,16,96], index: 0, kind: input, shape index: {}, may-alias: {0,1}]
  %s1 = inlined_call_operand.vmem [shape: bf16[2,16,96], index: 1, kind: input, shape index: {}, may-alias: {0,1}]
  %s2 = inlined_call_operand.vmem [shape: bf16[2,16,32], index: 2, kind: output, shape index: {}]
  %s3 = sld [smem:[#allocation0]]
  $region41: #{siglip_forward.20} parent=0
    _
  %s5 = ssub.s32 1, %s3
  %s6 = scalar_select 0, %s5, %s3
  loop: start=0, step=1, limit=4
  $region2: #{siglip_forward.20} parent=0 // loop_pre_header
    _
  $region3: #{siglip_forward.20} parent=0 // loop_header
    %s8 = sphi 0, %s12
    %p9 = scmp.ge.s32.totalorder %s8, 4
    %s15 = sphi 0, %s27
    %s16 = sphi 0, %s23
    %s17 = sphi 0, %s15
    %s18 = sphi 0, %s16
    %s19 = sphi 0, %s17
    %s20 = sphi 0, %s18
    %s32 = sphi 0, %s34
    %s35 = sphi 0, %s32
    %s36 = sphi 0, %s35
    %s52 = sphi 0, %s36
    %s58 = sphi 0, %s60
    %s61 = sphi 0, %s58
    %s62 = sphi 0, %s61
    %s78 = sphi 0, %s62
    %s86 = sphi 0, %s88
    %s89 = sphi 0, %s86
    %s90 = sphi 0, %s89
    %s106 = sphi 0, %s90
  $region4: #{siglip_forward.20} parent=0 // loop_header_branch
    %11 = sbr.rel (%p9) target = $region8
  $region5: #{siglip_forward.20} parent=0 // loop_body
    %s13 = ssub.s32 %s8, 1
    %s14 = ssub.s32 %s8, 2
    %s21 = sadd.s32 1, %s16
    %p22 = scmp.ge.s32.totalorder %s21, 1
    %s23 = scalar_select %p22, 0, %s21
    %s24 = sadd.s32 1, %s15
    %s25 = scalar_select %p22, %s24, %s15
    %p26 = scmp.ge.s32.totalorder %s25, 2
    %s27 = scalar_select %p26, 0, %s25
    %s28 = ssub.s32 %s15, %s27
    %s29 = ssub.s32 %s16, %s23
    %s30 = sor.u32 %s28, %s29
    %p31 = scmp.eq.s32.totalorder %s30, 0
    %s33 = sadd.s32 %s32, 1
    %s34 = scalar_select %p31, %s32, %s33
    %p37 = pneg %p31
    %p38 = scmp.eq.s32.totalorder %s8, 1
    %p39 = por %p37, %p38
    %p40 = scmp.ne.s32.totalorder %s32, %s35
    %p41 = scmp.eq.s32.totalorder %s8, 0
    %p42 = por %p40, %p41
    %p43 = scmp.ne.s32.totalorder %s32, %s35
    %p44 = scmp.eq.s32.totalorder %s13, 1
    %p45 = por %p43, %p44
    %p46 = scmp.ne.s32.totalorder %s35, %s36
    %p47 = scmp.eq.s32.totalorder %s13, 0
    %p48 = por %p46, %p47
    %p49 = scmp.ne.s32.totalorder %s35, %s36
    %p50 = scmp.eq.s32.totalorder %s14, 1
    %p51 = por %p49, %p50
    %p53 = scmp.ne.s32.totalorder %s36, %s52
    %p54 = scmp.eq.s32.totalorder %s14, 0
    %p55 = por %p53, %p54
    %s56 = ssub.s32 %s15, %s27
    %p57 = scmp.eq.s32.totalorder %s56, 0
    %s59 = sadd.s32 %s58, 1
    %s60 = scalar_select %p57, %s58, %s59
    %p63 = pneg %p57
    %p64 = scmp.eq.s32.totalorder %s8, 1
    %p65 = por %p63, %p64
    %p66 = scmp.ne.s32.totalorder %s58, %s61
    %p67 = scmp.eq.s32.totalorder %s8, 0
    %p68 = por %p66, %p67
    %p69 = scmp.ne.s32.totalorder %s58, %s61
    %p70 = scmp.eq.s32.totalorder %s13, 1
    %p71 = por %p69, %p70
    %p72 = scmp.ne.s32.totalorder %s61, %s62
    %p73 = scmp.eq.s32.totalorder %s13, 0
    %p74 = por %p72, %p73
    %p75 = scmp.ne.s32.totalorder %s61, %s62
    %p76 = scmp.eq.s32.totalorder %s14, 1
    %p77 = por %p75, %p76
    %p79 = scmp.ne.s32.totalorder %s62, %s78
    %p80 = scmp.eq.s32.totalorder %s14, 0
    %p81 = por %p79, %p80
    %s82 = ssub.s32 %s15, %s27
    %s83 = ssub.s32 %s16, %s23
    %s84 = sor.u32 %s82, %s83
    %p85 = scmp.eq.s32.totalorder %s84, 0
    %s87 = sadd.s32 %s86, 1
    %s88 = scalar_select %p85, %s86, %s87
    %p91 = pneg %p85
    %p92 = scmp.eq.s32.totalorder %s8, 1
    %p93 = por %p91, %p92
    %p94 = scmp.ne.s32.totalorder %s86, %s89
    %p95 = scmp.eq.s32.totalorder %s8, 0
    %p96 = por %p94, %p95
    %p97 = scmp.ne.s32.totalorder %s86, %s89
    %p98 = scmp.eq.s32.totalorder %s13, 1
    %p99 = por %p97, %p98
    %p100 = scmp.ne.s32.totalorder %s89, %s90
    %p101 = scmp.eq.s32.totalorder %s13, 0
    %p102 = por %p100, %p101
    %p103 = scmp.ne.s32.totalorder %s89, %s90
    %p104 = scmp.eq.s32.totalorder %s14, 1
    %p105 = por %p103, %p104
    %p107 = scmp.ne.s32.totalorder %s90, %s106
    %p108 = scmp.eq.s32.totalorder %s14, 0
    %p109 = por %p107, %p108
    %p110 = scmp.le.s32.totalorder 1, %s8
    %p111 = scmp.lt.s32.totalorder %s8, 3
    %p112 = pnand %p110, %p111
    %p113 = pneg %p112
    // Predicated region
    $region9: #{siglip_forward.20} parent=5 // pred_check
      _
    $region10: #{siglip_forward.20} parent=5 // pred_check_branch
      %115 = sbr.rel (%p112) target = $region12
    $region11: #{siglip_forward.20} parent=5 // pred_region
      %s116 = ssub.s32 %s8, 1
    $region12: #{siglip_forward.20} parent=5 // pred_fallthru
      _
    %p117 = scmp.lt.s32.totalorder %s8, 2
    // Predicated region
    $region13: #{siglip_forward.20} parent=5 // pred_check
      %p118 = pneg %p117
    $region14: #{siglip_forward.20} parent=5 // pred_check_branch
      %120 = sbr.rel (%p118) target = $region16
    $region15: #{siglip_forward.20} parent=5 // pred_region
      // Predicated region
      $region17: #{siglip_forward.20} parent=15 // pred_check
        %p121 = pneg %p42
      $region18: #{siglip_forward.20} parent=15 // pred_check_branch
        %123 = sbr.rel (%p121) target = $region20
      $region19: #{siglip_forward.20} parent=15 // pred_region
        %s124 = smul.u32 2, %s16
        %p125 = scmp.lt.s32.totalorder %s15, 1
        %s126 = scalar_select %p125, %s15, 1
        %p127 = scmp.lt.s32.totalorder %s124, 1
        %s128 = scalar_select %p127, %s124, 1
        %s129 = smul.addr %s126, 2
        %s130 = sadd.s32 %s128, %s129
        %s131 = smul.addr %s130, 4
        %s132 = scalar_lea.vmem %s0, %s131
        %s133 = smul.u32 2, %s16
      $region20: #{siglip_forward.20} parent=15 // pred_fallthru
        _
      // Predicated region
      $region21: #{siglip_forward.20} parent=15 // pred_check
        %p134 = pneg %p68
      $region22: #{siglip_forward.20} parent=15 // pred_check_branch
        %136 = sbr.rel (%p134) target = $region24
      $region23: #{siglip_forward.20} parent=15 // pred_region
        %p137 = scmp.lt.s32.totalorder %s15, 1
        %s138 = scalar_select %p137, %s15, 1
        %s139 = smul.addr %s138, 2
        %s140 = smul.addr %s139, 4
        %s141 = scalar_lea.vmem %s1, %s140
      $region24: #{siglip_forward.20} parent=15 // pred_fallthru
        _
    $region16: #{siglip_forward.20} parent=5 // pred_fallthru
      _
    %p142 = scmp.le.s32.totalorder 1, %s8
    %p143 = scmp.lt.s32.totalorder %s8, 3
    %p144 = pnand %p142, %p143
    %p145 = pneg %p144
    // Predicated region
    $region25: #{siglip_forward.20} parent=5 // pred_check
      _
    $region26: #{siglip_forward.20} parent=5 // pred_check_branch
      %147 = sbr.rel (%p144) target = $region28
    $region27: #{siglip_forward.20} parent=5 // pred_region
      %s148 = ssub.s32 %s8, 1
      %s149 = smul.u32 2, %s18
      %p150 = scmp.lt.s32.totalorder %s17, 1
      %s151 = scalar_select %p150, %s17, 1
      %p152 = scmp.lt.s32.totalorder %s149, 1
      %s153 = scalar_select %p152, %s149, 1
      %s154 = smul.addr %s151, 2
      %s155 = sadd.s32 %s153, %s154
      %s156 = smul.addr %s155, 4
      %s157 = scalar_lea.vmem %s0, %s156
      %p158 = pneg %p48
      %p159 = pneg %p45
      %p160 = scmp.lt.s32.totalorder %s17, 1
      %s161 = scalar_select %p160, %s17, 1
      %s162 = smul.addr %s161, 2
      %s163 = smul.addr %s162, 4
      %s164 = scalar_lea.vmem %s1, %s163
      %p165 = pneg %p74
      %p166 = pneg %p71
      %p167 = pneg %p102
      %p168 = pneg %p99
      %s169 = smul.u32 2, %s18
      %p170 = scmp.lt.s32.totalorder %s17, 1
      %s171 = scalar_select %p170, %s17, 1
      %p172 = scmp.lt.s32.totalorder %s169, 1
      %s173 = scalar_select %p172, %s169, 1
      %s174 = smul.addr %s171, 2
      %s175 = sadd.s32 %s173, %s174
      %s176 = smul.addr %s175, 4
      %s177 = scalar_lea.vmem %s2, %s176
      %s178 = smul.u32 2, %s18
      %p179 = scmp.lt.s32.totalorder %s17, 1
      %s180 = scalar_select %p179, %s17, 1
      %p181 = scmp.lt.s32.totalorder %s178, 1
      %s182 = scalar_select %p181, %s178, 1
      %s183 = smul.addr %s180, 2
      %s184 = sadd.s32 %s182, %s183
      %s185 = smul.addr %s184, 4
      %s186 = scalar_lea.vmem %s0, %s185
      %s187 = smul.u32 2, %s18
      %p188 = scmp.lt.s32.totalorder %s17, 1
      %s189 = scalar_select %p188, %s17, 1
      %s190 = smul.addr %s189, 2
      %s191 = smul.addr %s190, 4
      %s192 = scalar_lea.vmem %s1, %s191
      %s193 = smul.u32 2, %s18
      %p194 = scmp.lt.s32.totalorder %s17, 1
      %s195 = scalar_select %p194, %s17, 1
      %p196 = scmp.lt.s32.totalorder %s193, 1
      %s197 = scalar_select %p196, %s193, 1
      %s198 = smul.addr %s195, 2
      %s199 = sadd.s32 %s197, %s198
      %s200 = smul.addr %s199, 4
      %s201 = scalar_lea.vmem %s2, %s200
      %s202 = smul.u32 2, %s18
      %v204 = vld [vmem:[%s186] sm:$0xf]
      %v205 = vld [vmem:[%s186 + $0x4] sm:$0xf]
      %v206 = vld [vmem:[%s192] sm:$0xf]
      %v207 = vld [vmem:[%s192 + $0x4] sm:$0xf]
      %v208 = vunpack.c.l.bf16 %v204
      %v209 = vunpack.c.l.bf16 %v205
      %v210 = vmul.f32 %v208, 0.35355338
      %v211 = vmul.f32 %v209, 0.35355338
      %v212 = vpack.c.bf16 %v211, %v210
      %v215 = vunpack.c.l.b16 %v206
      %v216 = vunpack.c.l.b16 %v207
      %v217 = vpack.c.b16 %v216, %v215
      %218 = vrot.lane.b32.xlu0 %v217, 96
      %v219 = vpop.permute.xlu0 %218
      %vm220 = vcmask 64512
      %v222 = vsel %vm220, %v212, 0
      %v225 = vsel %vm220, %v219, 0
      %227 = vmatprep.subr.bf16.mxu0 0
      %228 = vmatpush1.bf16.xpose.msra.mxu0 0
      %229 = vmatprep.subr.bf16.mxu0 0
      %230 = vmatpush1.bf16.xpose.msra.mxu0 0
      %231 = vmatprep.subr.bf16.mxu0 0
      %232 = vmatpush1.bf16.xpose.msra.mxu0 0
      %233 = vmatprep.subr.bf16.mxu0 0
      %234 = vmatpush1.bf16.xpose.msra.mxu0 0
      %235 = vmatprep.subr.bf16.mxu0 0
      %236 = vmatpush1.bf16.xpose.msra.mxu0 0
      %237 = vmatprep.subr.bf16.mxu0 0
      %238 = vmatpush1.bf16.xpose.msra.mxu0 0
      %239 = vmatprep.subr.bf16.mxu0 0
      %240 = vmatpush1.bf16.xpose.msra.mxu0 0
      %241 = vmatprep.subr.bf16.mxu0 0
      %242 = vmatpush1.bf16.xpose.msra.mxu0 %v225
      %243 = vmatprep.subr.bf16.mxu0 0
      %244 = vmatpush2.bf16.xpose.msra.mxu0 0
      %245 = vmatprep.subr.bf16.mxu0 0
      %246 = vmatpush2.bf16.xpose.msra.mxu0 0
      %247 = vmatprep.subr.bf16.mxu0 0
      %248 = vmatpush2.bf16.xpose.msra.mxu0 0
      %249 = vmatprep.subr.bf16.mxu0 0
      %250 = vmatpush2.bf16.xpose.msra.mxu0 0
      %251 = vmatprep.subr.bf16.mxu0 0
      %252 = vmatpush2.bf16.xpose.msra.mxu0 0
      %253 = vmatprep.subr.bf16.mxu0 0
      %254 = vmatpush2.bf16.xpose.msra.mxu0 0
      %255 = vmatprep.subr.bf16.mxu0 0
      %256 = vmatpush2.bf16.xpose.msra.mxu0 0
      %257 = vmatprep.subr.bf16.mxu0 0
      %258 = vmatpush2.bf16.xpose.msra.mxu0 0
      %259 = vmatprep.mubr.bf16.mxu0 0
      %260 = vmatmul.mubr.bf16.gmra.mxu0 %v222
      %v261 = vpop.f32.mrf.mxu0
      %v262 = vadd.f32 0.0, %v261
      %v263 = vpop.f32.mrf.mxu0
      %v264 = vpop.f32.mrf.mxu0
      %v265 = vadd.f32 0.0, %v264
      %v266 = vpop.f32.mrf.mxu0
      %267 = vdwg.mxu0
      %vm268 = vcmask 130048
      %v269 = vsel %vm268, %v262, -inf
      %270 = vmax.xlane.f32.xlu0 %v269
      %v271 = vpop.xlane.xlu0 %270
      %v272 = vsel %vm268, %v265, -inf
      %273 = vmax.xlane.f32.xlu0 %v272
      %v274 = vpop.xlane.xlu0 %273
      %v275 = vsub.f32 %v262, %v271
      %v276 = vsub.f32 %v265, %v274
      %v277 = vmul.f32 %v275, 1.442695
      %v278 = vpow.pop %v277
      %v279 = vmul.f32 %v276, 1.442695
      %v280 = vpow.pop %v279
      %v281 = vsel %vm268, %v278, 0.0
      %282 = vadd.xlane.f32.xlu0 %v281
      %v283 = vpop.xlane.xlu0 %282
      %v284 = vsel %vm268, %v280, 0.0
      %285 = vadd.xlane.f32.xlu0 %v284
      %v286 = vpop.xlane.xlu0 %285
      %v287 = vrcp.pop %v283
      %v288 = vrcp.pop %v286
      %v289 = vmul.f32 %v278, %v287
      %v290 = vmul.f32 %v280, %v288
      %v291 = vpack.c.bf16 %v290, %v289
      %292 = vrot.lane.b32.xlu0 %v217, 64
      %v293 = vpop.permute.xlu0 %292
      %v296 = vsel %vm268, %v291, 0
      %298 = vmatprep.subr.bf16.mxu0 0
      %299 = vmatpush1.bf16.msra.mxu0 0
      %300 = vmatprep.subr.bf16.mxu0 0
      %301 = vmatpush1.bf16.msra.mxu0 0
      %302 = vmatprep.subr.bf16.mxu0 0
      %303 = vmatpush1.bf16.msra.mxu0 0
      %304 = vmatprep.subr.bf16.mxu0 0
      %305 = vmatpush1.bf16.msra.mxu0 0
      %306 = vmatprep.subr.bf16.mxu0 0
      %307 = vmatpush1.bf16.msra.mxu0 0
      %308 = vmatprep.subr.bf16.mxu0 0
      %309 = vmatpush1.bf16.msra.mxu0 0
      %310 = vmatprep.subr.bf16.mxu0 0
      %311 = vmatpush1.bf16.msra.mxu0 0
      %312 = vmatprep.subr.bf16.mxu0 0
      %313 = vmatpush1.bf16.msra.mxu0 %v293
      %314 = vmatprep.subr.bf16.mxu0 0
      %315 = vmatpush2.bf16.msra.mxu0 0
      %316 = vmatprep.subr.bf16.mxu0 0
      %317 = vmatpush2.bf16.msra.mxu0 0
      %318 = vmatprep.subr.bf16.mxu0 0
      %319 = vmatpush2.bf16.msra.mxu0 0
      %320 = vmatprep.subr.bf16.mxu0 0
      %321 = vmatpush2.bf16.msra.mxu0 0
      %322 = vmatprep.subr.bf16.mxu0 0
      %323 = vmatpush2.bf16.msra.mxu0 0
      %324 = vmatprep.subr.bf16.mxu0 0
      %325 = vmatpush2.bf16.msra.mxu0 0
      %326 = vmatprep.subr.bf16.mxu0 0
      %327 = vmatpush2.bf16.msra.mxu0 0
      %328 = vmatprep.subr.bf16.mxu0 0
      %329 = vmatpush2.bf16.msra.mxu0 0
      %330 = vmatprep.mubr.bf16.mxu0 0
      %331 = vmatmul.mubr.bf16.gmra.mxu0 %v296
      %v332 = vpop.f32.mrf.mxu0
      %v333 = vadd.f32 0.0, %v332
      %v334 = vpop.f32.mrf.mxu0
      %v335 = vpop.f32.mrf.mxu0
      %v336 = vadd.f32 0.0, %v335
      %v337 = vpop.f32.mrf.mxu0
      %338 = vdwg.mxu0
      %340 = vrot.lane.b32.xlu0 %v212, 120
      %v341 = vpop.permute.xlu0 %340
      %342 = vrot.lane.b32.xlu0 %v217, 88
      %v343 = vpop.permute.xlu0 %342
      %v345 = vsel %vm220, %v341, 0
      %v348 = vsel %vm220, %v343, 0
      %350 = vmatprep.subr.bf16.mxu0 0
      %351 = vmatpush1.bf16.xpose.msra.mxu0 0
      %352 = vmatprep.subr.bf16.mxu0 0
      %353 = vmatpush1.bf16.xpose.msra.mxu0 0
      %354 = vmatprep.subr.bf16.mxu0 0
      %355 = vmatpush1.bf16.xpose.msra.mxu0 0
      %356 = vmatprep.subr.bf16.mxu0 0
      %357 = vmatpush1.bf16.xpose.msra.mxu0 0
      %358 = vmatprep.subr.bf16.mxu0 0
      %359 = vmatpush1.bf16.xpose.msra.mxu0 0
      %360 = vmatprep.subr.bf16.mxu0 0
      %361 = vmatpush1.bf16.xpose.msra.mxu0 0
      %362 = vmatprep.subr.bf16.mxu0 0
      %363 = vmatpush1.bf16.xpose.msra.mxu0 0
      %364 = vmatprep.subr.bf16.mxu0 0
      %365 = vmatpush1.bf16.xpose.msra.mxu0 %v348
      %366 = vmatprep.subr.bf16.mxu0 0
      %367 = vmatpush2.bf16.xpose.msra.mxu0 0
      %368 = vmatprep.subr.bf16.mxu0 0
      %369 = vmatpush2.bf16.xpose.msra.mxu0 0
      %370 = vmatprep.subr.bf16.mxu0 0
      %371 = vmatpush2.bf16.xpose.msra.mxu0 0
      %372 = vmatprep.subr.bf16.mxu0 0
      %373 = vmatpush2.bf16.xpose.msra.mxu0 0
      %374 = vmatprep.subr.bf16.mxu0 0
      %375 = vmatpush2.bf16.xpose.msra.mxu0 0
      %376 = vmatprep.subr.bf16.mxu0 0
      %377 = vmatpush2.bf16.xpose.msra.mxu0 0
      %378 = vmatprep.subr.bf16.mxu0 0
      %379 = vmatpush2.bf16.xpose.msra.mxu0 0
      %380 = vmatprep.subr.bf16.mxu0 0
      %381 = vmatpush2.bf16.xpose.msra.mxu0 0
      %382 = vmatprep.mubr.bf16.mxu0 0
      %383 = vmatmul.mubr.bf16.gmra.mxu0 %v345
      %v384 = vpop.f32.mrf.mxu0
      %v385 = vadd.f32 0.0, %v384
      %v386 = vpop.f32.mrf.mxu0
      %v387 = vpop.f32.mrf.mxu0
      %v388 = vadd.f32 0.0, %v387
      %v389 = vpop.f32.mrf.mxu0
      %390 = vdwg.mxu0
      %v391 = vsel %vm268, %v385, -inf
      %392 = vmax.xlane.f32.xlu0 %v391
      %v393 = vpop.xlane.xlu0 %392
      %v394 = vsel %vm268, %v388, -inf
      %395 = vmax.xlane.f32.xlu0 %v394
      %v396 = vpop.xlane.xlu0 %395
      %v397 = vsub.f32 %v385, %v393
      %v398 = vsub.f32 %v388, %v396
      %v399 = vmul.f32 %v397, 1.442695
      %v400 = vpow.pop %v399
      %v401 = vmul.f32 %v398, 1.442695
      %v402 = vpow.pop %v401
      %v403 = vsel %vm268, %v400, 0.0
      %404 = vadd.xlane.f32.xlu0 %v403
      %v405 = vpop.xlane.xlu0 %404
      %v406 = vsel %vm268, %v402, 0.0
      %407 = vadd.xlane.f32.xlu0 %v406
      %v408 = vpop.xlane.xlu0 %407
      %v409 = vrcp.pop %v405
      %v410 = vrcp.pop %v408
      %v411 = vmul.f32 %v400, %v409
      %v412 = vmul.f32 %v402, %v410
      %v413 = vpack.c.bf16 %v412, %v411
      %414 = vrot.lane.b32.xlu0 %v217, 56
      %v415 = vpop.permute.xlu0 %414
      %v418 = vsel %vm268, %v413, 0
      %420 = vmatprep.subr.bf16.mxu0 0
      %421 = vmatpush1.bf16.msra.mxu0 0
      %422 = vmatprep.subr.bf16.mxu0 0
      %423 = vmatpush1.bf16.msra.mxu0 0
      %424 = vmatprep.subr.bf16.mxu0 0
      %425 = vmatpush1.bf16.msra.mxu0 0
      %426 = vmatprep.subr.bf16.mxu0 0
      %427 = vmatpush1.bf16.msra.mxu0 0
      %428 = vmatprep.subr.bf16.mxu0 0
      %429 = vmatpush1.bf16.msra.mxu0 0
      %430 = vmatprep.subr.bf16.mxu0 0
      %431 = vmatpush1.bf16.msra.mxu0 0
      %432 = vmatprep.subr.bf16.mxu0 0
      %433 = vmatpush1.bf16.msra.mxu0 0
      %434 = vmatprep.subr.bf16.mxu0 0
      %435 = vmatpush1.bf16.msra.mxu0 %v415
      %436 = vmatprep.subr.bf16.mxu0 0
      %437 = vmatpush2.bf16.msra.mxu0 0
      %438 = vmatprep.subr.bf16.mxu0 0
      %439 = vmatpush2.bf16.msra.mxu0 0
      %440 = vmatprep.subr.bf16.mxu0 0
      %441 = vmatpush2.bf16.msra.mxu0 0
      %442 = vmatprep.subr.bf16.mxu0 0
      %443 = vmatpush2.bf16.msra.mxu0 0
      %444 = vmatprep.subr.bf16.mxu0 0
      %445 = vmatpush2.bf16.msra.mxu0 0
      %446 = vmatprep.subr.bf16.mxu0 0
      %447 = vmatpush2.bf16.msra.mxu0 0
      %448 = vmatprep.subr.bf16.mxu0 0
      %449 = vmatpush2.bf16.msra.mxu0 0
      %450 = vmatprep.subr.bf16.mxu0 0
      %451 = vmatpush2.bf16.msra.mxu0 0
      %452 = vmatprep.mubr.bf16.mxu0 0
      %453 = vmatmul.mubr.bf16.gmra.mxu0 %v418
      %v454 = vpop.f32.mrf.mxu0
      %v455 = vadd.f32 0.0, %v454
      %v456 = vpop.f32.mrf.mxu0
      %v457 = vpop.f32.mrf.mxu0
      %v458 = vadd.f32 0.0, %v457
      %v459 = vpop.f32.mrf.mxu0
      %460 = vdwg.mxu0
      %461 = vrot.lane.b32.xlu0 %v212, 112
      %v462 = vpop.permute.xlu0 %461
      %463 = vrot.lane.b32.xlu0 %v217, 80
      %v464 = vpop.permute.xlu0 %463
      %v466 = vsel %vm220, %v462, 0
      %v469 = vsel %vm220, %v464, 0
      %471 = vmatprep.subr.bf16.mxu0 0
      %472 = vmatpush1.bf16.xpose.msra.mxu0 0
      %473 = vmatprep.subr.bf16.mxu0 0
      %474 = vmatpush1.bf16.xpose.msra.mxu0 0
      %475 = vmatprep.subr.bf16.mxu0 0
      %476 = vmatpush1.bf16.xpose.msra.mxu0 0
      %477 = vmatprep.subr.bf16.mxu0 0
      %478 = vmatpush1.bf16.xpose.msra.mxu0 0
      %479 = vmatprep.subr.bf16.mxu0 0
      %480 = vmatpush1.bf16.xpose.msra.mxu0 0
      %481 = vmatprep.subr.bf16.mxu0 0
      %482 = vmatpush1.bf16.xpose.msra.mxu0 0
      %483 = vmatprep.subr.bf16.mxu0 0
      %484 = vmatpush1.bf16.xpose.msra.mxu0 0
      %485 = vmatprep.subr.bf16.mxu0 0
      %486 = vmatpush1.bf16.xpose.msra.mxu0 %v469
      %487 = vmatprep.subr.bf16.mxu0 0
      %488 = vmatpush2.bf16.xpose.msra.mxu0 0
      %489 = vmatprep.subr.bf16.mxu0 0
      %490 = vmatpush2.bf16.xpose.msra.mxu0 0
      %491 = vmatprep.subr.bf16.mxu0 0
      %492 = vmatpush2.bf16.xpose.msra.mxu0 0
      %493 = vmatprep.subr.bf16.mxu0 0
      %494 = vmatpush2.bf16.xpose.msra.mxu0 0
      %495 = vmatprep.subr.bf16.mxu0 0
      %496 = vmatpush2.bf16.xpose.msra.mxu0 0
      %497 = vmatprep.subr.bf16.mxu0 0
      %498 = vmatpush2.bf16.xpose.msra.mxu0 0
      %499 = vmatprep.subr.bf16.mxu0 0
      %500 = vmatpush2.bf16.xpose.msra.mxu0 0
      %501 = vmatprep.subr.bf16.mxu0 0
      %502 = vmatpush2.bf16.xpose.msra.mxu0 0
      %503 = vmatprep.mubr.bf16.mxu0 0
      %504 = vmatmul.mubr.bf16.gmra.mxu0 %v466
      %v505 = vpop.f32.mrf.mxu0
      %v506 = vadd.f32 0.0, %v505
      %v507 = vpop.f32.mrf.mxu0
      %v508 = vpop.f32.mrf.mxu0
      %v509 = vadd.f32 0.0, %v508
      %v510 = vpop.f32.mrf.mxu0
      %511 = vdwg.mxu0
      %v512 = vsel %vm268, %v506, -inf
      %513 = vmax.xlane.f32.xlu0 %v512
      %v514 = vpop.xlane.xlu0 %513
      %v515 = vsel %vm268, %v509, -inf
      %516 = vmax.xlane.f32.xlu0 %v515
      %v517 = vpop.xlane.xlu0 %516
      %v518 = vsub.f32 %v506, %v514
      %v519 = vsub.f32 %v509, %v517
      %v520 = vmul.f32 %v518, 1.442695
      %v521 = vpow.pop %v520
      %v522 = vmul.f32 %v519, 1.442695
      %v523 = vpow.pop %v522
      %v524 = vsel %vm268, %v521, 0.0
      %525 = vadd.xlane.f32.xlu0 %v524
      %v526 = vpop.xlane.xlu0 %525
      %v527 = vsel %vm268, %v523, 0.0
      %528 = vadd.xlane.f32.xlu0 %v527
      %v529 = vpop.xlane.xlu0 %528
      %v530 = vrcp.pop %v526
      %v531 = vrcp.pop %v529
      %v532 = vmul.f32 %v521, %v530
      %v533 = vmul.f32 %v523, %v531
      %v534 = vpack.c.bf16 %v533, %v532
      %535 = vrot.lane.b32.xlu0 %v217, 48
      %v536 = vpop.permute.xlu0 %535
      %v539 = vsel %vm268, %v534, 0
      %541 = vmatprep.subr.bf16.mxu0 0
      %542 = vmatpush1.bf16.msra.mxu0 0
      %543 = vmatprep.subr.bf16.mxu0 0
      %544 = vmatpush1.bf16.msra.mxu0 0
      %545 = vmatprep.subr.bf16.mxu0 0
      %546 = vmatpush1.bf16.msra.mxu0 0
      %547 = vmatprep.subr.bf16.mxu0 0
      %548 = vmatpush1.bf16.msra.mxu0 0
      %549 = vmatprep.subr.bf16.mxu0 0
      %550 = vmatpush1.bf16.msra.mxu0 0
      %551 = vmatprep.subr.bf16.mxu0 0
      %552 = vmatpush1.bf16.msra.mxu0 0
      %553 = vmatprep.subr.bf16.mxu0 0
      %554 = vmatpush1.bf16.msra.mxu0 0
      %555 = vmatprep.subr.bf16.mxu0 0
      %556 = vmatpush1.bf16.msra.mxu0 %v536
      %557 = vmatprep.subr.bf16.mxu0 0
      %558 = vmatpush2.bf16.msra.mxu0 0
      %559 = vmatprep.subr.bf16.mxu0 0
      %560 = vmatpush2.bf16.msra.mxu0 0
      %561 = vmatprep.subr.bf16.mxu0 0
      %562 = vmatpush2.bf16.msra.mxu0 0
      %563 = vmatprep.subr.bf16.mxu0 0
      %564 = vmatpush2.bf16.msra.mxu0 0
      %565 = vmatprep.subr.bf16.mxu0 0
      %566 = vmatpush2.bf16.msra.mxu0 0
      %567 = vmatprep.subr.bf16.mxu0 0
      %568 = vmatpush2.bf16.msra.mxu0 0
      %569 = vmatprep.subr.bf16.mxu0 0
      %570 = vmatpush2.bf16.msra.mxu0 0
      %571 = vmatprep.subr.bf16.mxu0 0
      %572 = vmatpush2.bf16.msra.mxu0 0
      %573 = vmatprep.mubr.bf16.mxu0 0
      %574 = vmatmul.mubr.bf16.gmra.mxu0 %v539
      %v575 = vpop.f32.mrf.mxu0
      %v576 = vadd.f32 0.0, %v575
      %v577 = vpop.f32.mrf.mxu0
      %v578 = vpop.f32.mrf.mxu0
      %v579 = vadd.f32 0.0, %v578
      %v580 = vpop.f32.mrf.mxu0
      %581 = vdwg.mxu0
      %582 = vrot.lane.b32.xlu0 %v212, 104
      %v583 = vpop.permute.xlu0 %582
      %584 = vrot.lane.b32.xlu0 %v217, 72
      %v585 = vpop.permute.xlu0 %584
      %v587 = vsel %vm220, %v583, 0
      %v590 = vsel %vm220, %v585, 0
      %592 = vmatprep.subr.bf16.mxu0 0
      %593 = vmatpush1.bf16.xpose.msra.mxu0 0
      %594 = vmatprep.subr.bf16.mxu0 0
      %595 = vmatpush1.bf16.xpose.msra.mxu0 0
      %596 = vmatprep.subr.bf16.mxu0 0
      %597 = vmatpush1.bf16.xpose.msra.mxu0 0
      %598 = vmatprep.subr.bf16.mxu0 0
      %599 = vmatpush1.bf16.xpose.msra.mxu0 0
      %600 = vmatprep.subr.bf16.mxu0 0
      %601 = vmatpush1.bf16.xpose.msra.mxu0 0
      %602 = vmatprep.subr.bf16.mxu0 0
      %603 = vmatpush1.bf16.xpose.msra.mxu0 0
      %604 = vmatprep.subr.bf16.mxu0 0
      %605 = vmatpush1.bf16.xpose.msra.mxu0 0
      %606 = vmatprep.subr.bf16.mxu0 0
      %607 = vmatpush1.bf16.xpose.msra.mxu0 %v590
      %608 = vmatprep.subr.bf16.mxu0 0
      %609 = vmatpush2.bf16.xpose.msra.mxu0 0
      %610 = vmatprep.subr.bf16.mxu0 0
      %611 = vmatpush2.bf16.xpose.msra.mxu0 0
      %612 = vmatprep.subr.bf16.mxu0 0
      %613 = vmatpush2.bf16.xpose.msra.mxu0 0
      %614 = vmatprep.subr.bf16.mxu0 0
      %615 = vmatpush2.bf16.xpose.msra.mxu0 0
      %616 = vmatprep.subr.bf16.mxu0 0
      %617 = vmatpush2.bf16.xpose.msra.mxu0 0
      %618 = vmatprep.subr.bf16.mxu0 0
      %619 = vmatpush2.bf16.xpose.msra.mxu0 0
      %620 = vmatprep.subr.bf16.mxu0 0
      %621 = vmatpush2.bf16.xpose.msra.mxu0 0
      %622 = vmatprep.subr.bf16.mxu0 0
      %623 = vmatpush2.bf16.xpose.msra.mxu0 0
      %624 = vmatprep.mubr.bf16.mxu0 0
      %625 = vmatmul.mubr.bf16.gmra.mxu0 %v587
      %v626 = vpop.f32.mrf.mxu0
      %v627 = vadd.f32 0.0, %v626
      %v628 = vpop.f32.mrf.mxu0
      %v629 = vpop.f32.mrf.mxu0
      %v630 = vadd.f32 0.0, %v629
      %v631 = vpop.f32.mrf.mxu0
      %632 = vdwg.mxu0
      %v633 = vsel %vm268, %v627, -inf
      %634 = vmax.xlane.f32.xlu0 %v633
      %v635 = vpop.xlane.xlu0 %634
      %v636 = vsel %vm268, %v630, -inf
      %637 = vmax.xlane.f32.xlu0 %v636
      %v638 = vpop.xlane.xlu0 %637
      %v639 = vsub.f32 %v627, %v635
      %v640 = vsub.f32 %v630, %v638
      %v641 = vmul.f32 %v639, 1.442695
      %v642 = vpow.pop %v641
      %v643 = vmul.f32 %v640, 1.442695
      %v644 = vpow.pop %v643
      %v645 = vsel %vm268, %v642, 0.0
      %646 = vadd.xlane.f32.xlu0 %v645
      %v647 = vpop.xlane.xlu0 %646
      %v648 = vsel %vm268, %v644, 0.0
      %649 = vadd.xlane.f32.xlu0 %v648
      %v650 = vpop.xlane.xlu0 %649
      %v651 = vrcp.pop %v647
      %v652 = vrcp.pop %v650
      %v653 = vmul.f32 %v642, %v651
      %v654 = vmul.f32 %v644, %v652
      %v655 = vpack.c.bf16 %v654, %v653
      %656 = vrot.lane.b32.xlu0 %v217, 40
      %v657 = vpop.permute.xlu0 %656
      %v660 = vsel %vm268, %v655, 0
      %662 = vmatprep.subr.bf16.mxu0 0
      %663 = vmatpush1.bf16.msra.mxu0 0
      %664 = vmatprep.subr.bf16.mxu0 0
      %665 = vmatpush1.bf16.msra.mxu0 0
      %666 = vmatprep.subr.bf16.mxu0 0
      %667 = vmatpush1.bf16.msra.mxu0 0
      %668 = vmatprep.subr.bf16.mxu0 0
      %669 = vmatpush1.bf16.msra.mxu0 0
      %670 = vmatprep.subr.bf16.mxu0 0
      %671 = vmatpush1.bf16.msra.mxu0 0
      %672 = vmatprep.subr.bf16.mxu0 0
      %673 = vmatpush1.bf16.msra.mxu0 0
      %674 = vmatprep.subr.bf16.mxu0 0
      %675 = vmatpush1.bf16.msra.mxu0 0
      %676 = vmatprep.subr.bf16.mxu0 0
      %677 = vmatpush1.bf16.msra.mxu0 %v657
      %678 = vmatprep.subr.bf16.mxu0 0
      %679 = vmatpush2.bf16.msra.mxu0 0
      %680 = vmatprep.subr.bf16.mxu0 0
      %681 = vmatpush2.bf16.msra.mxu0 0
      %682 = vmatprep.subr.bf16.mxu0 0
      %683 = vmatpush2.bf16.msra.mxu0 0
      %684 = vmatprep.subr.bf16.mxu0 0
      %685 = vmatpush2.bf16.msra.mxu0 0
      %686 = vmatprep.subr.bf16.mxu0 0
      %687 = vmatpush2.bf16.msra.mxu0 0
      %688 = vmatprep.subr.bf16.mxu0 0
      %689 = vmatpush2.bf16.msra.mxu0 0
      %690 = vmatprep.subr.bf16.mxu0 0
      %691 = vmatpush2.bf16.msra.mxu0 0
      %692 = vmatprep.subr.bf16.mxu0 0
      %693 = vmatpush2.bf16.msra.mxu0 0
      %694 = vmatprep.mubr.bf16.mxu0 0
      %695 = vmatmul.mubr.bf16.gmra.mxu0 %v660
      %v696 = vpop.f32.mrf.mxu0
      %v697 = vadd.f32 0.0, %v696
      %v698 = vpop.f32.mrf.mxu0
      %v699 = vpop.f32.mrf.mxu0
      %v700 = vadd.f32 0.0, %v699
      %v701 = vpop.f32.mrf.mxu0
      %702 = vdwg.mxu0
      %705 = vrot.lane.b32.xlu0 %v455, 8
      %v706 = vpop.permute.xlu0 %705
      %707 = vrot.lane.b32.xlu0 %v458, 8
      %v708 = vpop.permute.xlu0 %707
      %713 = vrot.lane.b32.xlu0 %v576, 16
      %v714 = vpop.permute.xlu0 %713
      %715 = vrot.lane.b32.xlu0 %v579, 16
      %v716 = vpop.permute.xlu0 %715
      %721 = vrot.lane.b32.xlu0 %v697, 24
      %v722 = vpop.permute.xlu0 %721
      %723 = vrot.lane.b32.xlu0 %v700, 24
      %v724 = vpop.permute.xlu0 %723
      %v727 = vsel %vm220, %v333, %v706
      %v728 = vsel %vm220, %v336, %v708
      %v729 = vsel %vm268, %v727, %v714
      %v730 = vsel %vm268, %v728, %v716
      %vm731 = vcmask 195584
      %v732 = vsel %vm731, %v729, %v722
      %v733 = vsel %vm731, %v730, %v724
      %v734 = vpack.c.bf16 %v733, %v732
      %v736 = vunpack.c.l.b16 %v734
      %v737 = vunpack.c.h.b16 %v734
      %v738 = vpack.c.b16 %v736, %v736
      %v739 = vpack.c.b16 %v737, %v737
      %vm742 = vcmask 257024
      %743 = vst.msk [vmem:[%s201] sm:$0xf] %vm742, %v738
      %744 = vst.msk [vmem:[%s201 + $0x4] sm:$0xf] %vm742, %v739
      %s745 = smul.u32 2, %s18
      %p746 = scmp.lt.s32.totalorder %s17, 1
      %s747 = scalar_select %p746, %s17, 1
      %p748 = scmp.lt.s32.totalorder %s745, 1
      %s749 = scalar_select %p748, %s745, 1
      %s750 = smul.addr %s747, 2
      %s751 = sadd.s32 %s749, %s750
      %s752 = smul.addr %s751, 4
      %s753 = scalar_lea.vmem %s2, %s752
      // Predicated region
      $region29: #{siglip_forward.20} parent=27 // pred_check
        %p754 = pneg %p99
      $region30: #{siglip_forward.20} parent=27 // pred_check_branch
        %756 = sbr.rel (%p754) target = $region32
      $region31: #{siglip_forward.20} parent=27 // pred_region
        %s757 = smul.u32 2, %s18
      $region32: #{siglip_forward.20} parent=27 // pred_fallthru
        _
    $region28: #{siglip_forward.20} parent=5 // pred_fallthru
      _
    %p758 = scmp.le.s32.totalorder 2, %s8
    // Predicated region
    $region33: #{siglip_forward.20} parent=5 // pred_check
      %p759 = pneg %p758
    $region34: #{siglip_forward.20} parent=5 // pred_check_branch
      %761 = sbr.rel (%p759) target = $region36
    $region35: #{siglip_forward.20} parent=5 // pred_region
      %s762 = ssub.s32 %s8, 2
      // Predicated region
      $region37: #{siglip_forward.20} parent=35 // pred_check
        %p763 = pneg %p105
      $region38: #{siglip_forward.20} parent=35 // pred_check_branch
        %765 = sbr.rel (%p763) target = $region40
      $region39: #{siglip_forward.20} parent=35 // pred_region
        %s766 = smul.u32 2, %s20
        %p767 = scmp.lt.s32.totalorder %s19, 1
        %s768 = scalar_select %p767, %s19, 1
        %p769 = scmp.lt.s32.totalorder %s766, 1
        %s770 = scalar_select %p769, %s766, 1
        %s771 = smul.addr %s768, 2
        %s772 = sadd.s32 %s770, %s771
        %s773 = smul.addr %s772, 4
        %s774 = scalar_lea.vmem %s2, %s773
      $region40: #{siglip_forward.20} parent=35 // pred_fallthru
        _
    $region36: #{siglip_forward.20} parent=5 // pred_fallthru
      _
  $region6: #{siglip_forward.20} parent=0 // loop_footer
    %s12 = sadd.s32 1, %s8
  $region7: #{siglip_forward.20} parent=0 // loop_footer_branch
    %7 = sbr.rel target = $region3
  $region8: #{siglip_forward.20} parent=0 // loop_exit
    _

// kernel: siglip_forward.23
$region0: #{siglip_forward.23}
  #allocation0 [shape = 'u32[]', space=smem, size = 0x4, offset = 0x4, fixed_abs, tag = 'smem constant byte address 0x4 - core index']
  #allocation1 [shape = 'u32[144,128]{1,0:T(1,128)}', space=vmem, size = 0x12000, scoped, tag = 'internal scratch']
  %s0 = inlined_call_operand.vmem [shape: bf16[32,128], index: 0, kind: input, shape index: {}]
  %s1 = inlined_call_operand.vmem [shape: bf16[128,32], index: 1, kind: input, shape index: {}]
  %s2 = inlined_call_operand.vmem [shape: f32[1,32], index: 2, kind: input, shape index: {}]
  %s3 = inlined_call_operand.vmem [shape: bf16[32,32], index: 3, kind: input, shape index: {}]
  %s4 = inlined_call_operand.vmem [shape: bf16[32,32], index: 4, kind: output, shape index: {}]
  %s5 = sld [smem:[#allocation0]]
  $region26: #{siglip_forward.23} parent=0
    _
  %s7 = ssub.s32 1, %s5
  %s8 = scalar_select 0, %s7, %s5
  // Predicated region
  $region2: #{siglip_forward.23} parent=0 // pred_check
    _
  $region3: #{siglip_forward.23} parent=0 // pred_check_branch
    %10 = sbr.rel (0) target = $region5
  $region4: #{siglip_forward.23} parent=0 // pred_region
    _
  $region5: #{siglip_forward.23} parent=0 // pred_fallthru
    _
  // Predicated region
  $region6: #{siglip_forward.23} parent=0 // pred_check
    _
  $region7: #{siglip_forward.23} parent=0 // pred_check_branch
    %12 = sbr.rel (0) target = $region9
  $region8: #{siglip_forward.23} parent=0 // pred_region
    _
  $region9: #{siglip_forward.23} parent=0 // pred_fallthru
    _
  // Predicated region
  $region10: #{siglip_forward.23} parent=0 // pred_check
    _
  $region11: #{siglip_forward.23} parent=0 // pred_check_branch
    %14 = sbr.rel (0) target = $region13
  $region12: #{siglip_forward.23} parent=0 // pred_region
    _
  $region13: #{siglip_forward.23} parent=0 // pred_fallthru
    _
  // Predicated region
  $region14: #{siglip_forward.23} parent=0 // pred_check
    _
  $region15: #{siglip_forward.23} parent=0 // pred_check_branch
    %16 = sbr.rel (0) target = $region17
  $region16: #{siglip_forward.23} parent=0 // pred_region
    _
  $region17: #{siglip_forward.23} parent=0 // pred_fallthru
    _
  %v18 = vld [vmem:[%s0] sm:$0xf]
  %v19 = vld [vmem:[%s0 + $0x4] sm:$0xf]
  %v20 = vld [vmem:[%s0 + $0x8] sm:$0xf]
  %v21 = vld [vmem:[%s0 + $0xc] sm:$0xf]
  %v22 = vld [vmem:[%s1] sm:$0xf]
  %v23 = vld [vmem:[%s1 + $0x4] sm:$0xf]
  %v24 = vld [vmem:[%s1 + $0x8] sm:$0xf]
  %v25 = vld [vmem:[%s1 + $0xc] sm:$0xf]
  %v26 = vld [vmem:[%s1 + $0x10] sm:$0xf]
  %v27 = vld [vmem:[%s1 + $0x14] sm:$0xf]
  %v28 = vld [vmem:[%s1 + $0x18] sm:$0xf]
  %v29 = vld [vmem:[%s1 + $0x1c] sm:$0xf]
  %v30 = vld [vmem:[%s1 + $0x20] sm:$0xf]
  %v31 = vld [vmem:[%s1 + $0x24] sm:$0xf]
  %v32 = vld [vmem:[%s1 + $0x28] sm:$0xf]
  %v33 = vld [vmem:[%s1 + $0x2c] sm:$0xf]
  %v34 = vld [vmem:[%s1 + $0x30] sm:$0xf]
  %v35 = vld [vmem:[%s1 + $0x34] sm:$0xf]
  %v36 = vld [vmem:[%s1 + $0x38] sm:$0xf]
  %v37 = vld [vmem:[%s1 + $0x3c] sm:$0xf]
  %v38 = vld [vmem:[%s2] sm:$0x1]
  %v40 = vlaneseq
  %v41 = vshrl.u32 %v40, 7
  %v42 = vsub.s32 0, %v41
  %v43 = vrot.slane %v38, %v42
  %v49 = vunpack.c.l.b16 %v18
  %v50 = vunpack.c.l.b16 %v19
  %v51 = vunpack.c.l.b16 %v20
  %v52 = vunpack.c.l.b16 %v21
  %v53 = vpack.c.b16 %v50, %v49
  %v54 = vpack.c.b16 %v52, %v51
  %v73 = vunpack.c.l.b16 %v22
  %v74 = vunpack.c.l.b16 %v23
  %v75 = vunpack.c.l.b16 %v24
  %v76 = vunpack.c.l.b16 %v25
  %v77 = vunpack.c.l.b16 %v26
  %v78 = vunpack.c.l.b16 %v27
  %v79 = vunpack.c.l.b16 %v28
  %v80 = vunpack.c.l.b16 %v29
  %v81 = vunpack.c.l.b16 %v30
  %v82 = vunpack.c.l.b16 %v31
  %v83 = vunpack.c.l.b16 %v32
  %v84 = vunpack.c.l.b16 %v33
  %v85 = vunpack.c.l.b16 %v34
  %v86 = vunpack.c.l.b16 %v35
  %v87 = vunpack.c.l.b16 %v36
  %v88 = vunpack.c.l.b16 %v37
  %v89 = vpack.c.b16 %v74, %v73
  %v90 = vpack.c.b16 %v76, %v75
  %v91 = vpack.c.b16 %v78, %v77
  %v92 = vpack.c.b16 %v80, %v79
  %v93 = vpack.c.b16 %v82, %v81
  %v94 = vpack.c.b16 %v84, %v83
  %v95 = vpack.c.b16 %v86, %v85
  %v96 = vpack.c.b16 %v88, %v87
  %105 = vmatprep.subr.bf16.mxu0 0
  %106 = vmatpush1.bf16.msra.mxu0 %v96
  %107 = vmatprep.subr.bf16.mxu0 0
  %108 = vmatpush1.bf16.msra.mxu0 %v95
  %109 = vmatprep.subr.bf16.mxu0 0
  %110 = vmatpush1.bf16.msra.mxu0 %v94
  %111 = vmatprep.subr.bf16.mxu0 0
  %112 = vmatpush1.bf16.msra.mxu0 %v93
  %113 = vmatprep.subr.bf16.mxu0 0
  %114 = vmatpush1.bf16.msra.mxu0 %v92
  %115 = vmatprep.subr.bf16.mxu0 0
  %116 = vmatpush1.bf16.msra.mxu0 %v91
  %117 = vmatprep.subr.bf16.mxu0 0
  %118 = vmatpush1.bf16.msra.mxu0 %v90
  %119 = vmatprep.subr.bf16.mxu0 0
  %120 = vmatpush1.bf16.msra.mxu0 %v89
  %121 = vmatprep.subr.bf16.mxu0 0
  %122 = vmatpush2.bf16.msra.mxu0 0
  %123 = vmatprep.subr.bf16.mxu0 0
  %124 = vmatpush2.bf16.msra.mxu0 0
  %125 = vmatprep.subr.bf16.mxu0 0
  %126 = vmatpush2.bf16.msra.mxu0 0
  %127 = vmatprep.subr.bf16.mxu0 0
  %128 = vmatpush2.bf16.msra.mxu0 0
  %129 = vmatprep.subr.bf16.mxu0 0
  %130 = vmatpush2.bf16.msra.mxu0 0
  %131 = vmatprep.subr.bf16.mxu0 0
  %132 = vmatpush2.bf16.msra.mxu0 0
  %133 = vmatprep.subr.bf16.mxu0 0
  %134 = vmatpush2.bf16.msra.mxu0 0
  %135 = vmatprep.subr.bf16.mxu0 0
  %136 = vmatpush2.bf16.msra.mxu0 0
  %137 = vmatprep.mubr.bf16.mxu0 0
  %138 = vmatmul.mubr.bf16.gmra.mxu0 %v53
  %v139 = vpop.f32.mrf.mxu0
  %v140 = vadd.f32 %v43, %v139
  %v141 = vpop.f32.mrf.mxu0
  %v142 = vpop.f32.mrf.mxu0
  %v143 = vadd.f32 %v43, %v142
  %v144 = vpop.f32.mrf.mxu0
  %145 = vmatprep.mubr.bf16.mxu0 0
  %146 = vmatmul.mubr.bf16.gmra.mxu0 %v54
  %v147 = vpop.f32.mrf.mxu0
  %v148 = vadd.f32 %v43, %v147
  %v149 = vpop.f32.mrf.mxu0
  %v150 = vpop.f32.mrf.mxu0
  %v151 = vadd.f32 %v43, %v150
  %v152 = vpop.f32.mrf.mxu0
  %153 = vdwg.mxu0
  %v154 = vld [vmem:[%s3] sm:$0xf]
  %v155 = vld [vmem:[%s3 + $0x4] sm:$0xf]
  %v156 = vld [vmem:[%s3 + $0x8] sm:$0xf]
  %v157 = vld [vmem:[%s3 + $0xc] sm:$0xf]
  %v158 = vunpack.c.l.bf16 %v154
  %v159 = vunpack.c.l.bf16 %v155
  %v160 = vunpack.c.l.bf16 %v156
  %v161 = vunpack.c.l.bf16 %v157
  %v162 = vadd.f32 %v140, %v158
  %v163 = vadd.f32 %v143, %v159
  %v164 = vadd.f32 %v148, %v160
  %v165 = vadd.f32 %v151, %v161
  %v166 = vpack.c.bf16 %v163, %v162
  %v167 = vpack.c.bf16 %v165, %v164
  %v170 = vunpack.c.l.b16 %v166
  %v171 = vunpack.c.h.b16 %v166
  %v172 = vunpack.c.l.b16 %v167
  %v173 = vunpack.c.h.b16 %v167
  %v174 = vpack.c.b16 %v170, %v170
  %v175 = vpack.c.b16 %v171, %v171
  %v176 = vpack.c.b16 %v172, %v172
  %v177 = vpack.c.b16 %v173, %v173
  %vm182 = vcmask 257024
  %183 = vst.msk [vmem:[%s4] sm:$0xf] %vm182, %v174
  %184 = vst.msk [vmem:[%s4 + $0x4] sm:$0xf] %vm182, %v175
  %185 = vst.msk [vmem:[%s4 + $0x8] sm:$0xf] %vm182, %v176
  %186 = vst.msk [vmem:[%s4 + $0xc] sm:$0xf] %vm182, %v177
  // Predicated region
  $region18: #{siglip_forward.23} parent=0 // pred_check
    _
  $region19: #{siglip_forward.23} parent=0 // pred_check_branch
    %188 = sbr.rel (0) target = $region21
  $region20: #{siglip_forward.23} parent=0 // pred_region
    _
  $region21: #{siglip_forward.23} parent=0 // pred_fallthru
    _
  // Predicated region
  $region22: #{siglip_forward.23} parent=0 // pred_check
    _
  $region23: #{siglip_forward.23} parent=0 // pred_check_branch
    %190 = sbr.rel (0) target = $region25
  $region24: #{siglip_forward.23} parent=0 // pred_region
    _
  $region25: #{siglip_forward.23} parent=0 // pred_fallthru
    _

// kernel: siglip_forward.29
$region0: #{siglip_forward.29}
  #allocation0 [shape = 'u32[]', space=smem, size = 0x4, offset = 0x4, fixed_abs, tag = 'smem constant byte address 0x4 - core index']
  #allocation1 [shape = 'u32[144,128]{1,0:T(1,128)}', space=vmem, size = 0x12000, scoped, tag = 'internal scratch']
  %s0 = inlined_call_operand.vmem [shape: bf16[32,32], index: 0, kind: input, shape index: {}]
  %s1 = inlined_call_operand.vmem [shape: f32[1,32], index: 1, kind: input, shape index: {}]
  %s2 = inlined_call_operand.vmem [shape: f32[1,32], index: 2, kind: input, shape index: {}]
  %s3 = inlined_call_operand.vmem [shape: f32[32,32], index: 3, kind: output, shape index: {}]
  %s4 = sld [smem:[#allocation0]]
  $region22: #{siglip_forward.29} parent=0
    _
  %s6 = ssub.s32 1, %s4
  %s7 = scalar_select 0, %s6, %s4
  // Predicated region
  $region2: #{siglip_forward.29} parent=0 // pred_check
    _
  $region3: #{siglip_forward.29} parent=0 // pred_check_branch
    %9 = sbr.rel (0) target = $region5
  $region4: #{siglip_forward.29} parent=0 // pred_region
    _
  $region5: #{siglip_forward.29} parent=0 // pred_fallthru
    _
  // Predicated region
  $region6: #{siglip_forward.29} parent=0 // pred_check
    _
  $region7: #{siglip_forward.29} parent=0 // pred_check_branch
    %11 = sbr.rel (0) target = $region9
  $region8: #{siglip_forward.29} parent=0 // pred_region
    _
  $region9: #{siglip_forward.29} parent=0 // pred_fallthru
    _
  // Predicated region
  $region10: #{siglip_forward.29} parent=0 // pred_check
    _
  $region11: #{siglip_forward.29} parent=0 // pred_check_branch
    %13 = sbr.rel (0) target = $region13
  $region12: #{siglip_forward.29} parent=0 // pred_region
    _
  $region13: #{siglip_forward.29} parent=0 // pred_fallthru
    _
  %v14 = vld [vmem:[%s0] sm:$0xf]
  %v15 = vld [vmem:[%s0 + $0x4] sm:$0xf]
  %v16 = vld [vmem:[%s0 + $0x8] sm:$0xf]
  %v17 = vld [vmem:[%s0 + $0xc] sm:$0xf]
  %v18 = vunpack.c.l.bf16 %v14
  %v19 = vunpack.c.l.bf16 %v15
  %v20 = vunpack.c.l.bf16 %v16
  %v21 = vunpack.c.l.bf16 %v17
  %vm22 = vcmask 261120
  %v23 = vsel %vm22, %v18, 0.0
  %24 = vadd.xlane.f32.xlu0 %v23
  %v25 = vpop.xlane.xlu0 %24
  %v26 = vsel %vm22, %v19, 0.0
  %27 = vadd.xlane.f32.xlu0 %v26
  %v28 = vpop.xlane.xlu0 %27
  %v29 = vsel %vm22, %v20, 0.0
  %30 = vadd.xlane.f32.xlu0 %v29
  %v31 = vpop.xlane.xlu0 %30
  %v32 = vsel %vm22, %v21, 0.0
  %33 = vadd.xlane.f32.xlu0 %v32
  %v34 = vpop.xlane.xlu0 %33
  %v35 = vrcp.pop 32.0
  %v36 = vmul.f32 %v25, %v35
  %v37 = vmul.f32 %v28, %v35
  %v38 = vmul.f32 %v31, %v35
  %v39 = vmul.f32 %v34, %v35
  %v40 = vsub.f32 %v18, %v36
  %v41 = vsub.f32 %v19, %v37
  %v42 = vsub.f32 %v20, %v38
  %v43 = vsub.f32 %v21, %v39
  %v44 = vmul.f32 %v40, %v40
  %v45 = vmul.f32 %v41, %v41
  %v46 = vmul.f32 %v42, %v42
  %v47 = vmul.f32 %v43, %v43
  %v48 = vsel %vm22, %v44, 0.0
  %49 = vadd.xlane.f32.xlu0 %v48
  %v50 = vpop.xlane.xlu0 %49
  %v51 = vsel %vm22, %v45, 0.0
  %52 = vadd.xlane.f32.xlu0 %v51
  %v53 = vpop.xlane.xlu0 %52
  %v54 = vsel %vm22, %v46, 0.0
  %55 = vadd.xlane.f32.xlu0 %v54
  %v56 = vpop.xlane.xlu0 %55
  %v57 = vsel %vm22, %v47, 0.0
  %58 = vadd.xlane.f32.xlu0 %v57
  %v59 = vpop.xlane.xlu0 %58
  %v60 = vmul.f32 %v50, %v35
  %v61 = vmul.f32 %v53, %v35
  %v62 = vmul.f32 %v56, %v35
  %v63 = vmul.f32 %v59, %v35
  %v64 = vadd.f32 %v60, 1e-06
  %v65 = vadd.f32 %v61, 1e-06
  %v66 = vadd.f32 %v62, 1e-06
  %v67 = vadd.f32 %v63, 1e-06
  %v68 = vrsqrt.pop %v64
  %v69 = vrsqrt.pop %v65
  %v70 = vrsqrt.pop %v66
  %v71 = vrsqrt.pop %v67
  %v72 = vmul.f32 %v40, %v68
  %v73 = vmul.f32 %v41, %v69
  %v74 = vmul.f32 %v42, %v70
  %v75 = vmul.f32 %v43, %v71
  %v76 = vld [vmem:[%s1] sm:$0x1]
  %v78 = vlaneseq
  %v79 = vshrl.u32 %v78, 7
  %v80 = vsub.s32 0, %v79
  %v81 = vrot.slane %v76, %v80
  %v83 = vmul.f32 %v72, %v81
  %v84 = vmul.f32 %v73, %v81
  %v85 = vmul.f32 %v74, %v81
  %v86 = vmul.f32 %v75, %v81
  %v87 = vld [vmem:[%s2] sm:$0x1]
  %v89 = vlaneseq
  %v90 = vshrl.u32 %v89, 7
  %v91 = vsub.s32 0, %v90
  %v92 = vrot.slane %v87, %v91
  %v94 = vadd.f32 %v83, %v92
  %v95 = vadd.f32 %v84, %v92
  %v96 = vadd.f32 %v85, %v92
  %v97 = vadd.f32 %v86, %v92
  %98 = vst.msk [vmem:[%s3] sm:$0xff] %vm22, %v94
  %99 = vst.msk [vmem:[%s3 + $0x8] sm:$0xff] %vm22, %v95
  %100 = vst.msk [vmem:[%s3 + $0x10] sm:$0xff] %vm22, %v96
  %101 = vst.msk [vmem:[%s3 + $0x18] sm:$0xff] %vm22, %v97
  // Predicated region
  $region14: #{siglip_forward.29} parent=0 // pred_check
    _
  $region15: #{siglip_forward.29} parent=0 // pred_check_branch
    %103 = sbr.rel (0) target = $region17
  $region16: #{siglip_forward.29} parent=0 // pred_region
    _
  $region17: #{siglip_forward.29} parent=0 // pred_fallthru
    _
  // Predicated region
  $region18: #{siglip_forward.29} parent=0 // pred_check
    _
  $region19: #{siglip_forward.29} parent=0 // pred_check_branch
    %105 = sbr.rel (0) target = $region21
  $region20: #{siglip_forward.29} parent=0 // pred_region
    _
  $region21: #{siglip_forward.29} parent=0 // pred_fallthru
    _

// kernel: siglip_forward.22
$region0: #{siglip_forward.22}
  #allocation0 [shape = 'u32[]', space=smem, size = 0x4, offset = 0x4, fixed_abs, tag = 'smem constant byte address 0x4 - core index']
  #allocation1 [shape = 'u32[144,128]{1,0:T(1,128)}', space=vmem, size = 0x12000, scoped, tag = 'internal scratch']
  %s0 = inlined_call_operand.vmem [shape: bf16[32,32], index: 0, kind: input, shape index: {}]
  %s1 = inlined_call_operand.vmem [shape: bf16[32,128], index: 1, kind: input, shape index: {}]
  %s2 = inlined_call_operand.vmem [shape: f32[1,128], index: 2, kind: input, shape index: {}]
  %s3 = inlined_call_operand.vmem [shape: f32[1,32], index: 3, kind: input, shape index: {}]
  %s4 = inlined_call_operand.vmem [shape: f32[1,32], index: 4, kind: input, shape index: {}]
  %s5 = inlined_call_operand.vmem [shape: bf16[32,128], index: 5, kind: output, shape index: {}]
  %s6 = sld [smem:[#allocation0]]
  $region30: #{siglip_forward.22} parent=0
    _
  %s8 = ssub.s32 1, %s6
  %s9 = scalar_select 0, %s8, %s6
  // Predicated region
  $region2: #{siglip_forward.22} parent=0 // pred_check
    _
  $region3: #{siglip_forward.22} parent=0 // pred_check_branch
    %11 = sbr.rel (0) target = $region5
  $region4: #{siglip_forward.22} parent=0 // pred_region
    _
  $region5: #{siglip_forward.22} parent=0 // pred_fallthru
    _
  // Predicated region
  $region6: #{siglip_forward.22} parent=0 // pred_check
    _
  $region7: #{siglip_forward.22} parent=0 // pred_check_branch
    %13 = sbr.rel (0) target = $region9
  $region8: #{siglip_forward.22} parent=0 // pred_region
    _
  $region9: #{siglip_forward.22} parent=0 // pred_fallthru
    _
  // Predicated region
  $region10: #{siglip_forward.22} parent=0 // pred_check
    _
  $region11: #{siglip_forward.22} parent=0 // pred_check_branch
    %15 = sbr.rel (0) target = $region13
  $region12: #{siglip_forward.22} parent=0 // pred_region
    _
  $region13: #{siglip_forward.22} parent=0 // pred_fallthru
    _
  // Predicated region
  $region14: #{siglip_forward.22} parent=0 // pred_check
    _
  $region15: #{siglip_forward.22} parent=0 // pred_check_branch
    %17 = sbr.rel (0) target = $region17
  $region16: #{siglip_forward.22} parent=0 // pred_region
    _
  $region17: #{siglip_forward.22} parent=0 // pred_fallthru
    _
  // Predicated region
  $region18: #{siglip_forward.22} parent=0 // pred_check
    _
  $region19: #{siglip_forward.22} parent=0 // pred_check_branch
    %19 = sbr.rel (0) target = $region21
  $region20: #{siglip_forward.22} parent=0 // pred_region
    _
  $region21: #{siglip_forward.22} parent=0 // pred_fallthru
    _
  %v21 = vld [vmem:[%s0] sm:$0xf]
  %v22 = vld [vmem:[%s0 + $0x4] sm:$0xf]
  %v23 = vld [vmem:[%s0 + $0x8] sm:$0xf]
  %v24 = vld [vmem:[%s0 + $0xc] sm:$0xf]
  %v25 = vunpack.c.l.bf16 %v21
  %v26 = vunpack.c.l.bf16 %v22
  %v27 = vunpack.c.l.bf16 %v23
  %v28 = vunpack.c.l.bf16 %v24
  %vm29 = vcmask 261120
  %v30 = vsel %vm29, %v25, 0.0
  %31 = vadd.xlane.f32.xlu0 %v30
  %v32 = vpop.xlane.xlu0 %31
  %v33 = vsel %vm29, %v26, 0.0
  %34 = vadd.xlane.f32.xlu0 %v33
  %v35 = vpop.xlane.xlu0 %34
  %v36 = vsel %vm29, %v27, 0.0
  %37 = vadd.xlane.f32.xlu0 %v36
  %v38 = vpop.xlane.xlu0 %37
  %v39 = vsel %vm29, %v28, 0.0
  %40 = vadd.xlane.f32.xlu0 %v39
  %v41 = vpop.xlane.xlu0 %40
  %v42 = vrcp.pop 32.0
  %v43 = vmul.f32 %v32, %v42
  %v44 = vmul.f32 %v35, %v42
  %v45 = vmul.f32 %v38, %v42
  %v46 = vmul.f32 %v41, %v42
  %v47 = vsub.f32 %v25, %v43
  %v48 = vsub.f32 %v26, %v44
  %v49 = vsub.f32 %v27, %v45
  %v50 = vsub.f32 %v28, %v46
  %v51 = vmul.f32 %v47, %v47
  %v52 = vmul.f32 %v48, %v48
  %v53 = vmul.f32 %v49, %v49
  %v54 = vmul.f32 %v50, %v50
  %v55 = vsel %vm29, %v51, 0.0
  %56 = vadd.xlane.f32.xlu0 %v55
  %v57 = vpop.xlane.xlu0 %56
  %v58 = vsel %vm29, %v52, 0.0
  %59 = vadd.xlane.f32.xlu0 %v58
  %v60 = vpop.xlane.xlu0 %59
  %v61 = vsel %vm29, %v53, 0.0
  %62 = vadd.xlane.f32.xlu0 %v61
  %v63 = vpop.xlane.xlu0 %62
  %v64 = vsel %vm29, %v54, 0.0
  %65 = vadd.xlane.f32.xlu0 %v64
  %v66 = vpop.xlane.xlu0 %65
  %v67 = vmul.f32 %v57, %v42
  %v68 = vmul.f32 %v60, %v42
  %v69 = vmul.f32 %v63, %v42
  %v70 = vmul.f32 %v66, %v42
  %v71 = vadd.f32 %v67, 1e-06
  %v72 = vadd.f32 %v68, 1e-06
  %v73 = vadd.f32 %v69, 1e-06
  %v74 = vadd.f32 %v70, 1e-06
  %v75 = vrsqrt.pop %v71
  %v76 = vrsqrt.pop %v72
  %v77 = vrsqrt.pop %v73
  %v78 = vrsqrt.pop %v74
  %v79 = vmul.f32 %v47, %v75
  %v80 = vmul.f32 %v48, %v76
  %v81 = vmul.f32 %v49, %v77
  %v82 = vmul.f32 %v50, %v78
  %v83 = vld [vmem:[%s3] sm:$0x1]
  %v85 = vlaneseq
  %v86 = vshrl.u32 %v85, 7
  %v87 = vsub.s32 0, %v86
  %v88 = vrot.slane %v83, %v87
  %v90 = vmul.f32 %v79, %v88
  %v91 = vmul.f32 %v80, %v88
  %v92 = vmul.f32 %v81, %v88
  %v93 = vmul.f32 %v82, %v88
  %v94 = vld [vmem:[%s4] sm:$0x1]
  %v96 = vlaneseq
  %v97 = vshrl.u32 %v96, 7
  %v98 = vsub.s32 0, %v97
  %v99 = vrot.slane %v94, %v98
  %v101 = vadd.f32 %v90, %v99
  %v102 = vadd.f32 %v91, %v99
  %v103 = vadd.f32 %v92, %v99
  %v104 = vadd.f32 %v93, %v99
  %v105 = vpack.c.bf16 %v102, %v101
  %v106 = vpack.c.bf16 %v104, %v103
  %v107 = vld [vmem:[%s1] sm:$0xf]
  %v108 = vld [vmem:[%s1 + $0x4] sm:$0xf]
  %v109 = vld [vmem:[%s1 + $0x8] sm:$0xf]
  %v110 = vld [vmem:[%s1 + $0xc] sm:$0xf]
  %v111 = vld [vmem:[%s2] sm:$0x1]
  %v113 = vlaneseq
  %v114 = vshrl.u32 %v113, 7
  %v115 = vsub.s32 0, %v114
  %v116 = vrot.slane %v111, %v115
  %v122 = vunpack.c.l.b16 %v107
  %v123 = vunpack.c.l.b16 %v108
  %v124 = vunpack.c.l.b16 %v109
  %v125 = vunpack.c.l.b16 %v110
  %v126 = vpack.c.b16 %v123, %v122
  %v127 = vpack.c.b16 %v125, %v124
  %v131 = vsel %vm29, %v105, 0
  %v134 = vsel %vm29, %v106, 0
  %136 = vmatprep.subr.bf16.mxu0 0
  %137 = vmatpush1.bf16.msra.mxu0 0
  %138 = vmatprep.subr.bf16.mxu0 0
  %139 = vmatpush1.bf16.msra.mxu0 0
  %140 = vmatprep.subr.bf16.mxu0 0
  %141 = vmatpush1.bf16.msra.mxu0 0
  %142 = vmatprep.subr.bf16.mxu0 0
  %143 = vmatpush1.bf16.msra.mxu0 0
  %144 = vmatprep.subr.bf16.mxu0 0
  %145 = vmatpush1.bf16.msra.mxu0 0
  %146 = vmatprep.subr.bf16.mxu0 0
  %147 = vmatpush1.bf16.msra.mxu0 0
  %148 = vmatprep.subr.bf16.mxu0 0
  %149 = vmatpush1.bf16.msra.mxu0 %v127
  %150 = vmatprep.subr.bf16.mxu0 0
  %151 = vmatpush1.bf16.msra.mxu0 %v126
  %152 = vmatprep.subr.bf16.mxu0 0
  %153 = vmatpush2.bf16.msra.mxu0 0
  %154 = vmatprep.subr.bf16.mxu0 0
  %155 = vmatpush2.bf16.msra.mxu0 0
  %156 = vmatprep.subr.bf16.mxu0 0
  %157 = vmatpush2.bf16.msra.mxu0 0
  %158 = vmatprep.subr.bf16.mxu0 0
  %159 = vmatpush2.bf16.msra.mxu0 0
  %160 = vmatprep.subr.bf16.mxu0 0
  %161 = vmatpush2.bf16.msra.mxu0 0
  %162 = vmatprep.subr.bf16.mxu0 0
  %163 = vmatpush2.bf16.msra.mxu0 0
  %164 = vmatprep.subr.bf16.mxu0 0
  %165 = vmatpush2.bf16.msra.mxu0 0
  %166 = vmatprep.subr.bf16.mxu0 0
  %167 = vmatpush2.bf16.msra.mxu0 0
  %168 = vmatprep.mubr.bf16.mxu0 0
  %169 = vmatmul.mubr.bf16.gmra.mxu0 %v131
  %v170 = vpop.f32.mrf.mxu0
  %v171 = vadd.f32 %v116, %v170
  %v172 = vpop.f32.mrf.mxu0
  %v173 = vpop.f32.mrf.mxu0
  %v174 = vadd.f32 %v116, %v173
  %v175 = vpop.f32.mrf.mxu0
  %176 = vmatprep.mubr.bf16.mxu0 0
  %177 = vmatmul.mubr.bf16.gmra.mxu0 %v134
  %v178 = vpop.f32.mrf.mxu0
  %v179 = vadd.f32 %v116, %v178
  %v180 = vpop.f32.mrf.mxu0
  %v181 = vpop.f32.mrf.mxu0
  %v182 = vadd.f32 %v116, %v181
  %v183 = vpop.f32.mrf.mxu0
  %184 = vdwg.mxu0
  %v185 = vmul.f32 %v171, 0.5
  %v186 = vmul.f32 %v174, 0.5
  %v187 = vmul.f32 %v179, 0.5
  %v188 = vmul.f32 %v182, 0.5
  %v189 = vmul.f32 %v171, 0.044715
  %v190 = vmul.f32 %v174, 0.044715
  %v191 = vmul.f32 %v179, 0.044715
  %v192 = vmul.f32 %v182, 0.044715
  %v193 = vmul.f32 %v189, %v171
  %v194 = vmul.f32 %v190, %v174
  %v195 = vmul.f32 %v191, %v179
  %v196 = vmul.f32 %v192, %v182
  %v197 = vmul.f32 %v193, %v171
  %v198 = vmul.f32 %v194, %v174
  %v199 = vmul.f32 %v195, %v179
  %v200 = vmul.f32 %v196, %v182
  %v201 = vadd.f32 %v171, %v197
  %v202 = vadd.f32 %v174, %v198
  %v203 = vadd.f32 %v179, %v199
  %v204 = vadd.f32 %v182, %v200
  %v205 = vmul.f32 %v201, 0.7978846
  %v206 = vmul.f32 %v202, 0.7978846
  %v207 = vmul.f32 %v203, 0.7978846
  %v208 = vmul.f32 %v204, 0.7978846
  %v209 = vtanh.pop %v205
  %v210 = vtanh.pop %v206
  %v211 = vtanh.pop %v207
  %v212 = vtanh.pop %v208
  %v213 = vadd.f32 %v209, 1.0
  %v214 = vadd.f32 %v210, 1.0
  %v215 = vadd.f32 %v211, 1.0
  %v216 = vadd.f32 %v212, 1.0
  %v217 = vmul.f32 %v185, %v213
  %v218 = vmul.f32 %v186, %v214
  %v219 = vmul.f32 %v187, %v215
  %v220 = vmul.f32 %v188, %v216
  %v221 = vpack.c.bf16 %v218, %v217
  %v222 = vpack.c.bf16 %v220, %v219
  %v225 = vunpack.c.l.b16 %v221
  %v226 = vunpack.c.h.b16 %v221
  %v227 = vunpack.c.l.b16 %v222
  %v228 = vunpack.c.h.b16 %v222
  %v229 = vpack.c.b16 %v225, %v225
  %v230 = vpack.c.b16 %v226, %v226
  %v231 = vpack.c.b16 %v227, %v227
  %v232 = vpack.c.b16 %v228, %v228
  %237 = vst [vmem:[%s5] sm:$0xf] %v229
  %238 = vst [vmem:[%s5 + $0x4] sm:$0xf] %v230
  %239 = vst [vmem:[%s5 + $0x8] sm:$0xf] %v231
  %240 = vst [vmem:[%s5 + $0xc] sm:$0xf] %v232
  // Predicated region
  $region22: #{siglip_forward.22} parent=0 // pred_check
    _
  $region23: #{siglip_forward.22} parent=0 // pred_check_branch
    %242 = sbr.rel (0) target = $region25
  $region24: #{siglip_forward.22} parent=0 // pred_region
    _
  $region25: #{siglip_forward.22} parent=0 // pred_fallthru
    _
  // Predicated region
  $region26: #{siglip_forward.22} parent=0 // pred_check
    _
  $region27: #{siglip_forward.22} parent=0 // pred_check_branch
    %244 = sbr.rel (0) target = $region29
  $region28: #{siglip_forward.22} parent=0 // pred_region
    _
  $region29: #{siglip_forward.22} parent=0 // pred_fallthru
    _

// kernel: siglip_forward.31
$region0: #{siglip_forward.31}
  #allocation0 [shape = 'u32[]', space=smem, size = 0x4, offset = 0x4, fixed_abs, tag = 'smem constant byte address 0x4 - core index']
  #allocation1 [shape = 'u32[144,128]{1,0:T(1,128)}', space=vmem, size = 0x12000, scoped, tag = 'internal scratch']
  %s0 = inlined_call_operand.vmem [shape: f32[32,32], index: 0, kind: input, shape index: {}]
  %s1 = inlined_call_operand.vmem [shape: bf16[32,64], index: 1, kind: input, shape index: {}]
  %s2 = inlined_call_operand.vmem [shape: f32[1,64], index: 2, kind: input, shape index: {}]
  %s3 = inlined_call_operand.vmem [shape: bf16[32,64], index: 3, kind: output, shape index: {}]
  %s4 = sld [smem:[#allocation0]]
  $region22: #{siglip_forward.31} parent=0
    _
  %s6 = ssub.s32 1, %s4
  %s7 = scalar_select 0, %s6, %s4
  // Predicated region
  $region2: #{siglip_forward.31} parent=0 // pred_check
    _
  $region3: #{siglip_forward.31} parent=0 // pred_check_branch
    %9 = sbr.rel (0) target = $region5
  $region4: #{siglip_forward.31} parent=0 // pred_region
    _
  $region5: #{siglip_forward.31} parent=0 // pred_fallthru
    _
  // Predicated region
  $region6: #{siglip_forward.31} parent=0 // pred_check
    _
  $region7: #{siglip_forward.31} parent=0 // pred_check_branch
    %11 = sbr.rel (0) target = $region9
  $region8: #{siglip_forward.31} parent=0 // pred_region
    _
  $region9: #{siglip_forward.31} parent=0 // pred_fallthru
    _
  // Predicated region
  $region10: #{siglip_forward.31} parent=0 // pred_check
    _
  $region11: #{siglip_forward.31} parent=0 // pred_check_branch
    %13 = sbr.rel (0) target = $region13
  $region12: #{siglip_forward.31} parent=0 // pred_region
    _
  $region13: #{siglip_forward.31} parent=0 // pred_fallthru
    _
  %v15 = vld [vmem:[%s0] sm:$0xff]
  %v16 = vld [vmem:[%s0 + $0x8] sm:$0xff]
  %v17 = vld [vmem:[%s0 + $0x10] sm:$0xff]
  %v18 = vld [vmem:[%s0 + $0x18] sm:$0xff]
  %v19 = vpack.c.bf16 %v16, %v15
  %v20 = vpack.c.bf16 %v18, %v17
  %v21 = vld [vmem:[%s1] sm:$0xf]
  %v22 = vld [vmem:[%s1 + $0x4] sm:$0xf]
  %v23 = vld [vmem:[%s1 + $0x8] sm:$0xf]
  %v24 = vld [vmem:[%s1 + $0xc] sm:$0xf]
  %v25 = vld [vmem:[%s2] sm:$0x1]
  %v27 = vlaneseq
  %v28 = vshrl.u32 %v27, 7
  %v29 = vsub.s32 0, %v28
  %v30 = vrot.slane %v25, %v29
  %v36 = vunpack.c.l.b16 %v21
  %v37 = vunpack.c.l.b16 %v22
  %v38 = vunpack.c.l.b16 %v23
  %v39 = vunpack.c.l.b16 %v24
  %v40 = vpack.c.b16 %v37, %v36
  %v41 = vpack.c.b16 %v39, %v38
  %vm44 = vcmask 261120
  %v46 = vsel %vm44, %v19, 0
  %v49 = vsel %vm44, %v20, 0
  %51 = vmatprep.subr.bf16.mxu0 0
  %52 = vmatpush1.bf16.msra.mxu0 0
  %53 = vmatprep.subr.bf16.mxu0 0
  %54 = vmatpush1.bf16.msra.mxu0 0
  %55 = vmatprep.subr.bf16.mxu0 0
  %56 = vmatpush1.bf16.msra.mxu0 0
  %57 = vmatprep.subr.bf16.mxu0 0
  %58 = vmatpush1.bf16.msra.mxu0 0
  %59 = vmatprep.subr.bf16.mxu0 0
  %60 = vmatpush1.bf16.msra.mxu0 0
  %61 = vmatprep.subr.bf16.mxu0 0
  %62 = vmatpush1.bf16.msra.mxu0 0
  %63 = vmatprep.subr.bf16.mxu0 0
  %64 = vmatpush1.bf16.msra.mxu0 %v41
  %65 = vmatprep.subr.bf16.mxu0 0
  %66 = vmatpush1.bf16.msra.mxu0 %v40
  %67 = vmatprep.subr.bf16.mxu0 0
  %68 = vmatpush2.bf16.msra.mxu0 0
  %69 = vmatprep.subr.bf16.mxu0 0
  %70 = vmatpush2.bf16.msra.mxu0 0
  %71 = vmatprep.subr.bf16.mxu0 0
  %72 = vmatpush2.bf16.msra.mxu0 0
  %73 = vmatprep.subr.bf16.mxu0 0
  %74 = vmatpush2.bf16.msra.mxu0 0
  %75 = vmatprep.subr.bf16.mxu0 0
  %76 = vmatpush2.bf16.msra.mxu0 0
  %77 = vmatprep.subr.bf16.mxu0 0
  %78 = vmatpush2.bf16.msra.mxu0 0
  %79 = vmatprep.subr.bf16.mxu0 0
  %80 = vmatpush2.bf16.msra.mxu0 0
  %81 = vmatprep.subr.bf16.mxu0 0
  %82 = vmatpush2.bf16.msra.mxu0 0
  %83 = vmatprep.mubr.bf16.mxu0 0
  %84 = vmatmul.mubr.bf16.gmra.mxu0 %v46
  %v85 = vpop.f32.mrf.mxu0
  %v86 = vadd.f32 %v30, %v85
  %v87 = vpop.f32.mrf.mxu0
  %v88 = vpop.f32.mrf.mxu0
  %v89 = vadd.f32 %v30, %v88
  %v90 = vpop.f32.mrf.mxu0
  %91 = vmatprep.mubr.bf16.mxu0 0
  %92 = vmatmul.mubr.bf16.gmra.mxu0 %v49
  %v93 = vpop.f32.mrf.mxu0
  %v94 = vadd.f32 %v30, %v93
  %v95 = vpop.f32.mrf.mxu0
  %v96 = vpop.f32.mrf.mxu0
  %v97 = vadd.f32 %v30, %v96
  %v98 = vpop.f32.mrf.mxu0
  %99 = vdwg.mxu0
  %v100 = vpack.c.bf16 %v89, %v86
  %v101 = vpack.c.bf16 %v97, %v94
  %v104 = vunpack.c.l.b16 %v100
  %v105 = vunpack.c.h.b16 %v100
  %v106 = vunpack.c.l.b16 %v101
  %v107 = vunpack.c.h.b16 %v101
  %v108 = vpack.c.b16 %v104, %v104
  %v109 = vpack.c.b16 %v105, %v105
  %v110 = vpack.c.b16 %v106, %v106
  %v111 = vpack.c.b16 %v107, %v107
  %vm116 = vcmask 519168
  %117 = vst.msk [vmem:[%s3] sm:$0xf] %vm116, %v108
  %118 = vst.msk [vmem:[%s3 + $0x4] sm:$0xf] %vm116, %v109
  %119 = vst.msk [vmem:[%s3 + $0x8] sm:$0xf] %vm116, %v110
  %120 = vst.msk [vmem:[%s3 + $0xc] sm:$0xf] %vm116, %v111
  // Predicated region
  $region14: #{siglip_forward.31} parent=0 // pred_check
    _
  $region15: #{siglip_forward.31} parent=0 // pred_check_branch
    %122 = sbr.rel (0) target = $region17
  $region16: #{siglip_forward.31} parent=0 // pred_region
    _
  $region17: #{siglip_forward.31} parent=0 // pred_fallthru
    _
  // Predicated region
  $region18: #{siglip_forward.31} parent=0 // pred_check
    _
  $region19: #{siglip_forward.31} parent=0 // pred_check_branch
    %124 = sbr.rel (0) target = $region21
  $region20: #{siglip_forward.31} parent=0 // pred_region
    _
  $region21: #{siglip_forward.31} parent=0 // pred_fallthru
    _

// kernel: siglip_forward.30
$region0: #{siglip_forward.30}
  #allocation0 [shape = 'u32[]', space=smem, size = 0x4, offset = 0x4, fixed_abs, tag = 'smem constant byte address 0x4 - core index']
  #allocation1 [shape = 'u32[144,128]{1,0:T(1,128)}', space=vmem, size = 0x12000, scoped, tag = 'internal scratch']
  %s0 = inlined_call_operand.vmem [shape: bf16[1,32], index: 0, kind: input, shape index: {}]
  %s1 = inlined_call_operand.vmem [shape: bf16[32,32], index: 1, kind: input, shape index: {}]
  %s2 = inlined_call_operand.vmem [shape: f32[1,32], index: 2, kind: input, shape index: {}]
  %s3 = inlined_call_operand.vmem [shape: bf16[1,32], index: 3, kind: output, shape index: {}]
  %s4 = sld [smem:[#allocation0]]
  $region22: #{siglip_forward.30} parent=0
    _
  %s6 = ssub.s32 1, %s4
  %s7 = scalar_select 0, %s6, %s4
  // Predicated region
  $region2: #{siglip_forward.30} parent=0 // pred_check
    _
  $region3: #{siglip_forward.30} parent=0 // pred_check_branch
    %9 = sbr.rel (0) target = $region5
  $region4: #{siglip_forward.30} parent=0 // pred_region
    _
  $region5: #{siglip_forward.30} parent=0 // pred_fallthru
    _
  // Predicated region
  $region6: #{siglip_forward.30} parent=0 // pred_check
    _
  $region7: #{siglip_forward.30} parent=0 // pred_check_branch
    %11 = sbr.rel (0) target = $region9
  $region8: #{siglip_forward.30} parent=0 // pred_region
    _
  $region9: #{siglip_forward.30} parent=0 // pred_fallthru
    _
  // Predicated region
  $region10: #{siglip_forward.30} parent=0 // pred_check
    _
  $region11: #{siglip_forward.30} parent=0 // pred_check_branch
    %13 = sbr.rel (0) target = $region13
  $region12: #{siglip_forward.30} parent=0 // pred_region
    _
  $region13: #{siglip_forward.30} parent=0 // pred_fallthru
    _
  %v15 = vld [vmem:[%s0] sm:$0x1]
  %v16 = vld [vmem:[%s1] sm:$0xf]
  %v17 = vld [vmem:[%s1 + $0x4] sm:$0xf]
  %v18 = vld [vmem:[%s1 + $0x8] sm:$0xf]
  %v19 = vld [vmem:[%s1 + $0xc] sm:$0xf]
  %v20 = vld [vmem:[%s2] sm:$0x1]
  %v25 = vunpack.c.l.b16 %v16
  %v26 = vunpack.c.l.b16 %v17
  %v27 = vunpack.c.l.b16 %v18
  %v28 = vunpack.c.l.b16 %v19
  %v29 = vpack.c.b16 %v26, %v25
  %v30 = vpack.c.b16 %v28, %v27
  %vm33 = vcmask 261120
  %v35 = vsel %vm33, %v15, 0
  %37 = vmatprep.subr.bf16.mxu0 0
  %38 = vmatpush1.bf16.msra.mxu0 0
  %39 = vmatprep.subr.bf16.mxu0 0
  %40 = vmatpush1.bf16.msra.mxu0 0
  %41 = vmatprep.subr.bf16.mxu0 0
  %42 = vmatpush1.bf16.msra.mxu0 0
  %43 = vmatprep.subr.bf16.mxu0 0
  %44 = vmatpush1.bf16.msra.mxu0 0
  %45 = vmatprep.subr.bf16.mxu0 0
  %46 = vmatpush1.bf16.msra.mxu0 0
  %47 = vmatprep.subr.bf16.mxu0 0
  %48 = vmatpush1.bf16.msra.mxu0 0
  %49 = vmatprep.subr.bf16.mxu0 0
  %50 = vmatpush1.bf16.msra.mxu0 %v30
  %51 = vmatprep.subr.bf16.mxu0 0
  %52 = vmatpush1.bf16.msra.mxu0 %v29
  %53 = vmatprep.subr.bf16.mxu0 0
  %54 = vmatpush2.bf16.msra.mxu0 0
  %55 = vmatprep.subr.bf16.mxu0 0
  %56 = vmatpush2.bf16.msra.mxu0 0
  %57 = vmatprep.subr.bf16.mxu0 0
  %58 = vmatpush2.bf16.msra.mxu0 0
  %59 = vmatprep.subr.bf16.mxu0 0
  %60 = vmatpush2.bf16.msra.mxu0 0
  %61 = vmatprep.subr.bf16.mxu0 0
  %62 = vmatpush2.bf16.msra.mxu0 0
  %63 = vmatprep.subr.bf16.mxu0 0
  %64 = vmatpush2.bf16.msra.mxu0 0
  %65 = vmatprep.subr.bf16.mxu0 0
  %66 = vmatpush2.bf16.msra.mxu0 0
  %67 = vmatprep.subr.bf16.mxu0 0
  %68 = vmatpush2.bf16.msra.mxu0 0
  %69 = vmatprep.mubr.bf16.mxu0 0
  %70 = vmatmul.mubr.bf16.gmra.mxu0 %v35
  %v71 = vpop.f32.mrf.mxu0
  %v72 = vadd.f32 %v20, %v71
  %v73 = vpop.f32.mrf.mxu0
  %v74 = vpop.f32.mrf.mxu0
  %v75 = vpop.f32.mrf.mxu0
  %76 = vdwg.mxu0
  %v77 = vpack.c.bf16 %v72, %v72
  %vm78 = vcmask 253952
  %vm79 = vsmask.f32 256
  %vm80 = vmand %vm78, %vm79
  %v81 = vld [vmem:[%s3] sm:$0x1]
  %v82 = vsel %vm80, %v77, %v81
  %83 = vst [vmem:[%s3] sm:$0x1] %v82
  // Predicated region
  $region14: #{siglip_forward.30} parent=0 // pred_check
    _
  $region15: #{siglip_forward.30} parent=0 // pred_check_branch
    %85 = sbr.rel (0) target = $region17
  $region16: #{siglip_forward.30} parent=0 // pred_region
    _
  $region17: #{siglip_forward.30} parent=0 // pred_fallthru
    _
  // Predicated region
  $region18: #{siglip_forward.30} parent=0 // pred_check
    _
  $region19: #{siglip_forward.30} parent=0 // pred_check_branch
    %87 = sbr.rel (0) target = $region21
  $region20: #{siglip_forward.30} parent=0 // pred_region
    _
  $region21: #{siglip_forward.30} parent=0 // pred_fallthru
    _

// kernel: siglip_forward.33
$region0: #{siglip_forward.33}
  #allocation0 [shape = 'u32[]', space=smem, size = 0x4, offset = 0x4, fixed_abs, tag = 'smem constant byte address 0x4 - core index']
  #allocation1 [shape = 'u32[144,128]{1,0:T(1,128)}', space=vmem, size = 0x12000, scoped, tag = 'internal scratch']
  %s0 = inlined_call_operand.vmem [shape: bf16[2,32], index: 0, kind: input, shape index: {}]
  %s1 = inlined_call_operand.vmem [shape: bf16[32,32], index: 1, kind: input, shape index: {}]
  %s2 = inlined_call_operand.vmem [shape: f32[1,32], index: 2, kind: input, shape index: {}]
  %s3 = inlined_call_operand.vmem [shape: bf16[2,32], index: 3, kind: output, shape index: {}]
  %s4 = sld [smem:[#allocation0]]
  $region22: #{siglip_forward.33} parent=0
    _
  %s6 = ssub.s32 1, %s4
  %s7 = scalar_select 0, %s6, %s4
  // Predicated region
  $region2: #{siglip_forward.33} parent=0 // pred_check
    _
  $region3: #{siglip_forward.33} parent=0 // pred_check_branch
    %9 = sbr.rel (0) target = $region5
  $region4: #{siglip_forward.33} parent=0 // pred_region
    _
  $region5: #{siglip_forward.33} parent=0 // pred_fallthru
    _
  // Predicated region
  $region6: #{siglip_forward.33} parent=0 // pred_check
    _
  $region7: #{siglip_forward.33} parent=0 // pred_check_branch
    %11 = sbr.rel (0) target = $region9
  $region8: #{siglip_forward.33} parent=0 // pred_region
    _
  $region9: #{siglip_forward.33} parent=0 // pred_fallthru
    _
  // Predicated region
  $region10: #{siglip_forward.33} parent=0 // pred_check
    _
  $region11: #{siglip_forward.33} parent=0 // pred_check_branch
    %13 = sbr.rel (0) target = $region13
  $region12: #{siglip_forward.33} parent=0 // pred_region
    _
  $region13: #{siglip_forward.33} parent=0 // pred_fallthru
    _
  %v15 = vld [vmem:[%s0] sm:$0x1]
  %v16 = vld [vmem:[%s1] sm:$0xf]
  %v17 = vld [vmem:[%s1 + $0x4] sm:$0xf]
  %v18 = vld [vmem:[%s1 + $0x8] sm:$0xf]
  %v19 = vld [vmem:[%s1 + $0xc] sm:$0xf]
  %v20 = vld [vmem:[%s2] sm:$0x1]
  %v22 = vlaneseq
  %v23 = vshrl.u32 %v22, 7
  %v24 = vsub.s32 0, %v23
  %v25 = vrot.slane %v20, %v24
  %v31 = vunpack.c.l.b16 %v16
  %v32 = vunpack.c.l.b16 %v17
  %v33 = vunpack.c.l.b16 %v18
  %v34 = vunpack.c.l.b16 %v19
  %v35 = vpack.c.b16 %v32, %v31
  %v36 = vpack.c.b16 %v34, %v33
  %vm39 = vcmask 261120
  %v41 = vsel %vm39, %v15, 0
  %43 = vmatprep.subr.bf16.mxu0 0
  %44 = vmatpush1.bf16.msra.mxu0 0
  %45 = vmatprep.subr.bf16.mxu0 0
  %46 = vmatpush1.bf16.msra.mxu0 0
  %47 = vmatprep.subr.bf16.mxu0 0
  %48 = vmatpush1.bf16.msra.mxu0 0
  %49 = vmatprep.subr.bf16.mxu0 0
  %50 = vmatpush1.bf16.msra.mxu0 0
  %51 = vmatprep.subr.bf16.mxu0 0
  %52 = vmatpush1.bf16.msra.mxu0 0
  %53 = vmatprep.subr.bf16.mxu0 0
  %54 = vmatpush1.bf16.msra.mxu0 0
  %55 = vmatprep.subr.bf16.mxu0 0
  %56 = vmatpush1.bf16.msra.mxu0 %v36
  %57 = vmatprep.subr.bf16.mxu0 0
  %58 = vmatpush1.bf16.msra.mxu0 %v35
  %59 = vmatprep.subr.bf16.mxu0 0
  %60 = vmatpush2.bf16.msra.mxu0 0
  %61 = vmatprep.subr.bf16.mxu0 0
  %62 = vmatpush2.bf16.msra.mxu0 0
  %63 = vmatprep.subr.bf16.mxu0 0
  %64 = vmatpush2.bf16.msra.mxu0 0
  %65 = vmatprep.subr.bf16.mxu0 0
  %66 = vmatpush2.bf16.msra.mxu0 0
  %67 = vmatprep.subr.bf16.mxu0 0
  %68 = vmatpush2.bf16.msra.mxu0 0
  %69 = vmatprep.subr.bf16.mxu0 0
  %70 = vmatpush2.bf16.msra.mxu0 0
  %71 = vmatprep.subr.bf16.mxu0 0
  %72 = vmatpush2.bf16.msra.mxu0 0
  %73 = vmatprep.subr.bf16.mxu0 0
  %74 = vmatpush2.bf16.msra.mxu0 0
  %75 = vmatprep.mubr.bf16.mxu0 0
  %76 = vmatmul.mubr.bf16.gmra.mxu0 %v41
  %v77 = vpop.f32.mrf.mxu0
  %v78 = vadd.f32 %v25, %v77
  %v79 = vpop.f32.mrf.mxu0
  %v80 = vpop.f32.mrf.mxu0
  %v81 = vpop.f32.mrf.mxu0
  %82 = vdwg.mxu0
  %v83 = vpack.c.bf16 %v78, %v78
  %vm84 = vcmask 253952
  %85 = vst.msk [vmem:[%s3] sm:$0x1] %vm84, %v83
  // Predicated region
  $region14: #{siglip_forward.33} parent=0 // pred_check
    _
  $region15: #{siglip_forward.33} parent=0 // pred_check_branch
    %87 = sbr.rel (0) target = $region17
  $region16: #{siglip_forward.33} parent=0 // pred_region
    _
  $region17: #{siglip_forward.33} parent=0 // pred_fallthru
    _
  // Predicated region
  $region18: #{siglip_forward.33} parent=0 // pred_check
    _
  $region19: #{siglip_forward.33} parent=0 // pred_check_branch
    %89 = sbr.rel (0) target = $region21
  $region20: #{siglip_forward.33} parent=0 // pred_region
    _
  $region21: #{siglip_forward.33} parent=0 // pred_fallthru
    _

// kernel: siglip_forward.32
$region0: #{siglip_forward.32}
  #allocation0 [shape = 'u32[]', space=smem, size = 0x4, offset = 0x4, fixed_abs, tag = 'smem constant byte address 0x4 - core index']
  #allocation1 [shape = 'u32[144,128]{1,0:T(1,128)}', space=vmem, size = 0x12000, scoped, tag = 'internal scratch']
  %s0 = inlined_call_operand.vmem [shape: bf16[1,32], index: 0, kind: input, shape index: {}]
  %s1 = inlined_call_operand.vmem [shape: bf16[2,16,64], index: 1, kind: input, shape index: {}]
  %s2 = inlined_call_operand.vmem [shape: bf16[2,1,32], index: 2, kind: output, shape index: {}]
  %s3 = sld [smem:[#allocation0]]
  $region41: #{siglip_forward.32} parent=0
    _
  %s5 = ssub.s32 1, %s3
  %s6 = scalar_select 0, %s5, %s3
  loop: start=0, step=1, limit=4
  $region2: #{siglip_forward.32} parent=0 // loop_pre_header
    _
  $region3: #{siglip_forward.32} parent=0 // loop_header
    %s8 = sphi 0, %s12
    %p9 = scmp.ge.s32.totalorder %s8, 4
    %s16 = sphi 0, %s16
    %s18 = sphi 0, %s16
    %s19 = sphi 0, %s18
    %s33 = sphi 0, %s19
    %s39 = sphi 0, %s41
    %s42 = sphi 0, %s39
    %s43 = sphi 0, %s42
    %s59 = sphi 0, %s43
    %s65 = sphi 0, %s67
    %s68 = sphi 0, %s65
    %s69 = sphi 0, %s68
    %s85 = sphi 0, %s69
  $region4: #{siglip_forward.32} parent=0 // loop_header_branch
    %11 = sbr.rel (%p9) target = $region8
  $region5: #{siglip_forward.32} parent=0 // loop_body
    %s13 = ssub.s32 %s8, 1
    %s14 = ssub.s32 %s8, 2
    %s15 = sadd.s32 %s8, 1
    %s17 = sadd.s32 %s16, 1
    %p20 = scmp.eq.s32.totalorder %s8, 1
    %p21 = scmp.ne.s32.totalorder %s16, %s18
    %p22 = scmp.eq.s32.totalorder %s8, 0
    %p23 = por %p21, %p22
    %p24 = scmp.ne.s32.totalorder %s16, %s18
    %p25 = scmp.eq.s32.totalorder %s13, 1
    %p26 = por %p24, %p25
    %p27 = scmp.ne.s32.totalorder %s18, %s19
    %p28 = scmp.eq.s32.totalorder %s13, 0
    %p29 = por %p27, %p28
    %p30 = scmp.ne.s32.totalorder %s18, %s19
    %p31 = scmp.eq.s32.totalorder %s14, 1
    %p32 = por %p30, %p31
    %p34 = scmp.ne.s32.totalorder %s19, %s33
    %p35 = scmp.eq.s32.totalorder %s14, 0
    %p36 = por %p34, %p35
    %s37 = ssub.s32 %s8, %s15
    %p38 = scmp.eq.s32.totalorder %s37, 0
    %s40 = sadd.s32 %s39, 1
    %s41 = scalar_select %p38, %s39, %s40
    %p44 = pneg %p38
    %p45 = scmp.eq.s32.totalorder %s8, 1
    %p46 = por %p44, %p45
    %p47 = scmp.ne.s32.totalorder %s39, %s42
    %p48 = scmp.eq.s32.totalorder %s8, 0
    %p49 = por %p47, %p48
    %p50 = scmp.ne.s32.totalorder %s39, %s42
    %p51 = scmp.eq.s32.totalorder %s13, 1
    %p52 = por %p50, %p51
    %p53 = scmp.ne.s32.totalorder %s42, %s43
    %p54 = scmp.eq.s32.totalorder %s13, 0
    %p55 = por %p53, %p54
    %p56 = scmp.ne.s32.totalorder %s42, %s43
    %p57 = scmp.eq.s32.totalorder %s14, 1
    %p58 = por %p56, %p57
    %p60 = scmp.ne.s32.totalorder %s43, %s59
    %p61 = scmp.eq.s32.totalorder %s14, 0
    %p62 = por %p60, %p61
    %s63 = ssub.s32 %s8, %s15
    %p64 = scmp.eq.s32.totalorder %s63, 0
    %s66 = sadd.s32 %s65, 1
    %s67 = scalar_select %p64, %s65, %s66
    %p70 = pneg %p64
    %p71 = scmp.eq.s32.totalorder %s8, 1
    %p72 = por %p70, %p71
    %p73 = scmp.ne.s32.totalorder %s65, %s68
    %p74 = scmp.eq.s32.totalorder %s8, 0
    %p75 = por %p73, %p74
    %p76 = scmp.ne.s32.totalorder %s65, %s68
    %p77 = scmp.eq.s32.totalorder %s13, 1
    %p78 = por %p76, %p77
    %p79 = scmp.ne.s32.totalorder %s68, %s69
    %p80 = scmp.eq.s32.totalorder %s13, 0
    %p81 = por %p79, %p80
    %p82 = scmp.ne.s32.totalorder %s68, %s69
    %p83 = scmp.eq.s32.totalorder %s14, 1
    %p84 = por %p82, %p83
    %p86 = scmp.ne.s32.totalorder %s69, %s85
    %p87 = scmp.eq.s32.totalorder %s14, 0
    %p88 = por %p86, %p87
    %p89 = scmp.le.s32.totalorder 1, %s8
    %p90 = scmp.lt.s32.totalorder %s8, 3
    %p91 = pnand %p89, %p90
    %p92 = pneg %p91
    // Predicated region
    $region9: #{siglip_forward.32} parent=5 // pred_check
      _
    $region10: #{siglip_forward.32} parent=5 // pred_check_branch
      %94 = sbr.rel (%p91) target = $region12
    $region11: #{siglip_forward.32} parent=5 // pred_region
      %s95 = ssub.s32 %s8, 1
      // Predicated region
      $region13: #{siglip_forward.32} parent=11 // pred_check
        %p96 = pneg %p29
      $region14: #{siglip_forward.32} parent=11 // pred_check_branch
        %98 = sbr.rel (%p96) target = $region16
      $region15: #{siglip_forward.32} parent=11 // pred_region
        _
      $region16: #{siglip_forward.32} parent=11 // pred_fallthru
        _
    $region12: #{siglip_forward.32} parent=5 // pred_fallthru
      _
    %p99 = scmp.lt.s32.totalorder %s8, 2
    // Predicated region
    $region17: #{siglip_forward.32} parent=5 // pred_check
      %p100 = pneg %p99
    $region18: #{siglip_forward.32} parent=5 // pred_check_branch
      %102 = sbr.rel (%p100) target = $region20
    $region19: #{siglip_forward.32} parent=5 // pred_region
      // Predicated region
      $region21: #{siglip_forward.32} parent=19 // pred_check
        %p103 = pneg %p49
      $region22: #{siglip_forward.32} parent=19 // pred_check_branch
        %105 = sbr.rel (%p103) target = $region24
      $region23: #{siglip_forward.32} parent=19 // pred_region
        %p106 = scmp.lt.s32.totalorder %s8, 1
        %s107 = scalar_select %p106, %s8, 1
        %s108 = smul.addr %s107, 2
        %s109 = smul.addr %s108, 4
        %s110 = scalar_lea.vmem %s1, %s109
      $region24: #{siglip_forward.32} parent=19 // pred_fallthru
        _
    $region20: #{siglip_forward.32} parent=5 // pred_fallthru
      _
    %p111 = scmp.le.s32.totalorder 1, %s8
    %p112 = scmp.lt.s32.totalorder %s8, 3
    %p113 = pnand %p111, %p112
    %p114 = pneg %p113
    // Predicated region
    $region25: #{siglip_forward.32} parent=5 // pred_check
      _
    $region26: #{siglip_forward.32} parent=5 // pred_check_branch
      %116 = sbr.rel (%p113) target = $region28
    $region27: #{siglip_forward.32} parent=5 // pred_region
      %s117 = ssub.s32 %s8, 1
      %p118 = pneg %p29
      %p119 = pneg %p26
      %p120 = scmp.lt.s32.totalorder %s13, 1
      %s121 = scalar_select %p120, %s13, 1
      %s122 = smul.addr %s121, 2
      %s123 = smul.addr %s122, 4
      %s124 = scalar_lea.vmem %s1, %s123
      %p125 = pneg %p55
      %p126 = pneg %p52
      %p127 = pneg %p81
      %p128 = pneg %p78
      %p129 = scmp.lt.s32.totalorder %s13, 1
      %s130 = scalar_select %p129, %s13, 1
      %s131 = scalar_lea.vmem %s2, %s130
      %p132 = scmp.lt.s32.totalorder %s13, 1
      %s133 = scalar_select %p132, %s13, 1
      %s134 = smul.addr %s133, 2
      %s135 = smul.addr %s134, 4
      %s136 = scalar_lea.vmem %s1, %s135
      %p137 = scmp.lt.s32.totalorder %s13, 1
      %s138 = scalar_select %p137, %s13, 1
      %s139 = scalar_lea.vmem %s2, %s138
      %v141 = vld [vmem:[%s0] sm:$0x1]
      %v142 = vld [vmem:[%s136] sm:$0xf]
      %v143 = vld [vmem:[%s136 + $0x4] sm:$0xf]
      %v144 = vunpack.c.l.bf16 %v141
      %v145 = vmul.f32 %v144, 0.35355338
      %v146 = vpack.c.bf16 %v145, %v145
      %v149 = vunpack.c.l.b16 %v142
      %v150 = vunpack.c.l.b16 %v143
      %v151 = vpack.c.b16 %v150, %v149
      %vm152 = vcmask 64512
      %v154 = vsel %vm152, %v146, 0
      %v157 = vsel %vm152, %v151, 0
      %159 = vmatprep.subr.bf16.mxu0 0
      %160 = vmatpush1.bf16.xpose.msra.mxu0 0
      %161 = vmatprep.subr.bf16.mxu0 0
      %162 = vmatpush1.bf16.xpose.msra.mxu0 0
      %163 = vmatprep.subr.bf16.mxu0 0
      %164 = vmatpush1.bf16.xpose.msra.mxu0 0
      %165 = vmatprep.subr.bf16.mxu0 0
      %166 = vmatpush1.bf16.xpose.msra.mxu0 0
      %167 = vmatprep.subr.bf16.mxu0 0
      %168 = vmatpush1.bf16.xpose.msra.mxu0 0
      %169 = vmatprep.subr.bf16.mxu0 0
      %170 = vmatpush1.bf16.xpose.msra.mxu0 0
      %171 = vmatprep.subr.bf16.mxu0 0
      %172 = vmatpush1.bf16.xpose.msra.mxu0 0
      %173 = vmatprep.subr.bf16.mxu0 0
      %174 = vmatpush1.bf16.xpose.msra.mxu0 %v157
      %175 = vmatprep.subr.bf16.mxu0 0
      %176 = vmatpush2.bf16.xpose.msra.mxu0 0
      %177 = vmatprep.subr.bf16.mxu0 0
      %178 = vmatpush2.bf16.xpose.msra.mxu0 0
      %179 = vmatprep.subr.bf16.mxu0 0
      %180 = vmatpush2.bf16.xpose.msra.mxu0 0
      %181 = vmatprep.subr.bf16.mxu0 0
      %182 = vmatpush2.bf16.xpose.msra.mxu0 0
      %183 = vmatprep.subr.bf16.mxu0 0
      %184 = vmatpush2.bf16.xpose.msra.mxu0 0
      %185 = vmatprep.subr.bf16.mxu0 0
      %186 = vmatpush2.bf16.xpose.msra.mxu0 0
      %187 = vmatprep.subr.bf16.mxu0 0
      %188 = vmatpush2.bf16.xpose.msra.mxu0 0
      %189 = vmatprep.subr.bf16.mxu0 0
      %190 = vmatpush2.bf16.xpose.msra.mxu0 0
      %191 = vmatprep.mubr.bf16.mxu0 0
      %192 = vmatmul.mubr.bf16.gmra.mxu0 %v154
      %v193 = vpop.f32.mrf.mxu0
      %v194 = vadd.f32 0.0, %v193
      %v195 = vpop.f32.mrf.mxu0
      %v196 = vpop.f32.mrf.mxu0
      %v197 = vpop.f32.mrf.mxu0
      %198 = vdwg.mxu0
      %vm199 = vcmask 122880
      %v200 = vsel %vm199, %v194, -inf
      %201 = vmax.xlane.f32.xlu0 %v200
      %v202 = vpop.xlane.xlu0 %201
      %v203 = vsub.f32 %v194, %v202
      %v204 = vmul.f32 %v203, 1.442695
      %v205 = vpow.pop %v204
      %v206 = vsel %vm199, %v205, 0.0
      %207 = vadd.xlane.f32.xlu0 %v206
      %v208 = vpop.xlane.xlu0 %207
      %v209 = vrcp.pop %v208
      %v210 = vmul.f32 %v205, %v209
      %v211 = vpack.c.bf16 %v210, %v210
      %212 = vrot.lane.b32.xlu0 %v151, 96
      %v213 = vpop.permute.xlu0 %212
      %vm215 = vcmask 130048
      %v217 = vsel %vm215, %v211, 0
      %219 = vmatprep.subr.bf16.mxu0 0
      %220 = vmatpush1.bf16.msra.mxu0 0
      %221 = vmatprep.subr.bf16.mxu0 0
      %222 = vmatpush1.bf16.msra.mxu0 0
      %223 = vmatprep.subr.bf16.mxu0 0
      %224 = vmatpush1.bf16.msra.mxu0 0
      %225 = vmatprep.subr.bf16.mxu0 0
      %226 = vmatpush1.bf16.msra.mxu0 0
      %227 = vmatprep.subr.bf16.mxu0 0
      %228 = vmatpush1.bf16.msra.mxu0 0
      %229 = vmatprep.subr.bf16.mxu0 0
      %230 = vmatpush1.bf16.msra.mxu0 0
      %231 = vmatprep.subr.bf16.mxu0 0
      %232 = vmatpush1.bf16.msra.mxu0 0
      %233 = vmatprep.subr.bf16.mxu0 0
      %234 = vmatpush1.bf16.msra.mxu0 %v213
      %235 = vmatprep.subr.bf16.mxu0 0
      %236 = vmatpush2.bf16.msra.mxu0 0
      %237 = vmatprep.subr.bf16.mxu0 0
      %238 = vmatpush2.bf16.msra.mxu0 0
      %239 = vmatprep.subr.bf16.mxu0 0
      %240 = vmatpush2.bf16.msra.mxu0 0
      %241 = vmatprep.subr.bf16.mxu0 0
      %242 = vmatpush2.bf16.msra.mxu0 0
      %243 = vmatprep.subr.bf16.mxu0 0
      %244 = vmatpush2.bf16.msra.mxu0 0
      %245 = vmatprep.subr.bf16.mxu0 0
      %246 = vmatpush2.bf16.msra.mxu0 0
      %247 = vmatprep.subr.bf16.mxu0 0
      %248 = vmatpush2.bf16.msra.mxu0 0
      %249 = vmatprep.subr.bf16.mxu0 0
      %250 = vmatpush2.bf16.msra.mxu0 0
      %251 = vmatprep.mubr.bf16.mxu0 0
      %252 = vmatmul.mubr.bf16.gmra.mxu0 %v217
      %v253 = vpop.f32.mrf.mxu0
      %v254 = vadd.f32 0.0, %v253
      %v255 = vpop.f32.mrf.mxu0
      %v256 = vpop.f32.mrf.mxu0
      %v257 = vpop.f32.mrf.mxu0
      %258 = vdwg.mxu0
      %260 = vrot.lane.b32.xlu0 %v146, 120
      %v261 = vpop.permute.xlu0 %260
      %262 = vrot.lane.b32.xlu0 %v151, 120
      %v263 = vpop.permute.xlu0 %262
      %v265 = vsel %vm152, %v261, 0
      %v268 = vsel %vm152, %v263, 0
      %270 = vmatprep.subr.bf16.mxu0 0
      %271 = vmatpush1.bf16.xpose.msra.mxu0 0
      %272 = vmatprep.subr.bf16.mxu0 0
      %273 = vmatpush1.bf16.xpose.msra.mxu0 0
      %274 = vmatprep.subr.bf16.mxu0 0
      %275 = vmatpush1.bf16.xpose.msra.mxu0 0
      %276 = vmatprep.subr.bf16.mxu0 0
      %277 = vmatpush1.bf16.xpose.msra.mxu0 0
      %278 = vmatprep.subr.bf16.mxu0 0
      %279 = vmatpush1.bf16.xpose.msra.mxu0 0
      %280 = vmatprep.subr.bf16.mxu0 0
      %281 = vmatpush1.bf16.xpose.msra.mxu0 0
      %282 = vmatprep.subr.bf16.mxu0 0
      %283 = vmatpush1.bf16.xpose.msra.mxu0 0
      %284 = vmatprep.subr.bf16.mxu0 0
      %285 = vmatpush1.bf16.xpose.msra.mxu0 %v268
      %286 = vmatprep.subr.bf16.mxu0 0
      %287 = vmatpush2.bf16.xpose.msra.mxu0 0
      %288 = vmatprep.subr.bf16.mxu0 0
      %289 = vmatpush2.bf16.xpose.msra.mxu0 0
      %290 = vmatprep.subr.bf16.mxu0 0
      %291 = vmatpush2.bf16.xpose.msra.mxu0 0
      %292 = vmatprep.subr.bf16.mxu0 0
      %293 = vmatpush2.bf16.xpose.msra.mxu0 0
      %294 = vmatprep.subr.bf16.mxu0 0
      %295 = vmatpush2.bf16.xpose.msra.mxu0 0
      %296 = vmatprep.subr.bf16.mxu0 0
      %297 = vmatpush2.bf16.xpose.msra.mxu0 0
      %298 = vmatprep.subr.bf16.mxu0 0
      %299 = vmatpush2.bf16.xpose.msra.mxu0 0
      %300 = vmatprep.subr.bf16.mxu0 0
      %301 = vmatpush2.bf16.xpose.msra.mxu0 0
      %302 = vmatprep.mubr.bf16.mxu0 0
      %303 = vmatmul.mubr.bf16.gmra.mxu0 %v265
      %v304 = vpop.f32.mrf.mxu0
      %v305 = vadd.f32 0.0, %v304
      %v306 = vpop.f32.mrf.mxu0
      %v307 = vpop.f32.mrf.mxu0
      %v308 = vpop.f32.mrf.mxu0
      %309 = vdwg.mxu0
      %v310 = vsel %vm199, %v305, -inf
      %311 = vmax.xlane.f32.xlu0 %v310
      %v312 = vpop.xlane.xlu0 %311
      %v313 = vsub.f32 %v305, %v312
      %v314 = vmul.f32 %v313, 1.442695
      %v315 = vpow.pop %v314
      %v316 = vsel %vm199, %v315, 0.0
      %317 = vadd.xlane.f32.xlu0 %v316
      %v318 = vpop.xlane.xlu0 %317
      %v319 = vrcp.pop %v318
      %v320 = vmul.f32 %v315, %v319
      %v321 = vpack.c.bf16 %v320, %v320
      %322 = vrot.lane.b32.xlu0 %v151, 88
      %v323 = vpop.permute.xlu0 %322
      %v326 = vsel %vm215, %v321, 0
      %328 = vmatprep.subr.bf16.mxu0 0
      %329 = vmatpush1.bf16.msra.mxu0 0
      %330 = vmatprep.subr.bf16.mxu0 0
      %331 = vmatpush1.bf16.msra.mxu0 0
      %332 = vmatprep.subr.bf16.mxu0 0
      %333 = vmatpush1.bf16.msra.mxu0 0
      %334 = vmatprep.subr.bf16.mxu0 0
      %335 = vmatpush1.bf16.msra.mxu0 0
      %336 = vmatprep.subr.bf16.mxu0 0
      %337 = vmatpush1.bf16.msra.mxu0 0
      %338 = vmatprep.subr.bf16.mxu0 0
      %339 = vmatpush1.bf16.msra.mxu0 0
      %340 = vmatprep.subr.bf16.mxu0 0
      %341 = vmatpush1.bf16.msra.mxu0 0
      %342 = vmatprep.subr.bf16.mxu0 0
      %343 = vmatpush1.bf16.msra.mxu0 %v323
      %344 = vmatprep.subr.bf16.mxu0 0
      %345 = vmatpush2.bf16.msra.mxu0 0
      %346 = vmatprep.subr.bf16.mxu0 0
      %347 = vmatpush2.bf16.msra.mxu0 0
      %348 = vmatprep.subr.bf16.mxu0 0
      %349 = vmatpush2.bf16.msra.mxu0 0
      %350 = vmatprep.subr.bf16.mxu0 0
      %351 = vmatpush2.bf16.msra.mxu0 0
      %352 = vmatprep.subr.bf16.mxu0 0
      %353 = vmatpush2.bf16.msra.mxu0 0
      %354 = vmatprep.subr.bf16.mxu0 0
      %355 = vmatpush2.bf16.msra.mxu0 0
      %356 = vmatprep.subr.bf16.mxu0 0
      %357 = vmatpush2.bf16.msra.mxu0 0
      %358 = vmatprep.subr.bf16.mxu0 0
      %359 = vmatpush2.bf16.msra.mxu0 0
      %360 = vmatprep.mubr.bf16.mxu0 0
      %361 = vmatmul.mubr.bf16.gmra.mxu0 %v326
      %v362 = vpop.f32.mrf.mxu0
      %v363 = vadd.f32 0.0, %v362
      %v364 = vpop.f32.mrf.mxu0
      %v365 = vpop.f32.mrf.mxu0
      %v366 = vpop.f32.mrf.mxu0
      %367 = vdwg.mxu0
      %368 = vrot.lane.b32.xlu0 %v146, 112
      %v369 = vpop.permute.xlu0 %368
      %370 = vrot.lane.b32.xlu0 %v151, 112
      %v371 = vpop.permute.xlu0 %370
      %v373 = vsel %vm152, %v369, 0
      %v376 = vsel %vm152, %v371, 0
      %378 = vmatprep.subr.bf16.mxu0 0
      %379 = vmatpush1.bf16.xpose.msra.mxu0 0
      %380 = vmatprep.subr.bf16.mxu0 0
      %381 = vmatpush1.bf16.xpose.msra.mxu0 0
      %382 = vmatprep.subr.bf16.mxu0 0
      %383 = vmatpush1.bf16.xpose.msra.mxu0 0
      %384 = vmatprep.subr.bf16.mxu0 0
      %385 = vmatpush1.bf16.xpose.msra.mxu0 0
      %386 = vmatprep.subr.bf16.mxu0 0
      %387 = vmatpush1.bf16.xpose.msra.mxu0 0
      %388 = vmatprep.subr.bf16.mxu0 0
      %389 = vmatpush1.bf16.xpose.msra.mxu0 0
      %390 = vmatprep.subr.bf16.mxu0 0
      %391 = vmatpush1.bf16.xpose.msra.mxu0 0
      %392 = vmatprep.subr.bf16.mxu0 0
      %393 = vmatpush1.bf16.xpose.msra.mxu0 %v376
      %394 = vmatprep.subr.bf16.mxu0 0
      %395 = vmatpush2.bf16.xpose.msra.mxu0 0
      %396 = vmatprep.subr.bf16.mxu0 0
      %397 = vmatpush2.bf16.xpose.msra.mxu0 0
      %398 = vmatprep.subr.bf16.mxu0 0
      %399 = vmatpush2.bf16.xpose.msra.mxu0 0
      %400 = vmatprep.subr.bf16.mxu0 0
      %401 = vmatpush2.bf16.xpose.msra.mxu0 0
      %402 = vmatprep.subr.bf16.mxu0 0
      %403 = vmatpush2.bf16.xpose.msra.mxu0 0
      %404 = vmatprep.subr.bf16.mxu0 0
      %405 = vmatpush2.bf16.xpose.msra.mxu0 0
      %406 = vmatprep.subr.bf16.mxu0 0
      %407 = vmatpush2.bf16.xpose.msra.mxu0 0
      %408 = vmatprep.subr.bf16.mxu0 0
      %409 = vmatpush2.bf16.xpose.msra.mxu0 0
      %410 = vmatprep.mubr.bf16.mxu0 0
      %411 = vmatmul.mubr.bf16.gmra.mxu0 %v373
      %v412 = vpop.f32.mrf.mxu0
      %v413 = vadd.f32 0.0, %v412
      %v414 = vpop.f32.mrf.mxu0
      %v415 = vpop.f32.mrf.mxu0
      %v416 = vpop.f32.mrf.mxu0
      %417 = vdwg.mxu0
      %v418 = vsel %vm199, %v413, -inf
      %419 = vmax.xlane.f32.xlu0 %v418
      %v420 = vpop.xlane.xlu0 %419
      %v421 = vsub.f32 %v413, %v420
      %v422 = vmul.f32 %v421, 1.442695
      %v423 = vpow.pop %v422
      %v424 = vsel %vm199, %v423, 0.0
      %425 = vadd.xlane.f32.xlu0 %v424
      %v426 = vpop.xlane.xlu0 %425
      %v427 = vrcp.pop %v426
      %v428 = vmul.f32 %v423, %v427
      %v429 = vpack.c.bf16 %v428, %v428
      %430 = vrot.lane.b32.xlu0 %v151, 80
      %v431 = vpop.permute.xlu0 %430
      %v434 = vsel %vm215, %v429, 0
      %436 = vmatprep.subr.bf16.mxu0 0
      %437 = vmatpush1.bf16.msra.mxu0 0
      %438 = vmatprep.subr.bf16.mxu0 0
      %439 = vmatpush1.bf16.msra.mxu0 0
      %440 = vmatprep.subr.bf16.mxu0 0
      %441 = vmatpush1.bf16.msra.mxu0 0
      %442 = vmatprep.subr.bf16.mxu0 0
      %443 = vmatpush1.bf16.msra.mxu0 0
      %444 = vmatprep.subr.bf16.mxu0 0
      %445 = vmatpush1.bf16.msra.mxu0 0
      %446 = vmatprep.subr.bf16.mxu0 0
      %447 = vmatpush1.bf16.msra.mxu0 0
      %448 = vmatprep.subr.bf16.mxu0 0
      %449 = vmatpush1.bf16.msra.mxu0 0
      %450 = vmatprep.subr.bf16.mxu0 0
      %451 = vmatpush1.bf16.msra.mxu0 %v431
      %452 = vmatprep.subr.bf16.mxu0 0
      %453 = vmatpush2.bf16.msra.mxu0 0
      %454 = vmatprep.subr.bf16.mxu0 0
      %455 = vmatpush2.bf16.msra.mxu0 0
      %456 = vmatprep.subr.bf16.mxu0 0
      %457 = vmatpush2.bf16.msra.mxu0 0
      %458 = vmatprep.subr.bf16.mxu0 0
      %459 = vmatpush2.bf16.msra.mxu0 0
      %460 = vmatprep.subr.bf16.mxu0 0
      %461 = vmatpush2.bf16.msra.mxu0 0
      %462 = vmatprep.subr.bf16.mxu0 0
      %463 = vmatpush2.bf16.msra.mxu0 0
      %464 = vmatprep.subr.bf16.mxu0 0
      %465 = vmatpush2.bf16.msra.mxu0 0
      %466 = vmatprep.subr.bf16.mxu0 0
      %467 = vmatpush2.bf16.msra.mxu0 0
      %468 = vmatprep.mubr.bf16.mxu0 0
      %469 = vmatmul.mubr.bf16.gmra.mxu0 %v434
      %v470 = vpop.f32.mrf.mxu0
      %v471 = vadd.f32 0.0, %v470
      %v472 = vpop.f32.mrf.mxu0
      %v473 = vpop.f32.mrf.mxu0
      %v474 = vpop.f32.mrf.mxu0
      %475 = vdwg.mxu0
      %476 = vrot.lane.b32.xlu0 %v146, 104
      %v477 = vpop.permute.xlu0 %476
      %478 = vrot.lane.b32.xlu0 %v151, 104
      %v479 = vpop.permute.xlu0 %478
      %v481 = vsel %vm152, %v477, 0
      %v484 = vsel %vm152, %v479, 0
      %486 = vmatprep.subr.bf16.mxu0 0
      %487 = vmatpush1.bf16.xpose.msra.mxu0 0
      %488 = vmatprep.subr.bf16.mxu0 0
      %489 = vmatpush1.bf16.xpose.msra.mxu0 0
      %490 = vmatprep.subr.bf16.mxu0 0
      %491 = vmatpush1.bf16.xpose.msra.mxu0 0
      %492 = vmatprep.subr.bf16.mxu0 0
      %493 = vmatpush1.bf16.xpose.msra.mxu0 0
      %494 = vmatprep.subr.bf16.mxu0 0
      %495 = vmatpush1.bf16.xpose.msra.mxu0 0
      %496 = vmatprep.subr.bf16.mxu0 0
      %497 = vmatpush1.bf16.xpose.msra.mxu0 0
      %498 = vmatprep.subr.bf16.mxu0 0
      %499 = vmatpush1.bf16.xpose.msra.mxu0 0
      %500 = vmatprep.subr.bf16.mxu0 0
      %501 = vmatpush1.bf16.xpose.msra.mxu0 %v484
      %502 = vmatprep.subr.bf16.mxu0 0
      %503 = vmatpush2.bf16.xpose.msra.mxu0 0
      %504 = vmatprep.subr.bf16.mxu0 0
      %505 = vmatpush2.bf16.xpose.msra.mxu0 0
      %506 = vmatprep.subr.bf16.mxu0 0
      %507 = vmatpush2.bf16.xpose.msra.mxu0 0
      %508 = vmatprep.subr.bf16.mxu0 0
      %509 = vmatpush2.bf16.xpose.msra.mxu0 0
      %510 = vmatprep.subr.bf16.mxu0 0
      %511 = vmatpush2.bf16.xpose.msra.mxu0 0
      %512 = vmatprep.subr.bf16.mxu0 0
      %513 = vmatpush2.bf16.xpose.msra.mxu0 0
      %514 = vmatprep.subr.bf16.mxu0 0
      %515 = vmatpush2.bf16.xpose.msra.mxu0 0
      %516 = vmatprep.subr.bf16.mxu0 0
      %517 = vmatpush2.bf16.xpose.msra.mxu0 0
      %518 = vmatprep.mubr.bf16.mxu0 0
      %519 = vmatmul.mubr.bf16.gmra.mxu0 %v481
      %v520 = vpop.f32.mrf.mxu0
      %v521 = vadd.f32 0.0, %v520
      %v522 = vpop.f32.mrf.mxu0
      %v523 = vpop.f32.mrf.mxu0
      %v524 = vpop.f32.mrf.mxu0
      %525 = vdwg.mxu0
      %v526 = vsel %vm199, %v521, -inf
      %527 = vmax.xlane.f32.xlu0 %v526
      %v528 = vpop.xlane.xlu0 %527
      %v529 = vsub.f32 %v521, %v528
      %v530 = vmul.f32 %v529, 1.442695
      %v531 = vpow.pop %v530
      %v532 = vsel %vm199, %v531, 0.0
      %533 = vadd.xlane.f32.xlu0 %v532
      %v534 = vpop.xlane.xlu0 %533
      %v535 = vrcp.pop %v534
      %v536 = vmul.f32 %v531, %v535
      %v537 = vpack.c.bf16 %v536, %v536
      %538 = vrot.lane.b32.xlu0 %v151, 72
      %v539 = vpop.permute.xlu0 %538
      %v542 = vsel %vm215, %v537, 0
      %544 = vmatprep.subr.bf16.mxu0 0
      %545 = vmatpush1.bf16.msra.mxu0 0
      %546 = vmatprep.subr.bf16.mxu0 0
      %547 = vmatpush1.bf16.msra.mxu0 0
      %548 = vmatprep.subr.bf16.mxu0 0
      %549 = vmatpush1.bf16.msra.mxu0 0
      %550 = vmatprep.subr.bf16.mxu0 0
      %551 = vmatpush1.bf16.msra.mxu0 0
      %552 = vmatprep.subr.bf16.mxu0 0
      %553 = vmatpush1.bf16.msra.mxu0 0
      %554 = vmatprep.subr.bf16.mxu0 0
      %555 = vmatpush1.bf16.msra.mxu0 0
      %556 = vmatprep.subr.bf16.mxu0 0
      %557 = vmatpush1.bf16.msra.mxu0 0
      %558 = vmatprep.subr.bf16.mxu0 0
      %559 = vmatpush1.bf16.msra.mxu0 %v539
      %560 = vmatprep.subr.bf16.mxu0 0
      %561 = vmatpush2.bf16.msra.mxu0 0
      %562 = vmatprep.subr.bf16.mxu0 0
      %563 = vmatpush2.bf16.msra.mxu0 0
      %564 = vmatprep.subr.bf16.mxu0 0
      %565 = vmatpush2.bf16.msra.mxu0 0
      %566 = vmatprep.subr.bf16.mxu0 0
      %567 = vmatpush2.bf16.msra.mxu0 0
      %568 = vmatprep.subr.bf16.mxu0 0
      %569 = vmatpush2.bf16.msra.mxu0 0
      %570 = vmatprep.subr.bf16.mxu0 0
      %571 = vmatpush2.bf16.msra.mxu0 0
      %572 = vmatprep.subr.bf16.mxu0 0
      %573 = vmatpush2.bf16.msra.mxu0 0
      %574 = vmatprep.subr.bf16.mxu0 0
      %575 = vmatpush2.bf16.msra.mxu0 0
      %576 = vmatprep.mubr.bf16.mxu0 0
      %577 = vmatmul.mubr.bf16.gmra.mxu0 %v542
      %v578 = vpop.f32.mrf.mxu0
      %v579 = vadd.f32 0.0, %v578
      %v580 = vpop.f32.mrf.mxu0
      %v581 = vpop.f32.mrf.mxu0
      %v582 = vpop.f32.mrf.mxu0
      %583 = vdwg.mxu0
      %585 = vrot.lane.b32.xlu0 %v363, 8
      %v586 = vpop.permute.xlu0 %585
      %589 = vrot.lane.b32.xlu0 %v471, 16
      %v590 = vpop.permute.xlu0 %589
      %593 = vrot.lane.b32.xlu0 %v579, 24
      %v594 = vpop.permute.xlu0 %593
      %v596 = vsel %vm152, %v254, %v586
      %v597 = vsel %vm215, %v596, %v590
      %vm598 = vcmask 195584
      %v599 = vsel %vm598, %v597, %v594
      %v600 = vpack.c.bf16 %v599, %v599
      %vm601 = vcmask 253952
      %vm602 = vsmask.f32 256
      %vm603 = vmand %vm601, %vm602
      %v604 = vld [vmem:[%s139] sm:$0x1]
      %v605 = vsel %vm603, %v600, %v604
      %606 = vst [vmem:[%s139] sm:$0x1] %v605
      %p607 = scmp.lt.s32.totalorder %s13, 1
      %s608 = scalar_select %p607, %s13, 1
      %s609 = scalar_lea.vmem %s2, %s608
      // Predicated region
      $region29: #{siglip_forward.32} parent=27 // pred_check
        %p610 = pneg %p78
      $region30: #{siglip_forward.32} parent=27 // pred_check_branch
        %612 = sbr.rel (%p610) target = $region32
      $region31: #{siglip_forward.32} parent=27 // pred_region
        _
      $region32: #{siglip_forward.32} parent=27 // pred_fallthru
        _
    $region28: #{siglip_forward.32} parent=5 // pred_fallthru
      _
    %p613 = scmp.le.s32.totalorder 2, %s8
    // Predicated region
    $region33: #{siglip_forward.32} parent=5 // pred_check
      %p614 = pneg %p613
    $region34: #{siglip_forward.32} parent=5 // pred_check_branch
      %616 = sbr.rel (%p614) target = $region36
    $region35: #{siglip_forward.32} parent=5 // pred_region
      %s617 = ssub.s32 %s8, 2
      // Predicated region
      $region37: #{siglip_forward.32} parent=35 // pred_check
        %p618 = pneg %p84
      $region38: #{siglip_forward.32} parent=35 // pred_check_branch
        %620 = sbr.rel (%p618) target = $region40
      $region39: #{siglip_forward.32} parent=35 // pred_region
        %p621 = scmp.lt.s32.totalorder %s14, 1
        %s622 = scalar_select %p621, %s14, 1
        %s623 = scalar_lea.vmem %s2, %s622
      $region40: #{siglip_forward.32} parent=35 // pred_fallthru
        _
    $region36: #{siglip_forward.32} parent=5 // pred_fallthru
      _
  $region6: #{siglip_forward.32} parent=0 // loop_footer
    %s12 = sadd.s32 1, %s8
  $region7: #{siglip_forward.32} parent=0 // loop_footer_branch
    %7 = sbr.rel target = $region3
  $region8: #{siglip_forward.32} parent=0 // loop_exit
    _

// kernel: siglip_forward.35
$region0: #{siglip_forward.35}
  #allocation0 [shape = 'u32[]', space=smem, size = 0x4, offset = 0x4, fixed_abs, tag = 'smem constant byte address 0x4 - core index']
  #allocation1 [shape = 'u32[144,128]{1,0:T(1,128)}', space=vmem, size = 0x12000, scoped, tag = 'internal scratch']
  %s0 = inlined_call_operand.vmem [shape: bf16[2,128], index: 0, kind: input, shape index: {}]
  %s1 = inlined_call_operand.vmem [shape: bf16[128,32], index: 1, kind: input, shape index: {}]
  %s2 = inlined_call_operand.vmem [shape: f32[1,32], index: 2, kind: input, shape index: {}]
  %s3 = inlined_call_operand.vmem [shape: bf16[2,32], index: 3, kind: input, shape index: {}]
  %s4 = inlined_call_operand.hbm [shape: f32[2,32], index: 4, kind: output, shape index: {}]
  %s5 = sld [smem:[#allocation0]]
  $region26: #{siglip_forward.35} parent=0
    _
  %s7 = ssub.s32 1, %s5
  %s8 = scalar_select 0, %s7, %s5
  $region1: #{siglip_forward.35} parent=0
    #allocation2 [shape = 'u8[1024]{0}', space=vmem, size = 0x400, scoped, tag = 'output window, operand 0, single buffered']
    #allocation3 [shape = 's32[1]{0}', space=sflag, size = 0x4, scoped, tag = 'scoped memory for siglip_forward.35']
    %9 = vsyncpa [#allocation3], 0
    // Predicated region
    $region2: #{siglip_forward.35} parent=1 // pred_check
      _
    $region3: #{siglip_forward.35} parent=1 // pred_check_branch
      %11 = sbr.rel (0) target = $region5
    $region4: #{siglip_forward.35} parent=1 // pred_region
      _
    $region5: #{siglip_forward.35} parent=1 // pred_fallthru
      _
    // Predicated region
    $region6: #{siglip_forward.35} parent=1 // pred_check
      _
    $region7: #{siglip_forward.35} parent=1 // pred_check_branch
      %13 = sbr.rel (0) target = $region9
    $region8: #{siglip_forward.35} parent=1 // pred_region
      _
    $region9: #{siglip_forward.35} parent=1 // pred_fallthru
      _
    // Predicated region
    $region10: #{siglip_forward.35} parent=1 // pred_check
      _
    $region11: #{siglip_forward.35} parent=1 // pred_check_branch
      %15 = sbr.rel (0) target = $region13
    $region12: #{siglip_forward.35} parent=1 // pred_region
      _
    $region13: #{siglip_forward.35} parent=1 // pred_fallthru
      _
    // Predicated region
    $region14: #{siglip_forward.35} parent=1 // pred_check
      _
    $region15: #{siglip_forward.35} parent=1 // pred_check_branch
      %17 = sbr.rel (0) target = $region17
    $region16: #{siglip_forward.35} parent=1 // pred_region
      _
    $region17: #{siglip_forward.35} parent=1 // pred_fallthru
      _
    %v19 = vld [vmem:[%s0] sm:$0x1]
    %v20 = vld [vmem:[%s1] sm:$0xf]
    %v21 = vld [vmem:[%s1 + $0x4] sm:$0xf]
    %v22 = vld [vmem:[%s1 + $0x8] sm:$0xf]
    %v23 = vld [vmem:[%s1 + $0xc] sm:$0xf]
    %v24 = vld [vmem:[%s1 + $0x10] sm:$0xf]
    %v25 = vld [vmem:[%s1 + $0x14] sm:$0xf]
    %v26 = vld [vmem:[%s1 + $0x18] sm:$0xf]
    %v27 = vld [vmem:[%s1 + $0x1c] sm:$0xf]
    %v28 = vld [vmem:[%s1 + $0x20] sm:$0xf]
    %v29 = vld [vmem:[%s1 + $0x24] sm:$0xf]
    %v30 = vld [vmem:[%s1 + $0x28] sm:$0xf]
    %v31 = vld [vmem:[%s1 + $0x2c] sm:$0xf]
    %v32 = vld [vmem:[%s1 + $0x30] sm:$0xf]
    %v33 = vld [vmem:[%s1 + $0x34] sm:$0xf]
    %v34 = vld [vmem:[%s1 + $0x38] sm:$0xf]
    %v35 = vld [vmem:[%s1 + $0x3c] sm:$0xf]
    %v36 = vld [vmem:[%s2] sm:$0x1]
    %v38 = vlaneseq
    %v39 = vshrl.u32 %v38, 7
    %v40 = vsub.s32 0, %v39
    %v41 = vrot.slane %v36, %v40
    %v59 = vunpack.c.l.b16 %v20
    %v60 = vunpack.c.l.b16 %v21
    %v61 = vunpack.c.l.b16 %v22
    %v62 = vunpack.c.l.b16 %v23
    %v63 = vunpack.c.l.b16 %v24
    %v64 = vunpack.c.l.b16 %v25
    %v65 = vunpack.c.l.b16 %v26
    %v66 = vunpack.c.l.b16 %v27
    %v67 = vunpack.c.l.b16 %v28
    %v68 = vunpack.c.l.b16 %v29
    %v69 = vunpack.c.l.b16 %v30
    %v70 = vunpack.c.l.b16 %v31
    %v71 = vunpack.c.l.b16 %v32
    %v72 = vunpack.c.l.b16 %v33
    %v73 = vunpack.c.l.b16 %v34
    %v74 = vunpack.c.l.b16 %v35
    %v75 = vpack.c.b16 %v60, %v59
    %v76 = vpack.c.b16 %v62, %v61
    %v77 = vpack.c.b16 %v64, %v63
    %v78 = vpack.c.b16 %v66, %v65
    %v79 = vpack.c.b16 %v68, %v67
    %v80 = vpack.c.b16 %v70, %v69
    %v81 = vpack.c.b16 %v72, %v71
    %v82 = vpack.c.b16 %v74, %v73
    %91 = vmatprep.subr.bf16.mxu0 0
    %92 = vmatpush1.bf16.msra.mxu0 %v82
    %93 = vmatprep.subr.bf16.mxu0 0
    %94 = vmatpush1.bf16.msra.mxu0 %v81
    %95 = vmatprep.subr.bf16.mxu0 0
    %96 = vmatpush1.bf16.msra.mxu0 %v80
    %97 = vmatprep.subr.bf16.mxu0 0
    %98 = vmatpush1.bf16.msra.mxu0 %v79
    %99 = vmatprep.subr.bf16.mxu0 0
    %100 = vmatpush1.bf16.msra.mxu0 %v78
    %101 = vmatprep.subr.bf16.mxu0 0
    %102 = vmatpush1.bf16.msra.mxu0 %v77
    %103 = vmatprep.subr.bf16.mxu0 0
    %104 = vmatpush1.bf16.msra.mxu0 %v76
    %105 = vmatprep.subr.bf16.mxu0 0
    %106 = vmatpush1.bf16.msra.mxu0 %v75
    %107 = vmatprep.subr.bf16.mxu0 0
    %108 = vmatpush2.bf16.msra.mxu0 0
    %109 = vmatprep.subr.bf16.mxu0 0
    %110 = vmatpush2.bf16.msra.mxu0 0
    %111 = vmatprep.subr.bf16.mxu0 0
    %112 = vmatpush2.bf16.msra.mxu0 0
    %113 = vmatprep.subr.bf16.mxu0 0
    %114 = vmatpush2.bf16.msra.mxu0 0
    %115 = vmatprep.subr.bf16.mxu0 0
    %116 = vmatpush2.bf16.msra.mxu0 0
    %117 = vmatprep.subr.bf16.mxu0 0
    %118 = vmatpush2.bf16.msra.mxu0 0
    %119 = vmatprep.subr.bf16.mxu0 0
    %120 = vmatpush2.bf16.msra.mxu0 0
    %121 = vmatprep.subr.bf16.mxu0 0
    %122 = vmatpush2.bf16.msra.mxu0 0
    %123 = vmatprep.mubr.bf16.mxu0 0
    %124 = vmatmul.mubr.bf16.gmra.mxu0 %v19
    %v125 = vpop.f32.mrf.mxu0
    %v126 = vadd.f32 %v41, %v125
    %v127 = vpop.f32.mrf.mxu0
    %v128 = vpop.f32.mrf.mxu0
    %v129 = vpop.f32.mrf.mxu0
    %130 = vdwg.mxu0
    %v131 = vld [vmem:[%s3] sm:$0x1]
    %v132 = vunpack.c.l.bf16 %v131
    %v133 = vadd.f32 %v126, %v132
    %vm134 = vcmask 254976
    %135 = vst.msk [vmem:[#allocation2] sm:$0x3] %vm134, %v133
    // Predicated region
    $region18: #{siglip_forward.35} parent=1 // pred_check
      _
    $region19: #{siglip_forward.35} parent=1 // pred_check_branch
      %137 = sbr.rel (0) target = $region21
    $region20: #{siglip_forward.35} parent=1 // pred_region
      %s139 = ssub.s32 32, 32
      %140 = vsyncadd [#allocation3], %s139
      %s142 = sshll.u32 [#allocation2], 4
      %s143 = int_to_ptr.vmem [resolvable:$true] %s142
      %145 = dma.vmem_to_hbm [thread:$0]  %s143, 32, %s4, [#allocation3]
    $region21: #{siglip_forward.35} parent=1 // pred_fallthru
      _
    // Predicated region
    $region22: #{siglip_forward.35} parent=1 // pred_check
      _
    $region23: #{siglip_forward.35} parent=1 // pred_check_branch
      %147 = sbr.rel (0) target = $region25
    $region24: #{siglip_forward.35} parent=1 // pred_region
      %148 = dma.done [#allocation3], 32
    $region25: #{siglip_forward.35} parent=1 // pred_fallthru
      _
    %149 = vsyncpa [#allocation3], 1

// kernel: siglip_forward.34
$region0: #{siglip_forward.34}
  #allocation0 [shape = 'u32[]', space=smem, size = 0x4, offset = 0x4, fixed_abs, tag = 'smem constant byte address 0x4 - core index']
  #allocation1 [shape = 'u32[144,128]{1,0:T(1,128)}', space=vmem, size = 0x12000, scoped, tag = 'internal scratch']
  %s0 = inlined_call_operand.vmem [shape: bf16[2,32], index: 0, kind: input, shape index: {}]
  %s1 = inlined_call_operand.vmem [shape: bf16[32,128], index: 1, kind: input, shape index: {}]
  %s2 = inlined_call_operand.vmem [shape: f32[1,128], index: 2, kind: input, shape index: {}]
  %s3 = inlined_call_operand.vmem [shape: f32[1,32], index: 3, kind: input, shape index: {}]
  %s4 = inlined_call_operand.vmem [shape: f32[1,32], index: 4, kind: input, shape index: {}]
  %s5 = inlined_call_operand.vmem [shape: bf16[2,128], index: 5, kind: output, shape index: {}]
  %s6 = sld [smem:[#allocation0]]
  $region30: #{siglip_forward.34} parent=0
    _
  %s8 = ssub.s32 1, %s6
  %s9 = scalar_select 0, %s8, %s6
  // Predicated region
  $region2: #{siglip_forward.34} parent=0 // pred_check
    _
  $region3: #{siglip_forward.34} parent=0 // pred_check_branch
    %11 = sbr.rel (0) target = $region5
  $region4: #{siglip_forward.34} parent=0 // pred_region
    _
  $region5: #{siglip_forward.34} parent=0 // pred_fallthru
    _
  // Predicated region
  $region6: #{siglip_forward.34} parent=0 // pred_check
    _
  $region7: #{siglip_forward.34} parent=0 // pred_check_branch
    %13 = sbr.rel (0) target = $region9
  $region8: #{siglip_forward.34} parent=0 // pred_region
    _
  $region9: #{siglip_forward.34} parent=0 // pred_fallthru
    _
  // Predicated region
  $region10: #{siglip_forward.34} parent=0 // pred_check
    _
  $region11: #{siglip_forward.34} parent=0 // pred_check_branch
    %15 = sbr.rel (0) target = $region13
  $region12: #{siglip_forward.34} parent=0 // pred_region
    _
  $region13: #{siglip_forward.34} parent=0 // pred_fallthru
    _
  // Predicated region
  $region14: #{siglip_forward.34} parent=0 // pred_check
    _
  $region15: #{siglip_forward.34} parent=0 // pred_check_branch
    %17 = sbr.rel (0) target = $region17
  $region16: #{siglip_forward.34} parent=0 // pred_region
    _
  $region17: #{siglip_forward.34} parent=0 // pred_fallthru
    _
  // Predicated region
  $region18: #{siglip_forward.34} parent=0 // pred_check
    _
  $region19: #{siglip_forward.34} parent=0 // pred_check_branch
    %19 = sbr.rel (0) target = $region21
  $region20: #{siglip_forward.34} parent=0 // pred_region
    _
  $region21: #{siglip_forward.34} parent=0 // pred_fallthru
    _
  %v21 = vld [vmem:[%s0] sm:$0x1]
  %v22 = vunpack.c.l.bf16 %v21
  %vm23 = vcmask 254976
  %v24 = vsel %vm23, %v22, 0.0
  %25 = vadd.xlane.f32.xlu0 %v24
  %v26 = vpop.xlane.xlu0 %25
  %v27 = vrcp.pop 32.0
  %v28 = vmul.f32 %v26, %v27
  %v29 = vsub.f32 %v22, %v28
  %v30 = vmul.f32 %v29, %v29
  %v31 = vsel %vm23, %v30, 0.0
  %32 = vadd.xlane.f32.xlu0 %v31
  %v33 = vpop.xlane.xlu0 %32
  %v34 = vmul.f32 %v33, %v27
  %v35 = vadd.f32 %v34, 1e-06
  %v36 = vrsqrt.pop %v35
  %v37 = vmul.f32 %v29, %v36
  %v38 = vld [vmem:[%s3] sm:$0x1]
  %v40 = vlaneseq
  %v41 = vshrl.u32 %v40, 7
  %v42 = vsub.s32 0, %v41
  %v43 = vrot.slane %v38, %v42
  %v45 = vmul.f32 %v37, %v43
  %v46 = vld [vmem:[%s4] sm:$0x1]
  %v48 = vlaneseq
  %v49 = vshrl.u32 %v48, 7
  %v50 = vsub.s32 0, %v49
  %v51 = vrot.slane %v46, %v50
  %v53 = vadd.f32 %v45, %v51
  %v54 = vpack.c.bf16 %v53, %v53
  %v55 = vld [vmem:[%s1] sm:$0xf]
  %v56 = vld [vmem:[%s1 + $0x4] sm:$0xf]
  %v57 = vld [vmem:[%s1 + $0x8] sm:$0xf]
  %v58 = vld [vmem:[%s1 + $0xc] sm:$0xf]
  %v59 = vld [vmem:[%s2] sm:$0x1]
  %v61 = vlaneseq
  %v62 = vshrl.u32 %v61, 7
  %v63 = vsub.s32 0, %v62
  %v64 = vrot.slane %v59, %v63
  %v70 = vunpack.c.l.b16 %v55
  %v71 = vunpack.c.l.b16 %v56
  %v72 = vunpack.c.l.b16 %v57
  %v73 = vunpack.c.l.b16 %v58
  %v74 = vpack.c.b16 %v71, %v70
  %v75 = vpack.c.b16 %v73, %v72
  %vm78 = vcmask 261120
  %v80 = vsel %vm78, %v54, 0
  %82 = vmatprep.subr.bf16.mxu0 0
  %83 = vmatpush1.bf16.msra.mxu0 0
  %84 = vmatprep.subr.bf16.mxu0 0
  %85 = vmatpush1.bf16.msra.mxu0 0
  %86 = vmatprep.subr.bf16.mxu0 0
  %87 = vmatpush1.bf16.msra.mxu0 0
  %88 = vmatprep.subr.bf16.mxu0 0
  %89 = vmatpush1.bf16.msra.mxu0 0
  %90 = vmatprep.subr.bf16.mxu0 0
  %91 = vmatpush1.bf16.msra.mxu0 0
  %92 = vmatprep.subr.bf16.mxu0 0
  %93 = vmatpush1.bf16.msra.mxu0 0
  %94 = vmatprep.subr.bf16.mxu0 0
  %95 = vmatpush1.bf16.msra.mxu0 %v75
  %96 = vmatprep.subr.bf16.mxu0 0
  %97 = vmatpush1.bf16.msra.mxu0 %v74
  %98 = vmatprep.subr.bf16.mxu0 0
  %99 = vmatpush2.bf16.msra.mxu0 0
  %100 = vmatprep.subr.bf16.mxu0 0
  %101 = vmatpush2.bf16.msra.mxu0 0
  %102 = vmatprep.subr.bf16.mxu0 0
  %103 = vmatpush2.bf16.msra.mxu0 0
  %104 = vmatprep.subr.bf16.mxu0 0
  %105 = vmatpush2.bf16.msra.mxu0 0
  %106 = vmatprep.subr.bf16.mxu0 0
  %107 = vmatpush2.bf16.msra.mxu0 0
  %108 = vmatprep.subr.bf16.mxu0 0
  %109 = vmatpush2.bf16.msra.mxu0 0
  %110 = vmatprep.subr.bf16.mxu0 0
  %111 = vmatpush2.bf16.msra.mxu0 0
  %112 = vmatprep.subr.bf16.mxu0 0
  %113 = vmatpush2.bf16.msra.mxu0 0
  %114 = vmatprep.mubr.bf16.mxu0 0
  %115 = vmatmul.mubr.bf16.gmra.mxu0 %v80
  %v116 = vpop.f32.mrf.mxu0
  %v117 = vadd.f32 %v64, %v116
  %v118 = vpop.f32.mrf.mxu0
  %v119 = vpop.f32.mrf.mxu0
  %v120 = vpop.f32.mrf.mxu0
  %121 = vdwg.mxu0
  %v122 = vmul.f32 %v117, 0.5
  %v123 = vmul.f32 %v117, 0.044715
  %v124 = vmul.f32 %v123, %v117
  %v125 = vmul.f32 %v124, %v117
  %v126 = vadd.f32 %v117, %v125
  %v127 = vmul.f32 %v126, 0.7978846
  %v128 = vtanh.pop %v127
  %v129 = vadd.f32 %v128, 1.0
  %v130 = vmul.f32 %v122, %v129
  %v131 = vpack.c.bf16 %v130, %v130
  %132 = vst [vmem:[%s5] sm:$0x1] %v131
  // Predicated region
  $region22: #{siglip_forward.34} parent=0 // pred_check
    _
  $region23: #{siglip_forward.34} parent=0 // pred_check_branch
    %134 = sbr.rel (0) target = $region25
  $region24: #{siglip_forward.34} parent=0 // pred_region
    _
  $region25: #{siglip_forward.34} parent=0 // pred_fallthru
    _
  // Predicated region
  $region26: #{siglip_forward.34} parent=0 // pred_check
    _
  $region27: #{siglip_forward.34} parent=0 // pred_check_branch
    %136 = sbr.rel (0) target = $region29
  $region28: #{siglip_forward.34} parent=0 // pred_region
    _
  $region29: #{siglip_forward.34} parent=0 // pred_fallthru
    _

</llo_original>
